<compile_context>
chip_gen: v5e
topology: v5e:2x2
jax: 0.10.0
libtpu: 0.0.40
codegen_flags: <defaults>
</compile_context>

<pallas_src>
import jax
import jax.numpy as jnp
from jax.experimental import pallas as pl
from jax.experimental.pallas import tpu as pltpu


def _round_up(x, m):
    return (x + m - 1) // m * m


def _default_tile_m():
    """M tile for the large-batch path, per TPU generation.

    v6e / v7x MXUs are 2x256^2 -> 256-row LHS tiles fill the array and halve
    per-grid-step overhead.  v2-v5 class chips have 128x128 MXUs (and v5e only
    one vector-store slot), so 128-row tiles already saturate them.
    """
    try:
        kind = jax.devices()[0].device_kind.lower()
    except Exception:
        return 256
    for old in ("v2", "v3", "v4", "v5"):
        if old in kind:
            return 128
    return 256


def _fused_mlp_kernel(x_ref, w1_ref, b1_ref, w2_ref, b2_ref, w3_ref, b3_ref,
                      o_ref):
    """relu(x@W1+b1) -> relu(.@W2+b2) -> .@W3+b3, all VMEM-resident."""
    # f32 -> bf16 cast done in-kernel (rides the VPU slot; removes the
    # wrapper-side pad/cast round-trip through HBM).
    x = x_ref[...].astype(w1_ref.dtype)
    h = jnp.dot(x, w1_ref[...], preferred_element_type=jnp.float32)
    h = jnp.maximum(h + b1_ref[...], 0.0)
    # Dropout(p=0.5) in eval mode == identity (skipped).
    h = jnp.dot(h.astype(w2_ref.dtype), w2_ref[...],
                preferred_element_type=jnp.float32)
    h = jnp.maximum(h + b2_ref[...], 0.0)
    # Dropout(p=0.5) in eval mode == identity (skipped).
    o = jnp.dot(h.astype(w3_ref.dtype), w3_ref[...],
                preferred_element_type=jnp.float32)
    o_ref[...] = (o + b3_ref[...]).astype(o_ref.dtype)


def init_mlp_params(key, input_dim=3072, hidden_dims=(512, 256), num_classes=10):
    """Synthetic parameters with the same shapes/init range as nn.Linear."""
    params = []
    dims = [input_dim] + list(hidden_dims) + [num_classes]
    for fan_in, fan_out in zip(dims[:-1], dims[1:]):
        key, kw, kb = jax.random.split(key, 3)
        scale = 1.0 / jnp.sqrt(jnp.float32(fan_in))
        w = jax.random.uniform(kw, (fan_in, fan_out), jnp.float32, -scale, scale)
        b = jax.random.uniform(kb, (fan_out,), jnp.float32, -scale, scale)
        params.append((w, b))
    return params


def prepare_params(params, weight_dtype=jnp.bfloat16):
    """One-time: pad to lane-aligned shapes and cast weights to bf16.

    Returns [(w [Kp,Np] bf16, b [1,Np] f32), ...]. Zero padding is exact:
    padded K rows / N cols contribute nothing to the matmuls.
    """
    padded = []
    for w, b in params:
        K, N = w.shape
        Kp = _round_up(K, 128)
        Np = _round_up(N, 128)
        wp = jnp.zeros((Kp, Np), weight_dtype).at[:K, :N].set(
            w.astype(weight_dtype))
        bp = jnp.zeros((1, Np), jnp.float32).at[0, :N].set(b)
        padded.append((wp, bp))
    return padded


def fused_mlp(x2d, padded_params, out_dim, tile_m=None):
    """x2d: [M, K] f32 activations, padded_params from prepare_params."""
    M, K = x2d.shape
    (w1, b1), (w2, b2), (w3, b3) = padded_params
    K1p, N1p = w1.shape
    N1p_, N2p = w2.shape
    N2p_, N3p = w3.shape
    assert N1p == N1p_ and N2p == N2p_

    # input_dim=3072 is already 128-aligned, so this pad is a no-op here; it is
    # kept only as a fallback for non-aligned feature counts.
    if K != K1p:
        x2d = jnp.pad(x2d, ((0, 0), (0, K1p - K)))

    if tile_m is None:
        tile_m = _default_tile_m()

    if M <= tile_m:
        # Single tile; round to 16 rows (bf16 packs 16 rows per sublane group,
        # keeping the MXU feed unmasked). The partial block's extra rows are
        # unspecified on read and masked off on the output store.
        tm = min(_round_up(M, 16), tile_m)
    else:
        tm = tile_m

    grid = (pl.cdiv(M, tm),)

    flops = 2 * M * (K1p * N1p + N1p * N2p + N2p * N3p)
    bytes_accessed = (
        M * K1p * 4                           # f32 activations in
        + (w1.size + w2.size + w3.size) * 2   # bf16 weights
        + (b1.size + b2.size + b3.size) * 4   # f32 biases
        + M * N3p * 4                         # f32 logits out
    )

    out = pl.pallas_call(
        _fused_mlp_kernel,
        out_shape=jax.ShapeDtypeStruct((M, N3p), jnp.float32),
        grid=grid,
        in_specs=[
            pl.BlockSpec((tm, K1p), lambda i: (i, 0)),     # x tile (f32)
            pl.BlockSpec((K1p, N1p), lambda i: (0, 0)),    # W1 (resident)
            pl.BlockSpec((1, N1p), lambda i: (0, 0)),      # b1
            pl.BlockSpec((N1p, N2p), lambda i: (0, 0)),    # W2 (resident)
            pl.BlockSpec((1, N2p), lambda i: (0, 0)),      # b2
            pl.BlockSpec((N2p, N3p), lambda i: (0, 0)),    # W3 (resident)
            pl.BlockSpec((1, N3p), lambda i: (0, 0)),      # b3
        ],
        out_specs=pl.BlockSpec((tm, N3p), lambda i: (i, 0)),
        compiler_params=pltpu.CompilerParams(
            dimension_semantics=("parallel",),
            # Footprint with tm=256: x f32 tiles 3 MB x2, bf16 weights ~3.4 MB
            # x2 (default double buffer), out 128 KB x2  ->  ~13 MB.  Fits the
            # 32 MiB scoped limit on v5e/v6e/v7x with headroom (v7x physical
            # VMEM is 64 MiB; keep this <= ~48 MiB if tiles/dims ever grow).
            vmem_limit_bytes=32 * 1024 * 1024,
        ),
        cost_estimate=pl.CostEstimate(
            flops=flops, transcendentals=0, bytes_accessed=bytes_accessed),
    )(x2d, w1, b1, w2, b2, w3, b3)

    return out[:, :out_dim]


def mlp_forward(x_nchw, padded_params, num_classes=10):
    """x_nchw: [B, C, H, W] -> logits [B, num_classes]."""
    B = x_nchw.shape[0]
    x = x_nchw.reshape(B, -1)  # same as x.view(x.size(0), -1)
    return fused_mlp(x, padded_params, num_classes)


def _reference_forward(x_nchw, params):
    """Plain-JAX reference with the same bf16-input / f32-accum numerics."""
    B = x_nchw.shape[0]
    h = x_nchw.reshape(B, -1)
    n = len(params)
    for i, (w, b) in enumerate(params):
        h = jnp.dot(h.astype(jnp.bfloat16), w.astype(jnp.bfloat16),
                    preferred_element_type=jnp.float32) + b
        if i < n - 1:
            h = jnp.maximum(h, 0.0)
    return h


if __name__ == "__main__":
    key = jax.random.PRNGKey(0)
    k_x, k_p = jax.random.split(key)

    # CIFAR-like input: 3 * 32 * 32 = 3072 = input_dim of the MLP.
    x = jax.random.normal(k_x, (2, 3, 32, 32), jnp.float32)

    params = init_mlp_params(k_p, input_dim=3072, hidden_dims=(512, 256),
                             num_classes=10)
    padded = prepare_params(params)  # one-time padding + bf16 cast

    # Single jit over reshape + pallas_call + output slice (keeps the
    # surrounding micro-ops from costing separate dispatches at small batch).
    forward = jax.jit(lambda xx, pp: mlp_forward(xx, pp, num_classes=10))

    logits = forward(x, padded)
    logits = jax.block_until_ready(logits)

    ref = _reference_forward(x, params)
    assert logits.shape == (2, 10), logits.shape
    assert jnp.allclose(logits, ref, atol=1e-2, rtol=1e-2), (
        float(jnp.max(jnp.abs(logits - ref))))

    print("KERNEL_OK")
</pallas_src>

<mosaic_0001>
module attributes {stable_mosaic.version = 11 : i64} {
  func.func @_fused_mlp_kernel(%arg0: i32, %arg1: memref<16x3072xf32, #tpu.memory_space<vmem>>, %arg2: memref<3072x512xbf16, #tpu.memory_space<vmem>>, %arg3: memref<1x512xf32, #tpu.memory_space<vmem>>, %arg4: memref<512x256xbf16, #tpu.memory_space<vmem>>, %arg5: memref<1x256xf32, #tpu.memory_space<vmem>>, %arg6: memref<256x128xbf16, #tpu.memory_space<vmem>>, %arg7: memref<1x128xf32, #tpu.memory_space<vmem>>, %arg8: memref<16x128xf32, #tpu.memory_space<vmem>>) attributes {dimension_semantics = [#tpu.dimension_semantics<parallel>], iteration_bounds = array<i64: 1>, scalar_prefetch = 0 : i64, scratch_operands = 0 : i64, tpu.core_type = #tpu.core_type<tc>, window_params = [{transform_indices = @transform_0, window_bounds = array<i64: 16, 3072>}, {pipeline_mode = #tpu.pipeline_mode<synchronous>, transform_indices = @transform_1, window_bounds = array<i64: 3072, 512>}, {pipeline_mode = #tpu.pipeline_mode<synchronous>, transform_indices = @transform_2, window_bounds = array<i64: 1, 512>}, {pipeline_mode = #tpu.pipeline_mode<synchronous>, transform_indices = @transform_3, window_bounds = array<i64: 512, 256>}, {pipeline_mode = #tpu.pipeline_mode<synchronous>, transform_indices = @transform_4, window_bounds = array<i64: 1, 256>}, {pipeline_mode = #tpu.pipeline_mode<synchronous>, transform_indices = @transform_5, window_bounds = array<i64: 256, 128>}, {pipeline_mode = #tpu.pipeline_mode<synchronous>, transform_indices = @transform_6, window_bounds = array<i64: 1, 128>}, {transform_indices = @transform_7, window_bounds = array<i64: 16, 128>}]} {
    %c0 = arith.constant 0 : index
    %c0_0 = arith.constant 0 : index
    %0 = vector.load %arg1[%c0, %c0_0] : memref<16x3072xf32, #tpu.memory_space<vmem>>, vector<16x3072xf32>
    %1 = arith.truncf %0 : vector<16x3072xf32> to vector<16x3072xbf16>
    %c0_1 = arith.constant 0 : index
    %c0_2 = arith.constant 0 : index
    %2 = vector.load %arg2[%c0_1, %c0_2] : memref<3072x512xbf16, #tpu.memory_space<vmem>>, vector<3072x512xbf16>
    %cst = arith.constant dense<0.000000e+00> : vector<16x512xf32>
    %3 = tpu.matmul %1, %2, %cst {dimension_numbers = #tpu.dot_dimension_numbers<[1], [0], [0], [1], [0, 0, 1, 1], [], []>} : vector<16x3072xbf16>, vector<3072x512xbf16>, vector<16x512xf32> -> vector<16x512xf32>
    %c0_3 = arith.constant 0 : index
    %c0_4 = arith.constant 0 : index
    %4 = vector.load %arg3[%c0_3, %c0_4] : memref<1x512xf32, #tpu.memory_space<vmem>>, vector<1x512xf32>
    %5 = vector.broadcast %4 : vector<1x512xf32> to vector<16x512xf32>
    %6 = arith.addf %3, %5 : vector<16x512xf32>
    %cst_5 = arith.constant 0.000000e+00 : f32
    %7 = vector.broadcast %cst_5 : f32 to vector<16x512xf32>
    %8 = arith.maximumf %6, %7 : vector<16x512xf32>
    %9 = arith.truncf %8 : vector<16x512xf32> to vector<16x512xbf16>
    %c0_6 = arith.constant 0 : index
    %c0_7 = arith.constant 0 : index
    %10 = vector.load %arg4[%c0_6, %c0_7] : memref<512x256xbf16, #tpu.memory_space<vmem>>, vector<512x256xbf16>
    %cst_8 = arith.constant dense<0.000000e+00> : vector<16x256xf32>
    %11 = tpu.matmul %9, %10, %cst_8 {dimension_numbers = #tpu.dot_dimension_numbers<[1], [0], [0], [1], [0, 0, 1, 1], [], []>} : vector<16x512xbf16>, vector<512x256xbf16>, vector<16x256xf32> -> vector<16x256xf32>
    %c0_9 = arith.constant 0 : index
    %c0_10 = arith.constant 0 : index
    %12 = vector.load %arg5[%c0_9, %c0_10] : memref<1x256xf32, #tpu.memory_space<vmem>>, vector<1x256xf32>
    %13 = vector.broadcast %12 : vector<1x256xf32> to vector<16x256xf32>
    %14 = arith.addf %11, %13 : vector<16x256xf32>
    %cst_11 = arith.constant 0.000000e+00 : f32
    %15 = vector.broadcast %cst_11 : f32 to vector<16x256xf32>
    %16 = arith.maximumf %14, %15 : vector<16x256xf32>
    %17 = arith.truncf %16 : vector<16x256xf32> to vector<16x256xbf16>
    %c0_12 = arith.constant 0 : index
    %c0_13 = arith.constant 0 : index
    %18 = vector.load %arg6[%c0_12, %c0_13] : memref<256x128xbf16, #tpu.memory_space<vmem>>, vector<256x128xbf16>
    %cst_14 = arith.constant dense<0.000000e+00> : vector<16x128xf32>
    %19 = tpu.matmul %17, %18, %cst_14 {dimension_numbers = #tpu.dot_dimension_numbers<[1], [0], [0], [1], [0, 0, 1, 1], [], []>} : vector<16x256xbf16>, vector<256x128xbf16>, vector<16x128xf32> -> vector<16x128xf32>
    %c0_15 = arith.constant 0 : index
    %c0_16 = arith.constant 0 : index
    %20 = vector.load %arg7[%c0_15, %c0_16] : memref<1x128xf32, #tpu.memory_space<vmem>>, vector<1x128xf32>
    %21 = vector.broadcast %20 : vector<1x128xf32> to vector<16x128xf32>
    %22 = arith.addf %19, %21 : vector<16x128xf32>
    %c0_17 = arith.constant 0 : index
    %c0_18 = arith.constant 0 : index
    %23 = vector.load %arg8[%c0_17, %c0_18] : memref<16x128xf32, #tpu.memory_space<vmem>>, vector<16x128xf32>
    tpu.vector_store %arg8[%c0_17, %c0_18], %22 {strides = array<i32>} : memref<16x128xf32, #tpu.memory_space<vmem>>, vector<16x128xf32>,
    return
  }
  func.func @transform_0(%arg0: i32) -> (i32, i32) {
    %c0_i32 = arith.constant 0 : i32
    %c0_i32_0 = arith.constant 0 : i32
    return %arg0, %c0_i32 : i32, i32
  }
  func.func @transform_1(%arg0: i32) -> (i32, i32) {
    %c0_i32 = arith.constant 0 : i32
    %c0_i32_0 = arith.constant 0 : i32
    %c0_i32_1 = arith.constant 0 : i32
    return %c0_i32, %c0_i32_0 : i32, i32
  }
  func.func @transform_2(%arg0: i32) -> (i32, i32) {
    %c0_i32 = arith.constant 0 : i32
    %c0_i32_0 = arith.constant 0 : i32
    %c0_i32_1 = arith.constant 0 : i32
    return %c0_i32, %c0_i32_0 : i32, i32
  }
  func.func @transform_3(%arg0: i32) -> (i32, i32) {
    %c0_i32 = arith.constant 0 : i32
    %c0_i32_0 = arith.constant 0 : i32
    %c0_i32_1 = arith.constant 0 : i32
    return %c0_i32, %c0_i32_0 : i32, i32
  }
  func.func @transform_4(%arg0: i32) -> (i32, i32) {
    %c0_i32 = arith.constant 0 : i32
    %c0_i32_0 = arith.constant 0 : i32
    %c0_i32_1 = arith.constant 0 : i32
    return %c0_i32, %c0_i32_0 : i32, i32
  }
  func.func @transform_5(%arg0: i32) -> (i32, i32) {
    %c0_i32 = arith.constant 0 : i32
    %c0_i32_0 = arith.constant 0 : i32
    %c0_i32_1 = arith.constant 0 : i32
    return %c0_i32, %c0_i32_0 : i32, i32
  }
  func.func @transform_6(%arg0: i32) -> (i32, i32) {
    %c0_i32 = arith.constant 0 : i32
    %c0_i32_0 = arith.constant 0 : i32
    %c0_i32_1 = arith.constant 0 : i32
    return %c0_i32, %c0_i32_0 : i32, i32
  }
  func.func @transform_7(%arg0: i32) -> (i32, i32) {
    %c0_i32 = arith.constant 0 : i32
    %c0_i32_0 = arith.constant 0 : i32
    return %arg0, %c0_i32 : i32, i32
  }
}

</mosaic_0001>

<llo_original>
// kernel: _lambda_.1
$region0: #{_lambda_.1}
  #allocation0 [shape = 'u32[]', space=smem, size = 0x4, offset = 0x4, fixed_abs, tag = 'smem constant byte address 0x4 - core index']
  #allocation1 [shape = 'u32[72,128]{1,0:T(1,128)}', space=vmem, size = 0x9000, scoped, tag = 'internal scratch']
  %s0 = inlined_call_operand.vmem [shape: f32[2,3072], index: 0, kind: input, shape index: {}]
  %s1 = inlined_call_operand.hbm [shape: bf16[3072,512], index: 1, kind: input, shape index: {}]
  %s2 = inlined_call_operand.hbm [shape: f32[1,512], index: 2, kind: input, shape index: {}]
  %s3 = inlined_call_operand.hbm [shape: bf16[512,256], index: 3, kind: input, shape index: {}]
  %s4 = inlined_call_operand.hbm [shape: f32[1,256], index: 4, kind: input, shape index: {}]
  %s5 = inlined_call_operand.hbm [shape: bf16[256,128], index: 5, kind: input, shape index: {}]
  %s6 = inlined_call_operand.hbm [shape: f32[1,128], index: 6, kind: input, shape index: {}]
  %s7 = inlined_call_operand.hbm [shape: f32[2,128], index: 7, kind: output, shape index: {}]
  %s8 = sld [smem:[#allocation0]]
  $region62: #{_lambda_.1} parent=0
    _
  %s10 = ssub.s32 1, %s8
  %s11 = scalar_select 0, %s10, %s8
  $region1: #{_lambda_.1} parent=0
    #allocation2 [shape = 'u8[3145728]{0}', space=vmem, size = 0x300000, scoped, tag = 'input window, operand 1, single buffered']
    #allocation3 [shape = 's32[1]{0}', space=sflag, size = 0x4, scoped, tag = 'scoped memory for _lambda_.1']
    #allocation4 [shape = 's32[1]{0}', space=sflag, size = 0x4, scoped, tag = 'scoped memory for _lambda_.1']
    #allocation5 [shape = 'u8[2048]{0}', space=vmem, size = 0x800, scoped, tag = 'input window, operand 2, single buffered']
    #allocation6 [shape = 's32[1]{0}', space=sflag, size = 0x4, scoped, tag = 'scoped memory for _lambda_.1']
    #allocation7 [shape = 'u8[262144]{0}', space=vmem, size = 0x40000, scoped, tag = 'input window, operand 3, single buffered']
    #allocation8 [shape = 'u8[1024]{0}', space=vmem, size = 0x400, scoped, tag = 'input window, operand 4, single buffered']
    #allocation9 [shape = 's32[1]{0}', space=sflag, size = 0x4, scoped, tag = 'scoped memory for _lambda_.1']
    #allocation10 [shape = 'u8[65536]{0}', space=vmem, size = 0x10000, scoped, tag = 'input window, operand 5, single buffered']
    #allocation11 [shape = 'u8[512]{0}', space=vmem, size = 0x400, scoped, tag = 'input window, operand 6, single buffered']
    #allocation12 [shape = 's32[1]{0}', space=sflag, size = 0x4, scoped, tag = 'scoped memory for _lambda_.1']
    #allocation13 [shape = 'u8[8192]{0}', space=vmem, size = 0x2000, scoped, tag = 'output window, operand 0, single buffered']
    %12 = vsyncpa [#allocation3], 0
    %13 = vsyncpa [#allocation6], 0
    %14 = vsyncpa [#allocation9], 0
    %15 = vsyncpa [#allocation12], 0
    %16 = vsyncpa [#allocation4], 0
    // Predicated region
    $region2: #{_lambda_.1} parent=1 // pred_check
      _
    $region3: #{_lambda_.1} parent=1 // pred_check_branch
      %18 = sbr.rel (0) target = $region5
    $region4: #{_lambda_.1} parent=1 // pred_region
      _
    $region5: #{_lambda_.1} parent=1 // pred_fallthru
      _
    // Predicated region
    $region6: #{_lambda_.1} parent=1 // pred_check
      _
    $region7: #{_lambda_.1} parent=1 // pred_check_branch
      %20 = sbr.rel (0) target = $region9
    $region8: #{_lambda_.1} parent=1 // pred_region
      %22 = vsyncadd [#allocation3], 0
      %s23 = sshll.u32 %s1, 4
      %s24 = int_to_ptr.hbm [resolvable:$true] %s23
      %s25 = sshll.u32 [#allocation2], 4
      %s26 = int_to_ptr.vmem [resolvable:$true] %s25
      %31 = dma.hbm_to_vmem [thread:$0]  %s24, 98304, %s26, [#allocation3], 256, 256, 16
    $region9: #{_lambda_.1} parent=1 // pred_fallthru
      _
    // Predicated region
    $region10: #{_lambda_.1} parent=1 // pred_check
      _
    $region11: #{_lambda_.1} parent=1 // pred_check_branch
      %33 = sbr.rel (0) target = $region13
    $region12: #{_lambda_.1} parent=1 // pred_region
      %35 = vsyncadd [#allocation6], 0
      %s37 = sshll.u32 %s2, 4
      %s38 = int_to_ptr.hbm [resolvable:$true] %s37
      %s39 = sshll.u32 [#allocation5], 4
      %s40 = int_to_ptr.vmem [resolvable:$true] %s39
      %42 = dma.hbm_to_vmem [thread:$0]  %s38, 64, %s40, [#allocation6]
    $region13: #{_lambda_.1} parent=1 // pred_fallthru
      _
    // Predicated region
    $region14: #{_lambda_.1} parent=1 // pred_check
      _
    $region15: #{_lambda_.1} parent=1 // pred_check_branch
      %44 = sbr.rel (0) target = $region17
    $region16: #{_lambda_.1} parent=1 // pred_region
      %46 = vsyncadd [#allocation6], 0
      %s47 = sshll.u32 %s3, 4
      %s48 = int_to_ptr.hbm [resolvable:$true] %s47
      %s49 = sshll.u32 [#allocation7], 4
      %s50 = int_to_ptr.vmem [resolvable:$true] %s49
      %55 = dma.hbm_to_vmem [thread:$0]  %s48, 8192, %s50, [#allocation6], 128, 128, 8
    $region17: #{_lambda_.1} parent=1 // pred_fallthru
      _
    // Predicated region
    $region18: #{_lambda_.1} parent=1 // pred_check
      _
    $region19: #{_lambda_.1} parent=1 // pred_check_branch
      %57 = sbr.rel (0) target = $region21
    $region20: #{_lambda_.1} parent=1 // pred_region
      %59 = vsyncadd [#allocation9], 0
      %s61 = sshll.u32 %s4, 4
      %s62 = int_to_ptr.hbm [resolvable:$true] %s61
      %s63 = sshll.u32 [#allocation8], 4
      %s64 = int_to_ptr.vmem [resolvable:$true] %s63
      %66 = dma.hbm_to_vmem [thread:$0]  %s62, 32, %s64, [#allocation9]
    $region21: #{_lambda_.1} parent=1 // pred_fallthru
      _
    // Predicated region
    $region22: #{_lambda_.1} parent=1 // pred_check
      _
    $region23: #{_lambda_.1} parent=1 // pred_check_branch
      %68 = sbr.rel (0) target = $region25
    $region24: #{_lambda_.1} parent=1 // pred_region
      %70 = vsyncadd [#allocation9], 0
      %s71 = sshll.u32 %s5, 4
      %s72 = int_to_ptr.hbm [resolvable:$true] %s71
      %s73 = sshll.u32 [#allocation10], 4
      %s74 = int_to_ptr.vmem [resolvable:$true] %s73
      %79 = dma.hbm_to_vmem [thread:$0]  %s72, 2048, %s74, [#allocation9], 64, 64, 4
    $region25: #{_lambda_.1} parent=1 // pred_fallthru
      _
    // Predicated region
    $region26: #{_lambda_.1} parent=1 // pred_check
      _
    $region27: #{_lambda_.1} parent=1 // pred_check_branch
      %81 = sbr.rel (0) target = $region29
    $region28: #{_lambda_.1} parent=1 // pred_region
      %83 = vsyncadd [#allocation12], 0
      %s85 = sshll.u32 %s6, 4
      %s86 = int_to_ptr.hbm [resolvable:$true] %s85
      %s87 = sshll.u32 [#allocation11], 4
      %s88 = int_to_ptr.vmem [resolvable:$true] %s87
      %90 = dma.hbm_to_vmem [thread:$0]  %s86, 16, %s88, [#allocation12]
    $region29: #{_lambda_.1} parent=1 // pred_fallthru
      _
    // Predicated region
    $region30: #{_lambda_.1} parent=1 // pred_check
      _
    $region31: #{_lambda_.1} parent=1 // pred_check_branch
      %92 = sbr.rel (0) target = $region33
    $region32: #{_lambda_.1} parent=1 // pred_region
      %94 = dma.done [#allocation3], 98304
    $region33: #{_lambda_.1} parent=1 // pred_fallthru
      _
    // Predicated region
    $region34: #{_lambda_.1} parent=1 // pred_check
      _
    $region35: #{_lambda_.1} parent=1 // pred_check_branch
      %96 = sbr.rel (0) target = $region37
    $region36: #{_lambda_.1} parent=1 // pred_region
      %98 = dma.done [#allocation6], 64
    $region37: #{_lambda_.1} parent=1 // pred_fallthru
      _
    // Predicated region
    $region38: #{_lambda_.1} parent=1 // pred_check
      _
    $region39: #{_lambda_.1} parent=1 // pred_check_branch
      %100 = sbr.rel (0) target = $region41
    $region40: #{_lambda_.1} parent=1 // pred_region
      %102 = dma.done [#allocation6], 8192
    $region41: #{_lambda_.1} parent=1 // pred_fallthru
      _
    // Predicated region
    $region42: #{_lambda_.1} parent=1 // pred_check
      _
    $region43: #{_lambda_.1} parent=1 // pred_check_branch
      %104 = sbr.rel (0) target = $region45
    $region44: #{_lambda_.1} parent=1 // pred_region
      %106 = dma.done [#allocation9], 32
    $region45: #{_lambda_.1} parent=1 // pred_fallthru
      _
    // Predicated region
    $region46: #{_lambda_.1} parent=1 // pred_check
      _
    $region47: #{_lambda_.1} parent=1 // pred_check_branch
      %108 = sbr.rel (0) target = $region49
    $region48: #{_lambda_.1} parent=1 // pred_region
      %110 = dma.done [#allocation9], 2048
    $region49: #{_lambda_.1} parent=1 // pred_fallthru
      _
    // Predicated region
    $region50: #{_lambda_.1} parent=1 // pred_check
      _
    $region51: #{_lambda_.1} parent=1 // pred_check_branch
      %112 = sbr.rel (0) target = $region53
    $region52: #{_lambda_.1} parent=1 // pred_region
      %114 = dma.done [#allocation12], 16
    $region53: #{_lambda_.1} parent=1 // pred_fallthru
      _
    %v115 = vld [vmem:[%s0] sm:$0xff]
    %v116 = vld [vmem:[%s0 + $0x8] sm:$0xff]
    %v117 = vld [vmem:[%s0 + $0x10] sm:$0xff]
    %v118 = vld [vmem:[%s0 + $0x18] sm:$0xff]
    %v119 = vld [vmem:[%s0 + $0x20] sm:$0xff]
    %v120 = vld [vmem:[%s0 + $0x28] sm:$0xff]
    %v121 = vld [vmem:[%s0 + $0x30] sm:$0xff]
    %v122 = vld [vmem:[%s0 + $0x38] sm:$0xff]
    %v123 = vld [vmem:[%s0 + $0x40] sm:$0xff]
    %v124 = vld [vmem:[%s0 + $0x48] sm:$0xff]
    %v125 = vld [vmem:[%s0 + $0x50] sm:$0xff]
    %v126 = vld [vmem:[%s0 + $0x58] sm:$0xff]
    %v127 = vld [vmem:[%s0 + $0x60] sm:$0xff]
    %v128 = vld [vmem:[%s0 + $0x68] sm:$0xff]
    %v129 = vld [vmem:[%s0 + $0x70] sm:$0xff]
    %v130 = vld [vmem:[%s0 + $0x78] sm:$0xff]
    %v131 = vld [vmem:[%s0 + $0x80] sm:$0xff]
    %v132 = vld [vmem:[%s0 + $0x88] sm:$0xff]
    %v133 = vld [vmem:[%s0 + $0x90] sm:$0xff]
    %v134 = vld [vmem:[%s0 + $0x98] sm:$0xff]
    %v135 = vld [vmem:[%s0 + $0xa0] sm:$0xff]
    %v136 = vld [vmem:[%s0 + $0xa8] sm:$0xff]
    %v137 = vld [vmem:[%s0 + $0xb0] sm:$0xff]
    %v138 = vld [vmem:[%s0 + $0xb8] sm:$0xff]
    %v139 = vld [vmem:[%s0 + $0xc0] sm:$0xff]
    %v140 = vld [vmem:[%s0 + $0xc8] sm:$0xff]
    %v141 = vld [vmem:[%s0 + $0xd0] sm:$0xff]
    %v142 = vld [vmem:[%s0 + $0xd8] sm:$0xff]
    %v143 = vld [vmem:[%s0 + $0xe0] sm:$0xff]
    %v144 = vld [vmem:[%s0 + $0xe8] sm:$0xff]
    %v145 = vld [vmem:[%s0 + $0xf0] sm:$0xff]
    %v146 = vld [vmem:[%s0 + $0xf8] sm:$0xff]
    %v147 = vld [vmem:[%s0 + $0x100] sm:$0xff]
    %v148 = vld [vmem:[%s0 + $0x108] sm:$0xff]
    %v149 = vld [vmem:[%s0 + $0x110] sm:$0xff]
    %v150 = vld [vmem:[%s0 + $0x118] sm:$0xff]
    %v151 = vld [vmem:[%s0 + $0x120] sm:$0xff]
    %v152 = vld [vmem:[%s0 + $0x128] sm:$0xff]
    %v153 = vld [vmem:[%s0 + $0x130] sm:$0xff]
    %v154 = vld [vmem:[%s0 + $0x138] sm:$0xff]
    %v155 = vld [vmem:[%s0 + $0x140] sm:$0xff]
    %v156 = vld [vmem:[%s0 + $0x148] sm:$0xff]
    %v157 = vld [vmem:[%s0 + $0x150] sm:$0xff]
    %v158 = vld [vmem:[%s0 + $0x158] sm:$0xff]
    %v159 = vld [vmem:[%s0 + $0x160] sm:$0xff]
    %v160 = vld [vmem:[%s0 + $0x168] sm:$0xff]
    %v161 = vld [vmem:[%s0 + $0x170] sm:$0xff]
    %v162 = vld [vmem:[%s0 + $0x178] sm:$0xff]
    %211 = vst [vmem:[#allocation1] ss:$4 sm:$0xff] %v115
    %s212 = scalar_lea.vmem [#allocation1], 1
    %213 = vst [vmem:[%s212] ss:$4 sm:$0xff] %v121
    %s214 = scalar_lea.vmem [#allocation1], 2
    %215 = vst [vmem:[%s214] ss:$4 sm:$0xff] %v127
    %s216 = scalar_lea.vmem [#allocation1], 3
    %217 = vst [vmem:[%s216] ss:$4 sm:$0xff] %v133
    %s218 = scalar_lea.vmem [#allocation1], 32
    %219 = vst [vmem:[%s218] ss:$4 sm:$0xff] %v116
    %s220 = scalar_lea.vmem [#allocation1], 33
    %221 = vst [vmem:[%s220] ss:$4 sm:$0xff] %v122
    %s222 = scalar_lea.vmem [#allocation1], 34
    %223 = vst [vmem:[%s222] ss:$4 sm:$0xff] %v128
    %s224 = scalar_lea.vmem [#allocation1], 35
    %225 = vst [vmem:[%s224] ss:$4 sm:$0xff] %v134
    %v226 = vld.sshfl [vmem:[#allocation1] sm:$0xff pattern:$0x73625140]
    %v227 = vld.sshfl [vmem:[#allocation1 + $0x8] sm:$0xff pattern:$0x73625140]
    %v228 = vld.sshfl [vmem:[#allocation1 + $0x10] sm:$0xff pattern:$0x73625140]
    %v229 = vld.sshfl [vmem:[#allocation1 + $0x18] sm:$0xff pattern:$0x73625140]
    %v230 = vld.sshfl [vmem:[#allocation1 + $0x20] sm:$0xff pattern:$0x73625140]
    %v231 = vld.sshfl [vmem:[#allocation1 + $0x28] sm:$0xff pattern:$0x73625140]
    %v232 = vld.sshfl [vmem:[#allocation1 + $0x30] sm:$0xff pattern:$0x73625140]
    %v233 = vld.sshfl [vmem:[#allocation1 + $0x38] sm:$0xff pattern:$0x73625140]
    %234 = vst [vmem:[#allocation1] ss:$4 sm:$0xff] %v117
    %235 = vst [vmem:[%s212] ss:$4 sm:$0xff] %v123
    %236 = vst [vmem:[%s214] ss:$4 sm:$0xff] %v129
    %237 = vst [vmem:[%s216] ss:$4 sm:$0xff] %v135
    %238 = vst [vmem:[%s218] ss:$4 sm:$0xff] %v118
    %239 = vst [vmem:[%s220] ss:$4 sm:$0xff] %v124
    %240 = vst [vmem:[%s222] ss:$4 sm:$0xff] %v130
    %241 = vst [vmem:[%s224] ss:$4 sm:$0xff] %v136
    %v242 = vld.sshfl [vmem:[#allocation1] sm:$0xff pattern:$0x73625140]
    %v243 = vld.sshfl [vmem:[#allocation1 + $0x8] sm:$0xff pattern:$0x73625140]
    %v244 = vld.sshfl [vmem:[#allocation1 + $0x10] sm:$0xff pattern:$0x73625140]
    %v245 = vld.sshfl [vmem:[#allocation1 + $0x18] sm:$0xff pattern:$0x73625140]
    %v246 = vld.sshfl [vmem:[#allocation1 + $0x20] sm:$0xff pattern:$0x73625140]
    %v247 = vld.sshfl [vmem:[#allocation1 + $0x28] sm:$0xff pattern:$0x73625140]
    %v248 = vld.sshfl [vmem:[#allocation1 + $0x30] sm:$0xff pattern:$0x73625140]
    %v249 = vld.sshfl [vmem:[#allocation1 + $0x38] sm:$0xff pattern:$0x73625140]
    %250 = vst [vmem:[#allocation1] ss:$4 sm:$0xff] %v119
    %251 = vst [vmem:[%s212] ss:$4 sm:$0xff] %v125
    %252 = vst [vmem:[%s214] ss:$4 sm:$0xff] %v131
    %253 = vst [vmem:[%s216] ss:$4 sm:$0xff] %v137
    %254 = vst [vmem:[%s218] ss:$4 sm:$0xff] %v120
    %255 = vst [vmem:[%s220] ss:$4 sm:$0xff] %v126
    %256 = vst [vmem:[%s222] ss:$4 sm:$0xff] %v132
    %257 = vst [vmem:[%s224] ss:$4 sm:$0xff] %v138
    %v258 = vld.sshfl [vmem:[#allocation1] sm:$0xff pattern:$0x73625140]
    %v259 = vld.sshfl [vmem:[#allocation1 + $0x8] sm:$0xff pattern:$0x73625140]
    %v260 = vld.sshfl [vmem:[#allocation1 + $0x10] sm:$0xff pattern:$0x73625140]
    %v261 = vld.sshfl [vmem:[#allocation1 + $0x18] sm:$0xff pattern:$0x73625140]
    %v262 = vld.sshfl [vmem:[#allocation1 + $0x20] sm:$0xff pattern:$0x73625140]
    %v263 = vld.sshfl [vmem:[#allocation1 + $0x28] sm:$0xff pattern:$0x73625140]
    %v264 = vld.sshfl [vmem:[#allocation1 + $0x30] sm:$0xff pattern:$0x73625140]
    %v265 = vld.sshfl [vmem:[#allocation1 + $0x38] sm:$0xff pattern:$0x73625140]
    %266 = vst [vmem:[#allocation1] ss:$4 sm:$0xff] %v139
    %267 = vst [vmem:[%s212] ss:$4 sm:$0xff] %v145
    %268 = vst [vmem:[%s214] ss:$4 sm:$0xff] %v151
    %269 = vst [vmem:[%s216] ss:$4 sm:$0xff] %v157
    %270 = vst [vmem:[%s218] ss:$4 sm:$0xff] %v140
    %271 = vst [vmem:[%s220] ss:$4 sm:$0xff] %v146
    %272 = vst [vmem:[%s222] ss:$4 sm:$0xff] %v152
    %273 = vst [vmem:[%s224] ss:$4 sm:$0xff] %v158
    %v274 = vld.sshfl [vmem:[#allocation1] sm:$0xff pattern:$0x73625140]
    %v275 = vld.sshfl [vmem:[#allocation1 + $0x8] sm:$0xff pattern:$0x73625140]
    %v276 = vld.sshfl [vmem:[#allocation1 + $0x10] sm:$0xff pattern:$0x73625140]
    %v277 = vld.sshfl [vmem:[#allocation1 + $0x18] sm:$0xff pattern:$0x73625140]
    %v278 = vld.sshfl [vmem:[#allocation1 + $0x20] sm:$0xff pattern:$0x73625140]
    %v279 = vld.sshfl [vmem:[#allocation1 + $0x28] sm:$0xff pattern:$0x73625140]
    %v280 = vld.sshfl [vmem:[#allocation1 + $0x30] sm:$0xff pattern:$0x73625140]
    %v281 = vld.sshfl [vmem:[#allocation1 + $0x38] sm:$0xff pattern:$0x73625140]
    %282 = vst [vmem:[#allocation1] ss:$4 sm:$0xff] %v141
    %283 = vst [vmem:[%s212] ss:$4 sm:$0xff] %v147
    %284 = vst [vmem:[%s214] ss:$4 sm:$0xff] %v153
    %285 = vst [vmem:[%s216] ss:$4 sm:$0xff] %v159
    %286 = vst [vmem:[%s218] ss:$4 sm:$0xff] %v142
    %287 = vst [vmem:[%s220] ss:$4 sm:$0xff] %v148
    %288 = vst [vmem:[%s222] ss:$4 sm:$0xff] %v154
    %289 = vst [vmem:[%s224] ss:$4 sm:$0xff] %v160
    %v290 = vld.sshfl [vmem:[#allocation1] sm:$0xff pattern:$0x73625140]
    %v291 = vld.sshfl [vmem:[#allocation1 + $0x8] sm:$0xff pattern:$0x73625140]
    %v292 = vld.sshfl [vmem:[#allocation1 + $0x10] sm:$0xff pattern:$0x73625140]
    %v293 = vld.sshfl [vmem:[#allocation1 + $0x18] sm:$0xff pattern:$0x73625140]
    %v294 = vld.sshfl [vmem:[#allocation1 + $0x20] sm:$0xff pattern:$0x73625140]
    %v295 = vld.sshfl [vmem:[#allocation1 + $0x28] sm:$0xff pattern:$0x73625140]
    %v296 = vld.sshfl [vmem:[#allocation1 + $0x30] sm:$0xff pattern:$0x73625140]
    %v297 = vld.sshfl [vmem:[#allocation1 + $0x38] sm:$0xff pattern:$0x73625140]
    %298 = vst [vmem:[#allocation1] ss:$4 sm:$0xff] %v143
    %299 = vst [vmem:[%s212] ss:$4 sm:$0xff] %v149
    %300 = vst [vmem:[%s214] ss:$4 sm:$0xff] %v155
    %301 = vst [vmem:[%s216] ss:$4 sm:$0xff] %v161
    %302 = vst [vmem:[%s218] ss:$4 sm:$0xff] %v144
    %303 = vst [vmem:[%s220] ss:$4 sm:$0xff] %v150
    %304 = vst [vmem:[%s222] ss:$4 sm:$0xff] %v156
    %305 = vst [vmem:[%s224] ss:$4 sm:$0xff] %v162
    %v306 = vld.sshfl [vmem:[#allocation1] sm:$0xff pattern:$0x73625140]
    %v307 = vld.sshfl [vmem:[#allocation1 + $0x8] sm:$0xff pattern:$0x73625140]
    %v308 = vld.sshfl [vmem:[#allocation1 + $0x10] sm:$0xff pattern:$0x73625140]
    %v309 = vld.sshfl [vmem:[#allocation1 + $0x18] sm:$0xff pattern:$0x73625140]
    %v310 = vld.sshfl [vmem:[#allocation1 + $0x20] sm:$0xff pattern:$0x73625140]
    %v311 = vld.sshfl [vmem:[#allocation1 + $0x28] sm:$0xff pattern:$0x73625140]
    %v312 = vld.sshfl [vmem:[#allocation1 + $0x30] sm:$0xff pattern:$0x73625140]
    %v313 = vld.sshfl [vmem:[#allocation1 + $0x38] sm:$0xff pattern:$0x73625140]
    %v362 = vpack.c.bf16 %v274, %v226
    %v363 = vpack.c.bf16 %v275, %v227
    %v364 = vpack.c.bf16 %v276, %v228
    %v365 = vpack.c.bf16 %v277, %v229
    %v366 = vpack.c.bf16 %v278, %v230
    %v367 = vpack.c.bf16 %v279, %v231
    %v368 = vpack.c.bf16 %v280, %v232
    %v369 = vpack.c.bf16 %v281, %v233
    %v370 = vpack.c.bf16 %v290, %v242
    %v371 = vpack.c.bf16 %v291, %v243
    %v372 = vpack.c.bf16 %v292, %v244
    %v373 = vpack.c.bf16 %v293, %v245
    %v374 = vpack.c.bf16 %v294, %v246
    %v375 = vpack.c.bf16 %v295, %v247
    %v376 = vpack.c.bf16 %v296, %v248
    %v377 = vpack.c.bf16 %v297, %v249
    %v378 = vpack.c.bf16 %v306, %v258
    %v379 = vpack.c.bf16 %v307, %v259
    %v380 = vpack.c.bf16 %v308, %v260
    %v381 = vpack.c.bf16 %v309, %v261
    %v382 = vpack.c.bf16 %v310, %v262
    %v383 = vpack.c.bf16 %v311, %v263
    %v384 = vpack.c.bf16 %v312, %v264
    %v385 = vpack.c.bf16 %v313, %v265
    %v386 = vld [vmem:[#allocation2] sm:$0xff]
    %v387 = vld [vmem:[#allocation2 + $0x8] sm:$0xff]
    %v388 = vld [vmem:[#allocation2 + $0x10] sm:$0xff]
    %v389 = vld [vmem:[#allocation2 + $0x18] sm:$0xff]
    %v390 = vld [vmem:[#allocation2 + $0x20] sm:$0xff]
    %v391 = vld [vmem:[#allocation2 + $0x28] sm:$0xff]
    %v392 = vld [vmem:[#allocation2 + $0x30] sm:$0xff]
    %v393 = vld [vmem:[#allocation2 + $0x38] sm:$0xff]
    %v394 = vld [vmem:[#allocation2 + $0x40] sm:$0xff]
    %v395 = vld [vmem:[#allocation2 + $0x48] sm:$0xff]
    %v396 = vld [vmem:[#allocation2 + $0x50] sm:$0xff]
    %v397 = vld [vmem:[#allocation2 + $0x58] sm:$0xff]
    %v398 = vld [vmem:[#allocation2 + $0x60] sm:$0xff]
    %v399 = vld [vmem:[#allocation2 + $0x68] sm:$0xff]
    %v400 = vld [vmem:[#allocation2 + $0x70] sm:$0xff]
    %v401 = vld [vmem:[#allocation2 + $0x78] sm:$0xff]
    %v402 = vld [vmem:[#allocation2 + $0x80] sm:$0xff]
    %v403 = vld [vmem:[#allocation2 + $0x88] sm:$0xff]
    %v404 = vld [vmem:[#allocation2 + $0x90] sm:$0xff]
    %v405 = vld [vmem:[#allocation2 + $0x98] sm:$0xff]
    %v406 = vld [vmem:[#allocation2 + $0xa0] sm:$0xff]
    %v407 = vld [vmem:[#allocation2 + $0xa8] sm:$0xff]
    %v408 = vld [vmem:[#allocation2 + $0xb0] sm:$0xff]
    %v409 = vld [vmem:[#allocation2 + $0xb8] sm:$0xff]
    %v410 = vld [vmem:[#allocation2 + $0xc0] sm:$0xff]
    %v411 = vld [vmem:[#allocation2 + $0xc8] sm:$0xff]
    %v412 = vld [vmem:[#allocation2 + $0xd0] sm:$0xff]
    %v413 = vld [vmem:[#allocation2 + $0xd8] sm:$0xff]
    %v414 = vld [vmem:[#allocation2 + $0xe0] sm:$0xff]
    %v415 = vld [vmem:[#allocation2 + $0xe8] sm:$0xff]
    %v416 = vld [vmem:[#allocation2 + $0xf0] sm:$0xff]
    %v417 = vld [vmem:[#allocation2 + $0xf8] sm:$0xff]
    %v418 = vld [vmem:[#allocation2 + $0x100] sm:$0xff]
    %v419 = vld [vmem:[#allocation2 + $0x108] sm:$0xff]
    %v420 = vld [vmem:[#allocation2 + $0x110] sm:$0xff]
    %v421 = vld [vmem:[#allocation2 + $0x118] sm:$0xff]
    %v422 = vld [vmem:[#allocation2 + $0x120] sm:$0xff]
    %v423 = vld [vmem:[#allocation2 + $0x128] sm:$0xff]
    %v424 = vld [vmem:[#allocation2 + $0x130] sm:$0xff]
    %v425 = vld [vmem:[#allocation2 + $0x138] sm:$0xff]
    %v426 = vld [vmem:[#allocation2 + $0x140] sm:$0xff]
    %v427 = vld [vmem:[#allocation2 + $0x148] sm:$0xff]
    %v428 = vld [vmem:[#allocation2 + $0x150] sm:$0xff]
    %v429 = vld [vmem:[#allocation2 + $0x158] sm:$0xff]
    %v430 = vld [vmem:[#allocation2 + $0x160] sm:$0xff]
    %v431 = vld [vmem:[#allocation2 + $0x168] sm:$0xff]
    %v432 = vld [vmem:[#allocation2 + $0x170] sm:$0xff]
    %v433 = vld [vmem:[#allocation2 + $0x178] sm:$0xff]
    %v434 = vld [vmem:[#allocation2 + $0x180] sm:$0xff]
    %v435 = vld [vmem:[#allocation2 + $0x188] sm:$0xff]
    %v436 = vld [vmem:[#allocation2 + $0x190] sm:$0xff]
    %v437 = vld [vmem:[#allocation2 + $0x198] sm:$0xff]
    %v438 = vld [vmem:[#allocation2 + $0x1a0] sm:$0xff]
    %v439 = vld [vmem:[#allocation2 + $0x1a8] sm:$0xff]
    %v440 = vld [vmem:[#allocation2 + $0x1b0] sm:$0xff]
    %v441 = vld [vmem:[#allocation2 + $0x1b8] sm:$0xff]
    %v442 = vld [vmem:[#allocation2 + $0x1c0] sm:$0xff]
    %v443 = vld [vmem:[#allocation2 + $0x1c8] sm:$0xff]
    %v444 = vld [vmem:[#allocation2 + $0x1d0] sm:$0xff]
    %v445 = vld [vmem:[#allocation2 + $0x1d8] sm:$0xff]
    %v446 = vld [vmem:[#allocation2 + $0x1e0] sm:$0xff]
    %v447 = vld [vmem:[#allocation2 + $0x1e8] sm:$0xff]
    %v448 = vld [vmem:[#allocation2 + $0x1f0] sm:$0xff]
    %v449 = vld [vmem:[#allocation2 + $0x1f8] sm:$0xff]
    %v450 = vld [vmem:[#allocation2 + $0x200] sm:$0xff]
    %v451 = vld [vmem:[#allocation2 + $0x208] sm:$0xff]
    %v452 = vld [vmem:[#allocation2 + $0x210] sm:$0xff]
    %v453 = vld [vmem:[#allocation2 + $0x218] sm:$0xff]
    %v454 = vld [vmem:[#allocation2 + $0x220] sm:$0xff]
    %v455 = vld [vmem:[#allocation2 + $0x228] sm:$0xff]
    %v456 = vld [vmem:[#allocation2 + $0x230] sm:$0xff]
    %v457 = vld [vmem:[#allocation2 + $0x238] sm:$0xff]
    %v458 = vld [vmem:[#allocation2 + $0x240] sm:$0xff]
    %v459 = vld [vmem:[#allocation2 + $0x248] sm:$0xff]
    %v460 = vld [vmem:[#allocation2 + $0x250] sm:$0xff]
    %v461 = vld [vmem:[#allocation2 + $0x258] sm:$0xff]
    %v462 = vld [vmem:[#allocation2 + $0x260] sm:$0xff]
    %v463 = vld [vmem:[#allocation2 + $0x268] sm:$0xff]
    %v464 = vld [vmem:[#allocation2 + $0x270] sm:$0xff]
    %v465 = vld [vmem:[#allocation2 + $0x278] sm:$0xff]
    %v466 = vld [vmem:[#allocation2 + $0x280] sm:$0xff]
    %v467 = vld [vmem:[#allocation2 + $0x288] sm:$0xff]
    %v468 = vld [vmem:[#allocation2 + $0x290] sm:$0xff]
    %v469 = vld [vmem:[#allocation2 + $0x298] sm:$0xff]
    %v470 = vld [vmem:[#allocation2 + $0x2a0] sm:$0xff]
    %v471 = vld [vmem:[#allocation2 + $0x2a8] sm:$0xff]
    %v472 = vld [vmem:[#allocation2 + $0x2b0] sm:$0xff]
    %v473 = vld [vmem:[#allocation2 + $0x2b8] sm:$0xff]
    %v474 = vld [vmem:[#allocation2 + $0x2c0] sm:$0xff]
    %v475 = vld [vmem:[#allocation2 + $0x2c8] sm:$0xff]
    %v476 = vld [vmem:[#allocation2 + $0x2d0] sm:$0xff]
    %v477 = vld [vmem:[#allocation2 + $0x2d8] sm:$0xff]
    %v478 = vld [vmem:[#allocation2 + $0x2e0] sm:$0xff]
    %v479 = vld [vmem:[#allocation2 + $0x2e8] sm:$0xff]
    %v480 = vld [vmem:[#allocation2 + $0x2f0] sm:$0xff]
    %v481 = vld [vmem:[#allocation2 + $0x2f8] sm:$0xff]
    %v482 = vld [vmem:[#allocation2 + $0x300] sm:$0xff]
    %v483 = vld [vmem:[#allocation2 + $0x308] sm:$0xff]
    %v484 = vld [vmem:[#allocation2 + $0x310] sm:$0xff]
    %v485 = vld [vmem:[#allocation2 + $0x318] sm:$0xff]
    %v486 = vld [vmem:[#allocation2 + $0x320] sm:$0xff]
    %v487 = vld [vmem:[#allocation2 + $0x328] sm:$0xff]
    %v488 = vld [vmem:[#allocation2 + $0x330] sm:$0xff]
    %v489 = vld [vmem:[#allocation2 + $0x338] sm:$0xff]
    %v490 = vld [vmem:[#allocation2 + $0x340] sm:$0xff]
    %v491 = vld [vmem:[#allocation2 + $0x348] sm:$0xff]
    %v492 = vld [vmem:[#allocation2 + $0x350] sm:$0xff]
    %v493 = vld [vmem:[#allocation2 + $0x358] sm:$0xff]
    %v494 = vld [vmem:[#allocation2 + $0x360] sm:$0xff]
    %v495 = vld [vmem:[#allocation2 + $0x368] sm:$0xff]
    %v496 = vld [vmem:[#allocation2 + $0x370] sm:$0xff]
    %v497 = vld [vmem:[#allocation2 + $0x378] sm:$0xff]
    %v498 = vld [vmem:[#allocation2 + $0x380] sm:$0xff]
    %v499 = vld [vmem:[#allocation2 + $0x388] sm:$0xff]
    %v500 = vld [vmem:[#allocation2 + $0x390] sm:$0xff]
    %v501 = vld [vmem:[#allocation2 + $0x398] sm:$0xff]
    %v502 = vld [vmem:[#allocation2 + $0x3a0] sm:$0xff]
    %v503 = vld [vmem:[#allocation2 + $0x3a8] sm:$0xff]
    %v504 = vld [vmem:[#allocation2 + $0x3b0] sm:$0xff]
    %v505 = vld [vmem:[#allocation2 + $0x3b8] sm:$0xff]
    %v506 = vld [vmem:[#allocation2 + $0x3c0] sm:$0xff]
    %v507 = vld [vmem:[#allocation2 + $0x3c8] sm:$0xff]
    %v508 = vld [vmem:[#allocation2 + $0x3d0] sm:$0xff]
    %v509 = vld [vmem:[#allocation2 + $0x3d8] sm:$0xff]
    %v510 = vld [vmem:[#allocation2 + $0x3e0] sm:$0xff]
    %v511 = vld [vmem:[#allocation2 + $0x3e8] sm:$0xff]
    %v512 = vld [vmem:[#allocation2 + $0x3f0] sm:$0xff]
    %v513 = vld [vmem:[#allocation2 + $0x3f8] sm:$0xff]
    %v514 = vld [vmem:[#allocation2 + $0x400] sm:$0xff]
    %v515 = vld [vmem:[#allocation2 + $0x408] sm:$0xff]
    %v516 = vld [vmem:[#allocation2 + $0x410] sm:$0xff]
    %v517 = vld [vmem:[#allocation2 + $0x418] sm:$0xff]
    %v518 = vld [vmem:[#allocation2 + $0x420] sm:$0xff]
    %v519 = vld [vmem:[#allocation2 + $0x428] sm:$0xff]
    %v520 = vld [vmem:[#allocation2 + $0x430] sm:$0xff]
    %v521 = vld [vmem:[#allocation2 + $0x438] sm:$0xff]
    %v522 = vld [vmem:[#allocation2 + $0x440] sm:$0xff]
    %v523 = vld [vmem:[#allocation2 + $0x448] sm:$0xff]
    %v524 = vld [vmem:[#allocation2 + $0x450] sm:$0xff]
    %v525 = vld [vmem:[#allocation2 + $0x458] sm:$0xff]
    %v526 = vld [vmem:[#allocation2 + $0x460] sm:$0xff]
    %v527 = vld [vmem:[#allocation2 + $0x468] sm:$0xff]
    %v528 = vld [vmem:[#allocation2 + $0x470] sm:$0xff]
    %v529 = vld [vmem:[#allocation2 + $0x478] sm:$0xff]
    %v530 = vld [vmem:[#allocation2 + $0x480] sm:$0xff]
    %v531 = vld [vmem:[#allocation2 + $0x488] sm:$0xff]
    %v532 = vld [vmem:[#allocation2 + $0x490] sm:$0xff]
    %v533 = vld [vmem:[#allocation2 + $0x498] sm:$0xff]
    %v534 = vld [vmem:[#allocation2 + $0x4a0] sm:$0xff]
    %v535 = vld [vmem:[#allocation2 + $0x4a8] sm:$0xff]
    %v536 = vld [vmem:[#allocation2 + $0x4b0] sm:$0xff]
    %v537 = vld [vmem:[#allocation2 + $0x4b8] sm:$0xff]
    %v538 = vld [vmem:[#allocation2 + $0x4c0] sm:$0xff]
    %v539 = vld [vmem:[#allocation2 + $0x4c8] sm:$0xff]
    %v540 = vld [vmem:[#allocation2 + $0x4d0] sm:$0xff]
    %v541 = vld [vmem:[#allocation2 + $0x4d8] sm:$0xff]
    %v542 = vld [vmem:[#allocation2 + $0x4e0] sm:$0xff]
    %v543 = vld [vmem:[#allocation2 + $0x4e8] sm:$0xff]
    %v544 = vld [vmem:[#allocation2 + $0x4f0] sm:$0xff]
    %v545 = vld [vmem:[#allocation2 + $0x4f8] sm:$0xff]
    %v546 = vld [vmem:[#allocation2 + $0x500] sm:$0xff]
    %v547 = vld [vmem:[#allocation2 + $0x508] sm:$0xff]
    %v548 = vld [vmem:[#allocation2 + $0x510] sm:$0xff]
    %v549 = vld [vmem:[#allocation2 + $0x518] sm:$0xff]
    %v550 = vld [vmem:[#allocation2 + $0x520] sm:$0xff]
    %v551 = vld [vmem:[#allocation2 + $0x528] sm:$0xff]
    %v552 = vld [vmem:[#allocation2 + $0x530] sm:$0xff]
    %v553 = vld [vmem:[#allocation2 + $0x538] sm:$0xff]
    %v554 = vld [vmem:[#allocation2 + $0x540] sm:$0xff]
    %v555 = vld [vmem:[#allocation2 + $0x548] sm:$0xff]
    %v556 = vld [vmem:[#allocation2 + $0x550] sm:$0xff]
    %v557 = vld [vmem:[#allocation2 + $0x558] sm:$0xff]
    %v558 = vld [vmem:[#allocation2 + $0x560] sm:$0xff]
    %v559 = vld [vmem:[#allocation2 + $0x568] sm:$0xff]
    %v560 = vld [vmem:[#allocation2 + $0x570] sm:$0xff]
    %v561 = vld [vmem:[#allocation2 + $0x578] sm:$0xff]
    %v562 = vld [vmem:[#allocation2 + $0x580] sm:$0xff]
    %v563 = vld [vmem:[#allocation2 + $0x588] sm:$0xff]
    %v564 = vld [vmem:[#allocation2 + $0x590] sm:$0xff]
    %v565 = vld [vmem:[#allocation2 + $0x598] sm:$0xff]
    %v566 = vld [vmem:[#allocation2 + $0x5a0] sm:$0xff]
    %v567 = vld [vmem:[#allocation2 + $0x5a8] sm:$0xff]
    %v568 = vld [vmem:[#allocation2 + $0x5b0] sm:$0xff]
    %v569 = vld [vmem:[#allocation2 + $0x5b8] sm:$0xff]
    %v570 = vld [vmem:[#allocation2 + $0x5c0] sm:$0xff]
    %v571 = vld [vmem:[#allocation2 + $0x5c8] sm:$0xff]
    %v572 = vld [vmem:[#allocation2 + $0x5d0] sm:$0xff]
    %v573 = vld [vmem:[#allocation2 + $0x5d8] sm:$0xff]
    %v574 = vld [vmem:[#allocation2 + $0x5e0] sm:$0xff]
    %v575 = vld [vmem:[#allocation2 + $0x5e8] sm:$0xff]
    %v576 = vld [vmem:[#allocation2 + $0x5f0] sm:$0xff]
    %v577 = vld [vmem:[#allocation2 + $0x5f8] sm:$0xff]
    %v578 = vld [vmem:[#allocation2 + $0x600] sm:$0xff]
    %v579 = vld [vmem:[#allocation2 + $0x608] sm:$0xff]
    %v580 = vld [vmem:[#allocation2 + $0x610] sm:$0xff]
    %v581 = vld [vmem:[#allocation2 + $0x618] sm:$0xff]
    %v582 = vld [vmem:[#allocation2 + $0x620] sm:$0xff]
    %v583 = vld [vmem:[#allocation2 + $0x628] sm:$0xff]
    %v584 = vld [vmem:[#allocation2 + $0x630] sm:$0xff]
    %v585 = vld [vmem:[#allocation2 + $0x638] sm:$0xff]
    %v586 = vld [vmem:[#allocation2 + $0x640] sm:$0xff]
    %v587 = vld [vmem:[#allocation2 + $0x648] sm:$0xff]
    %v588 = vld [vmem:[#allocation2 + $0x650] sm:$0xff]
    %v589 = vld [vmem:[#allocation2 + $0x658] sm:$0xff]
    %v590 = vld [vmem:[#allocation2 + $0x660] sm:$0xff]
    %v591 = vld [vmem:[#allocation2 + $0x668] sm:$0xff]
    %v592 = vld [vmem:[#allocation2 + $0x670] sm:$0xff]
    %v593 = vld [vmem:[#allocation2 + $0x678] sm:$0xff]
    %v594 = vld [vmem:[#allocation2 + $0x680] sm:$0xff]
    %v595 = vld [vmem:[#allocation2 + $0x688] sm:$0xff]
    %v596 = vld [vmem:[#allocation2 + $0x690] sm:$0xff]
    %v597 = vld [vmem:[#allocation2 + $0x698] sm:$0xff]
    %v598 = vld [vmem:[#allocation2 + $0x6a0] sm:$0xff]
    %v599 = vld [vmem:[#allocation2 + $0x6a8] sm:$0xff]
    %v600 = vld [vmem:[#allocation2 + $0x6b0] sm:$0xff]
    %v601 = vld [vmem:[#allocation2 + $0x6b8] sm:$0xff]
    %v602 = vld [vmem:[#allocation2 + $0x6c0] sm:$0xff]
    %v603 = vld [vmem:[#allocation2 + $0x6c8] sm:$0xff]
    %v604 = vld [vmem:[#allocation2 + $0x6d0] sm:$0xff]
    %v605 = vld [vmem:[#allocation2 + $0x6d8] sm:$0xff]
    %v606 = vld [vmem:[#allocation2 + $0x6e0] sm:$0xff]
    %v607 = vld [vmem:[#allocation2 + $0x6e8] sm:$0xff]
    %v608 = vld [vmem:[#allocation2 + $0x6f0] sm:$0xff]
    %v609 = vld [vmem:[#allocation2 + $0x6f8] sm:$0xff]
    %v610 = vld [vmem:[#allocation2 + $0x700] sm:$0xff]
    %v611 = vld [vmem:[#allocation2 + $0x708] sm:$0xff]
    %v612 = vld [vmem:[#allocation2 + $0x710] sm:$0xff]
    %v613 = vld [vmem:[#allocation2 + $0x718] sm:$0xff]
    %v614 = vld [vmem:[#allocation2 + $0x720] sm:$0xff]
    %v615 = vld [vmem:[#allocation2 + $0x728] sm:$0xff]
    %v616 = vld [vmem:[#allocation2 + $0x730] sm:$0xff]
    %v617 = vld [vmem:[#allocation2 + $0x738] sm:$0xff]
    %v618 = vld [vmem:[#allocation2 + $0x740] sm:$0xff]
    %v619 = vld [vmem:[#allocation2 + $0x748] sm:$0xff]
    %v620 = vld [vmem:[#allocation2 + $0x750] sm:$0xff]
    %v621 = vld [vmem:[#allocation2 + $0x758] sm:$0xff]
    %v622 = vld [vmem:[#allocation2 + $0x760] sm:$0xff]
    %v623 = vld [vmem:[#allocation2 + $0x768] sm:$0xff]
    %v624 = vld [vmem:[#allocation2 + $0x770] sm:$0xff]
    %v625 = vld [vmem:[#allocation2 + $0x778] sm:$0xff]
    %v626 = vld [vmem:[#allocation2 + $0x780] sm:$0xff]
    %v627 = vld [vmem:[#allocation2 + $0x788] sm:$0xff]
    %v628 = vld [vmem:[#allocation2 + $0x790] sm:$0xff]
    %v629 = vld [vmem:[#allocation2 + $0x798] sm:$0xff]
    %v630 = vld [vmem:[#allocation2 + $0x7a0] sm:$0xff]
    %v631 = vld [vmem:[#allocation2 + $0x7a8] sm:$0xff]
    %v632 = vld [vmem:[#allocation2 + $0x7b0] sm:$0xff]
    %v633 = vld [vmem:[#allocation2 + $0x7b8] sm:$0xff]
    %v634 = vld [vmem:[#allocation2 + $0x7c0] sm:$0xff]
    %v635 = vld [vmem:[#allocation2 + $0x7c8] sm:$0xff]
    %v636 = vld [vmem:[#allocation2 + $0x7d0] sm:$0xff]
    %v637 = vld [vmem:[#allocation2 + $0x7d8] sm:$0xff]
    %v638 = vld [vmem:[#allocation2 + $0x7e0] sm:$0xff]
    %v639 = vld [vmem:[#allocation2 + $0x7e8] sm:$0xff]
    %v640 = vld [vmem:[#allocation2 + $0x7f0] sm:$0xff]
    %v641 = vld [vmem:[#allocation2 + $0x7f8] sm:$0xff]
    %v642 = vld [vmem:[#allocation2 + $0x800] sm:$0xff]
    %v643 = vld [vmem:[#allocation2 + $0x808] sm:$0xff]
    %v644 = vld [vmem:[#allocation2 + $0x810] sm:$0xff]
    %v645 = vld [vmem:[#allocation2 + $0x818] sm:$0xff]
    %v646 = vld [vmem:[#allocation2 + $0x820] sm:$0xff]
    %v647 = vld [vmem:[#allocation2 + $0x828] sm:$0xff]
    %v648 = vld [vmem:[#allocation2 + $0x830] sm:$0xff]
    %v649 = vld [vmem:[#allocation2 + $0x838] sm:$0xff]
    %v650 = vld [vmem:[#allocation2 + $0x840] sm:$0xff]
    %v651 = vld [vmem:[#allocation2 + $0x848] sm:$0xff]
    %v652 = vld [vmem:[#allocation2 + $0x850] sm:$0xff]
    %v653 = vld [vmem:[#allocation2 + $0x858] sm:$0xff]
    %v654 = vld [vmem:[#allocation2 + $0x860] sm:$0xff]
    %v655 = vld [vmem:[#allocation2 + $0x868] sm:$0xff]
    %v656 = vld [vmem:[#allocation2 + $0x870] sm:$0xff]
    %v657 = vld [vmem:[#allocation2 + $0x878] sm:$0xff]
    %v658 = vld [vmem:[#allocation2 + $0x880] sm:$0xff]
    %v659 = vld [vmem:[#allocation2 + $0x888] sm:$0xff]
    %v660 = vld [vmem:[#allocation2 + $0x890] sm:$0xff]
    %v661 = vld [vmem:[#allocation2 + $0x898] sm:$0xff]
    %v662 = vld [vmem:[#allocation2 + $0x8a0] sm:$0xff]
    %v663 = vld [vmem:[#allocation2 + $0x8a8] sm:$0xff]
    %v664 = vld [vmem:[#allocation2 + $0x8b0] sm:$0xff]
    %v665 = vld [vmem:[#allocation2 + $0x8b8] sm:$0xff]
    %v666 = vld [vmem:[#allocation2 + $0x8c0] sm:$0xff]
    %v667 = vld [vmem:[#allocation2 + $0x8c8] sm:$0xff]
    %v668 = vld [vmem:[#allocation2 + $0x8d0] sm:$0xff]
    %v669 = vld [vmem:[#allocation2 + $0x8d8] sm:$0xff]
    %v670 = vld [vmem:[#allocation2 + $0x8e0] sm:$0xff]
    %v671 = vld [vmem:[#allocation2 + $0x8e8] sm:$0xff]
    %v672 = vld [vmem:[#allocation2 + $0x8f0] sm:$0xff]
    %v673 = vld [vmem:[#allocation2 + $0x8f8] sm:$0xff]
    %v674 = vld [vmem:[#allocation2 + $0x900] sm:$0xff]
    %v675 = vld [vmem:[#allocation2 + $0x908] sm:$0xff]
    %v676 = vld [vmem:[#allocation2 + $0x910] sm:$0xff]
    %v677 = vld [vmem:[#allocation2 + $0x918] sm:$0xff]
    %v678 = vld [vmem:[#allocation2 + $0x920] sm:$0xff]
    %v679 = vld [vmem:[#allocation2 + $0x928] sm:$0xff]
    %v680 = vld [vmem:[#allocation2 + $0x930] sm:$0xff]
    %v681 = vld [vmem:[#allocation2 + $0x938] sm:$0xff]
    %v682 = vld [vmem:[#allocation2 + $0x940] sm:$0xff]
    %v683 = vld [vmem:[#allocation2 + $0x948] sm:$0xff]
    %v684 = vld [vmem:[#allocation2 + $0x950] sm:$0xff]
    %v685 = vld [vmem:[#allocation2 + $0x958] sm:$0xff]
    %v686 = vld [vmem:[#allocation2 + $0x960] sm:$0xff]
    %v687 = vld [vmem:[#allocation2 + $0x968] sm:$0xff]
    %v688 = vld [vmem:[#allocation2 + $0x970] sm:$0xff]
    %v689 = vld [vmem:[#allocation2 + $0x978] sm:$0xff]
    %v690 = vld [vmem:[#allocation2 + $0x980] sm:$0xff]
    %v691 = vld [vmem:[#allocation2 + $0x988] sm:$0xff]
    %v692 = vld [vmem:[#allocation2 + $0x990] sm:$0xff]
    %v693 = vld [vmem:[#allocation2 + $0x998] sm:$0xff]
    %v694 = vld [vmem:[#allocation2 + $0x9a0] sm:$0xff]
    %v695 = vld [vmem:[#allocation2 + $0x9a8] sm:$0xff]
    %v696 = vld [vmem:[#allocation2 + $0x9b0] sm:$0xff]
    %v697 = vld [vmem:[#allocation2 + $0x9b8] sm:$0xff]
    %v698 = vld [vmem:[#allocation2 + $0x9c0] sm:$0xff]
    %v699 = vld [vmem:[#allocation2 + $0x9c8] sm:$0xff]
    %v700 = vld [vmem:[#allocation2 + $0x9d0] sm:$0xff]
    %v701 = vld [vmem:[#allocation2 + $0x9d8] sm:$0xff]
    %v702 = vld [vmem:[#allocation2 + $0x9e0] sm:$0xff]
    %v703 = vld [vmem:[#allocation2 + $0x9e8] sm:$0xff]
    %v704 = vld [vmem:[#allocation2 + $0x9f0] sm:$0xff]
    %v705 = vld [vmem:[#allocation2 + $0x9f8] sm:$0xff]
    %v706 = vld [vmem:[#allocation2 + $0xa00] sm:$0xff]
    %v707 = vld [vmem:[#allocation2 + $0xa08] sm:$0xff]
    %v708 = vld [vmem:[#allocation2 + $0xa10] sm:$0xff]
    %v709 = vld [vmem:[#allocation2 + $0xa18] sm:$0xff]
    %v710 = vld [vmem:[#allocation2 + $0xa20] sm:$0xff]
    %v711 = vld [vmem:[#allocation2 + $0xa28] sm:$0xff]
    %v712 = vld [vmem:[#allocation2 + $0xa30] sm:$0xff]
    %v713 = vld [vmem:[#allocation2 + $0xa38] sm:$0xff]
    %v714 = vld [vmem:[#allocation2 + $0xa40] sm:$0xff]
    %v715 = vld [vmem:[#allocation2 + $0xa48] sm:$0xff]
    %v716 = vld [vmem:[#allocation2 + $0xa50] sm:$0xff]
    %v717 = vld [vmem:[#allocation2 + $0xa58] sm:$0xff]
    %v718 = vld [vmem:[#allocation2 + $0xa60] sm:$0xff]
    %v719 = vld [vmem:[#allocation2 + $0xa68] sm:$0xff]
    %v720 = vld [vmem:[#allocation2 + $0xa70] sm:$0xff]
    %v721 = vld [vmem:[#allocation2 + $0xa78] sm:$0xff]
    %v722 = vld [vmem:[#allocation2 + $0xa80] sm:$0xff]
    %v723 = vld [vmem:[#allocation2 + $0xa88] sm:$0xff]
    %v724 = vld [vmem:[#allocation2 + $0xa90] sm:$0xff]
    %v725 = vld [vmem:[#allocation2 + $0xa98] sm:$0xff]
    %v726 = vld [vmem:[#allocation2 + $0xaa0] sm:$0xff]
    %v727 = vld [vmem:[#allocation2 + $0xaa8] sm:$0xff]
    %v728 = vld [vmem:[#allocation2 + $0xab0] sm:$0xff]
    %v729 = vld [vmem:[#allocation2 + $0xab8] sm:$0xff]
    %v730 = vld [vmem:[#allocation2 + $0xac0] sm:$0xff]
    %v731 = vld [vmem:[#allocation2 + $0xac8] sm:$0xff]
    %v732 = vld [vmem:[#allocation2 + $0xad0] sm:$0xff]
    %v733 = vld [vmem:[#allocation2 + $0xad8] sm:$0xff]
    %v734 = vld [vmem:[#allocation2 + $0xae0] sm:$0xff]
    %v735 = vld [vmem:[#allocation2 + $0xae8] sm:$0xff]
    %v736 = vld [vmem:[#allocation2 + $0xaf0] sm:$0xff]
    %v737 = vld [vmem:[#allocation2 + $0xaf8] sm:$0xff]
    %v738 = vld [vmem:[#allocation2 + $0xb00] sm:$0xff]
    %v739 = vld [vmem:[#allocation2 + $0xb08] sm:$0xff]
    %v740 = vld [vmem:[#allocation2 + $0xb10] sm:$0xff]
    %v741 = vld [vmem:[#allocation2 + $0xb18] sm:$0xff]
    %v742 = vld [vmem:[#allocation2 + $0xb20] sm:$0xff]
    %v743 = vld [vmem:[#allocation2 + $0xb28] sm:$0xff]
    %v744 = vld [vmem:[#allocation2 + $0xb30] sm:$0xff]
    %v745 = vld [vmem:[#allocation2 + $0xb38] sm:$0xff]
    %v746 = vld [vmem:[#allocation2 + $0xb40] sm:$0xff]
    %v747 = vld [vmem:[#allocation2 + $0xb48] sm:$0xff]
    %v748 = vld [vmem:[#allocation2 + $0xb50] sm:$0xff]
    %v749 = vld [vmem:[#allocation2 + $0xb58] sm:$0xff]
    %v750 = vld [vmem:[#allocation2 + $0xb60] sm:$0xff]
    %v751 = vld [vmem:[#allocation2 + $0xb68] sm:$0xff]
    %v752 = vld [vmem:[#allocation2 + $0xb70] sm:$0xff]
    %v753 = vld [vmem:[#allocation2 + $0xb78] sm:$0xff]
    %v754 = vld [vmem:[#allocation2 + $0xb80] sm:$0xff]
    %v755 = vld [vmem:[#allocation2 + $0xb88] sm:$0xff]
    %v756 = vld [vmem:[#allocation2 + $0xb90] sm:$0xff]
    %v757 = vld [vmem:[#allocation2 + $0xb98] sm:$0xff]
    %v758 = vld [vmem:[#allocation2 + $0xba0] sm:$0xff]
    %v759 = vld [vmem:[#allocation2 + $0xba8] sm:$0xff]
    %v760 = vld [vmem:[#allocation2 + $0xbb0] sm:$0xff]
    %v761 = vld [vmem:[#allocation2 + $0xbb8] sm:$0xff]
    %v762 = vld [vmem:[#allocation2 + $0xbc0] sm:$0xff]
    %v763 = vld [vmem:[#allocation2 + $0xbc8] sm:$0xff]
    %v764 = vld [vmem:[#allocation2 + $0xbd0] sm:$0xff]
    %v765 = vld [vmem:[#allocation2 + $0xbd8] sm:$0xff]
    %v766 = vld [vmem:[#allocation2 + $0xbe0] sm:$0xff]
    %v767 = vld [vmem:[#allocation2 + $0xbe8] sm:$0xff]
    %v768 = vld [vmem:[#allocation2 + $0xbf0] sm:$0xff]
    %v769 = vld [vmem:[#allocation2 + $0xbf8] sm:$0xff]
    %v770 = vld [vmem:[#allocation2 + $0xc00] sm:$0xff]
    %v771 = vld [vmem:[#allocation2 + $0xc08] sm:$0xff]
    %v772 = vld [vmem:[#allocation2 + $0xc10] sm:$0xff]
    %v773 = vld [vmem:[#allocation2 + $0xc18] sm:$0xff]
    %v774 = vld [vmem:[#allocation2 + $0xc20] sm:$0xff]
    %v775 = vld [vmem:[#allocation2 + $0xc28] sm:$0xff]
    %v776 = vld [vmem:[#allocation2 + $0xc30] sm:$0xff]
    %v777 = vld [vmem:[#allocation2 + $0xc38] sm:$0xff]
    %v778 = vld [vmem:[#allocation2 + $0xc40] sm:$0xff]
    %v779 = vld [vmem:[#allocation2 + $0xc48] sm:$0xff]
    %v780 = vld [vmem:[#allocation2 + $0xc50] sm:$0xff]
    %v781 = vld [vmem:[#allocation2 + $0xc58] sm:$0xff]
    %v782 = vld [vmem:[#allocation2 + $0xc60] sm:$0xff]
    %v783 = vld [vmem:[#allocation2 + $0xc68] sm:$0xff]
    %v784 = vld [vmem:[#allocation2 + $0xc70] sm:$0xff]
    %v785 = vld [vmem:[#allocation2 + $0xc78] sm:$0xff]
    %v786 = vld [vmem:[#allocation2 + $0xc80] sm:$0xff]
    %v787 = vld [vmem:[#allocation2 + $0xc88] sm:$0xff]
    %v788 = vld [vmem:[#allocation2 + $0xc90] sm:$0xff]
    %v789 = vld [vmem:[#allocation2 + $0xc98] sm:$0xff]
    %v790 = vld [vmem:[#allocation2 + $0xca0] sm:$0xff]
    %v791 = vld [vmem:[#allocation2 + $0xca8] sm:$0xff]
    %v792 = vld [vmem:[#allocation2 + $0xcb0] sm:$0xff]
    %v793 = vld [vmem:[#allocation2 + $0xcb8] sm:$0xff]
    %v794 = vld [vmem:[#allocation2 + $0xcc0] sm:$0xff]
    %v795 = vld [vmem:[#allocation2 + $0xcc8] sm:$0xff]
    %v796 = vld [vmem:[#allocation2 + $0xcd0] sm:$0xff]
    %v797 = vld [vmem:[#allocation2 + $0xcd8] sm:$0xff]
    %v798 = vld [vmem:[#allocation2 + $0xce0] sm:$0xff]
    %v799 = vld [vmem:[#allocation2 + $0xce8] sm:$0xff]
    %v800 = vld [vmem:[#allocation2 + $0xcf0] sm:$0xff]
    %v801 = vld [vmem:[#allocation2 + $0xcf8] sm:$0xff]
    %v802 = vld [vmem:[#allocation2 + $0xd00] sm:$0xff]
    %v803 = vld [vmem:[#allocation2 + $0xd08] sm:$0xff]
    %v804 = vld [vmem:[#allocation2 + $0xd10] sm:$0xff]
    %v805 = vld [vmem:[#allocation2 + $0xd18] sm:$0xff]
    %v806 = vld [vmem:[#allocation2 + $0xd20] sm:$0xff]
    %v807 = vld [vmem:[#allocation2 + $0xd28] sm:$0xff]
    %v808 = vld [vmem:[#allocation2 + $0xd30] sm:$0xff]
    %v809 = vld [vmem:[#allocation2 + $0xd38] sm:$0xff]
    %v810 = vld [vmem:[#allocation2 + $0xd40] sm:$0xff]
    %v811 = vld [vmem:[#allocation2 + $0xd48] sm:$0xff]
    %v812 = vld [vmem:[#allocation2 + $0xd50] sm:$0xff]
    %v813 = vld [vmem:[#allocation2 + $0xd58] sm:$0xff]
    %v814 = vld [vmem:[#allocation2 + $0xd60] sm:$0xff]
    %v815 = vld [vmem:[#allocation2 + $0xd68] sm:$0xff]
    %v816 = vld [vmem:[#allocation2 + $0xd70] sm:$0xff]
    %v817 = vld [vmem:[#allocation2 + $0xd78] sm:$0xff]
    %v818 = vld [vmem:[#allocation2 + $0xd80] sm:$0xff]
    %v819 = vld [vmem:[#allocation2 + $0xd88] sm:$0xff]
    %v820 = vld [vmem:[#allocation2 + $0xd90] sm:$0xff]
    %v821 = vld [vmem:[#allocation2 + $0xd98] sm:$0xff]
    %v822 = vld [vmem:[#allocation2 + $0xda0] sm:$0xff]
    %v823 = vld [vmem:[#allocation2 + $0xda8] sm:$0xff]
    %v824 = vld [vmem:[#allocation2 + $0xdb0] sm:$0xff]
    %v825 = vld [vmem:[#allocation2 + $0xdb8] sm:$0xff]
    %v826 = vld [vmem:[#allocation2 + $0xdc0] sm:$0xff]
    %v827 = vld [vmem:[#allocation2 + $0xdc8] sm:$0xff]
    %v828 = vld [vmem:[#allocation2 + $0xdd0] sm:$0xff]
    %v829 = vld [vmem:[#allocation2 + $0xdd8] sm:$0xff]
    %v830 = vld [vmem:[#allocation2 + $0xde0] sm:$0xff]
    %v831 = vld [vmem:[#allocation2 + $0xde8] sm:$0xff]
    %v832 = vld [vmem:[#allocation2 + $0xdf0] sm:$0xff]
    %v833 = vld [vmem:[#allocation2 + $0xdf8] sm:$0xff]
    %v834 = vld [vmem:[#allocation2 + $0xe00] sm:$0xff]
    %v835 = vld [vmem:[#allocation2 + $0xe08] sm:$0xff]
    %v836 = vld [vmem:[#allocation2 + $0xe10] sm:$0xff]
    %v837 = vld [vmem:[#allocation2 + $0xe18] sm:$0xff]
    %v838 = vld [vmem:[#allocation2 + $0xe20] sm:$0xff]
    %v839 = vld [vmem:[#allocation2 + $0xe28] sm:$0xff]
    %v840 = vld [vmem:[#allocation2 + $0xe30] sm:$0xff]
    %v841 = vld [vmem:[#allocation2 + $0xe38] sm:$0xff]
    %v842 = vld [vmem:[#allocation2 + $0xe40] sm:$0xff]
    %v843 = vld [vmem:[#allocation2 + $0xe48] sm:$0xff]
    %v844 = vld [vmem:[#allocation2 + $0xe50] sm:$0xff]
    %v845 = vld [vmem:[#allocation2 + $0xe58] sm:$0xff]
    %v846 = vld [vmem:[#allocation2 + $0xe60] sm:$0xff]
    %v847 = vld [vmem:[#allocation2 + $0xe68] sm:$0xff]
    %v848 = vld [vmem:[#allocation2 + $0xe70] sm:$0xff]
    %v849 = vld [vmem:[#allocation2 + $0xe78] sm:$0xff]
    %v850 = vld [vmem:[#allocation2 + $0xe80] sm:$0xff]
    %v851 = vld [vmem:[#allocation2 + $0xe88] sm:$0xff]
    %v852 = vld [vmem:[#allocation2 + $0xe90] sm:$0xff]
    %v853 = vld [vmem:[#allocation2 + $0xe98] sm:$0xff]
    %v854 = vld [vmem:[#allocation2 + $0xea0] sm:$0xff]
    %v855 = vld [vmem:[#allocation2 + $0xea8] sm:$0xff]
    %v856 = vld [vmem:[#allocation2 + $0xeb0] sm:$0xff]
    %v857 = vld [vmem:[#allocation2 + $0xeb8] sm:$0xff]
    %v858 = vld [vmem:[#allocation2 + $0xec0] sm:$0xff]
    %v859 = vld [vmem:[#allocation2 + $0xec8] sm:$0xff]
    %v860 = vld [vmem:[#allocation2 + $0xed0] sm:$0xff]
    %v861 = vld [vmem:[#allocation2 + $0xed8] sm:$0xff]
    %v862 = vld [vmem:[#allocation2 + $0xee0] sm:$0xff]
    %v863 = vld [vmem:[#allocation2 + $0xee8] sm:$0xff]
    %v864 = vld [vmem:[#allocation2 + $0xef0] sm:$0xff]
    %v865 = vld [vmem:[#allocation2 + $0xef8] sm:$0xff]
    %v866 = vld [vmem:[#allocation2 + $0xf00] sm:$0xff]
    %v867 = vld [vmem:[#allocation2 + $0xf08] sm:$0xff]
    %v868 = vld [vmem:[#allocation2 + $0xf10] sm:$0xff]
    %v869 = vld [vmem:[#allocation2 + $0xf18] sm:$0xff]
    %v870 = vld [vmem:[#allocation2 + $0xf20] sm:$0xff]
    %v871 = vld [vmem:[#allocation2 + $0xf28] sm:$0xff]
    %v872 = vld [vmem:[#allocation2 + $0xf30] sm:$0xff]
    %v873 = vld [vmem:[#allocation2 + $0xf38] sm:$0xff]
    %v874 = vld [vmem:[#allocation2 + $0xf40] sm:$0xff]
    %v875 = vld [vmem:[#allocation2 + $0xf48] sm:$0xff]
    %v876 = vld [vmem:[#allocation2 + $0xf50] sm:$0xff]
    %v877 = vld [vmem:[#allocation2 + $0xf58] sm:$0xff]
    %v878 = vld [vmem:[#allocation2 + $0xf60] sm:$0xff]
    %v879 = vld [vmem:[#allocation2 + $0xf68] sm:$0xff]
    %v880 = vld [vmem:[#allocation2 + $0xf70] sm:$0xff]
    %v881 = vld [vmem:[#allocation2 + $0xf78] sm:$0xff]
    %v882 = vld [vmem:[#allocation2 + $0xf80] sm:$0xff]
    %v883 = vld [vmem:[#allocation2 + $0xf88] sm:$0xff]
    %v884 = vld [vmem:[#allocation2 + $0xf90] sm:$0xff]
    %v885 = vld [vmem:[#allocation2 + $0xf98] sm:$0xff]
    %v886 = vld [vmem:[#allocation2 + $0xfa0] sm:$0xff]
    %v887 = vld [vmem:[#allocation2 + $0xfa8] sm:$0xff]
    %v888 = vld [vmem:[#allocation2 + $0xfb0] sm:$0xff]
    %v889 = vld [vmem:[#allocation2 + $0xfb8] sm:$0xff]
    %v890 = vld [vmem:[#allocation2 + $0xfc0] sm:$0xff]
    %v891 = vld [vmem:[#allocation2 + $0xfc8] sm:$0xff]
    %v892 = vld [vmem:[#allocation2 + $0xfd0] sm:$0xff]
    %v893 = vld [vmem:[#allocation2 + $0xfd8] sm:$0xff]
    %v894 = vld [vmem:[#allocation2 + $0xfe0] sm:$0xff]
    %v895 = vld [vmem:[#allocation2 + $0xfe8] sm:$0xff]
    %v896 = vld [vmem:[#allocation2 + $0xff0] sm:$0xff]
    %v897 = vld [vmem:[#allocation2 + $0xff8] sm:$0xff]
    %v898 = vld [vmem:[#allocation2 + $0x1000] sm:$0xff]
    %v899 = vld [vmem:[#allocation2 + $0x1008] sm:$0xff]
    %v900 = vld [vmem:[#allocation2 + $0x1010] sm:$0xff]
    %v901 = vld [vmem:[#allocation2 + $0x1018] sm:$0xff]
    %v902 = vld [vmem:[#allocation2 + $0x1020] sm:$0xff]
    %v903 = vld [vmem:[#allocation2 + $0x1028] sm:$0xff]
    %v904 = vld [vmem:[#allocation2 + $0x1030] sm:$0xff]
    %v905 = vld [vmem:[#allocation2 + $0x1038] sm:$0xff]
    %v906 = vld [vmem:[#allocation2 + $0x1040] sm:$0xff]
    %v907 = vld [vmem:[#allocation2 + $0x1048] sm:$0xff]
    %v908 = vld [vmem:[#allocation2 + $0x1050] sm:$0xff]
    %v909 = vld [vmem:[#allocation2 + $0x1058] sm:$0xff]
    %v910 = vld [vmem:[#allocation2 + $0x1060] sm:$0xff]
    %v911 = vld [vmem:[#allocation2 + $0x1068] sm:$0xff]
    %v912 = vld [vmem:[#allocation2 + $0x1070] sm:$0xff]
    %v913 = vld [vmem:[#allocation2 + $0x1078] sm:$0xff]
    %v914 = vld [vmem:[#allocation2 + $0x1080] sm:$0xff]
    %v915 = vld [vmem:[#allocation2 + $0x1088] sm:$0xff]
    %v916 = vld [vmem:[#allocation2 + $0x1090] sm:$0xff]
    %v917 = vld [vmem:[#allocation2 + $0x1098] sm:$0xff]
    %v918 = vld [vmem:[#allocation2 + $0x10a0] sm:$0xff]
    %v919 = vld [vmem:[#allocation2 + $0x10a8] sm:$0xff]
    %v920 = vld [vmem:[#allocation2 + $0x10b0] sm:$0xff]
    %v921 = vld [vmem:[#allocation2 + $0x10b8] sm:$0xff]
    %v922 = vld [vmem:[#allocation2 + $0x10c0] sm:$0xff]
    %v923 = vld [vmem:[#allocation2 + $0x10c8] sm:$0xff]
    %v924 = vld [vmem:[#allocation2 + $0x10d0] sm:$0xff]
    %v925 = vld [vmem:[#allocation2 + $0x10d8] sm:$0xff]
    %v926 = vld [vmem:[#allocation2 + $0x10e0] sm:$0xff]
    %v927 = vld [vmem:[#allocation2 + $0x10e8] sm:$0xff]
    %v928 = vld [vmem:[#allocation2 + $0x10f0] sm:$0xff]
    %v929 = vld [vmem:[#allocation2 + $0x10f8] sm:$0xff]
    %v930 = vld [vmem:[#allocation2 + $0x1100] sm:$0xff]
    %v931 = vld [vmem:[#allocation2 + $0x1108] sm:$0xff]
    %v932 = vld [vmem:[#allocation2 + $0x1110] sm:$0xff]
    %v933 = vld [vmem:[#allocation2 + $0x1118] sm:$0xff]
    %v934 = vld [vmem:[#allocation2 + $0x1120] sm:$0xff]
    %v935 = vld [vmem:[#allocation2 + $0x1128] sm:$0xff]
    %v936 = vld [vmem:[#allocation2 + $0x1130] sm:$0xff]
    %v937 = vld [vmem:[#allocation2 + $0x1138] sm:$0xff]
    %v938 = vld [vmem:[#allocation2 + $0x1140] sm:$0xff]
    %v939 = vld [vmem:[#allocation2 + $0x1148] sm:$0xff]
    %v940 = vld [vmem:[#allocation2 + $0x1150] sm:$0xff]
    %v941 = vld [vmem:[#allocation2 + $0x1158] sm:$0xff]
    %v942 = vld [vmem:[#allocation2 + $0x1160] sm:$0xff]
    %v943 = vld [vmem:[#allocation2 + $0x1168] sm:$0xff]
    %v944 = vld [vmem:[#allocation2 + $0x1170] sm:$0xff]
    %v945 = vld [vmem:[#allocation2 + $0x1178] sm:$0xff]
    %v946 = vld [vmem:[#allocation2 + $0x1180] sm:$0xff]
    %v947 = vld [vmem:[#allocation2 + $0x1188] sm:$0xff]
    %v948 = vld [vmem:[#allocation2 + $0x1190] sm:$0xff]
    %v949 = vld [vmem:[#allocation2 + $0x1198] sm:$0xff]
    %v950 = vld [vmem:[#allocation2 + $0x11a0] sm:$0xff]
    %v951 = vld [vmem:[#allocation2 + $0x11a8] sm:$0xff]
    %v952 = vld [vmem:[#allocation2 + $0x11b0] sm:$0xff]
    %v953 = vld [vmem:[#allocation2 + $0x11b8] sm:$0xff]
    %v954 = vld [vmem:[#allocation2 + $0x11c0] sm:$0xff]
    %v955 = vld [vmem:[#allocation2 + $0x11c8] sm:$0xff]
    %v956 = vld [vmem:[#allocation2 + $0x11d0] sm:$0xff]
    %v957 = vld [vmem:[#allocation2 + $0x11d8] sm:$0xff]
    %v958 = vld [vmem:[#allocation2 + $0x11e0] sm:$0xff]
    %v959 = vld [vmem:[#allocation2 + $0x11e8] sm:$0xff]
    %v960 = vld [vmem:[#allocation2 + $0x11f0] sm:$0xff]
    %v961 = vld [vmem:[#allocation2 + $0x11f8] sm:$0xff]
    %v962 = vld [vmem:[#allocation2 + $0x1200] sm:$0xff]
    %v963 = vld [vmem:[#allocation2 + $0x1208] sm:$0xff]
    %v964 = vld [vmem:[#allocation2 + $0x1210] sm:$0xff]
    %v965 = vld [vmem:[#allocation2 + $0x1218] sm:$0xff]
    %v966 = vld [vmem:[#allocation2 + $0x1220] sm:$0xff]
    %v967 = vld [vmem:[#allocation2 + $0x1228] sm:$0xff]
    %v968 = vld [vmem:[#allocation2 + $0x1230] sm:$0xff]
    %v969 = vld [vmem:[#allocation2 + $0x1238] sm:$0xff]
    %v970 = vld [vmem:[#allocation2 + $0x1240] sm:$0xff]
    %v971 = vld [vmem:[#allocation2 + $0x1248] sm:$0xff]
    %v972 = vld [vmem:[#allocation2 + $0x1250] sm:$0xff]
    %v973 = vld [vmem:[#allocation2 + $0x1258] sm:$0xff]
    %v974 = vld [vmem:[#allocation2 + $0x1260] sm:$0xff]
    %v975 = vld [vmem:[#allocation2 + $0x1268] sm:$0xff]
    %v976 = vld [vmem:[#allocation2 + $0x1270] sm:$0xff]
    %v977 = vld [vmem:[#allocation2 + $0x1278] sm:$0xff]
    %v978 = vld [vmem:[#allocation2 + $0x1280] sm:$0xff]
    %v979 = vld [vmem:[#allocation2 + $0x1288] sm:$0xff]
    %v980 = vld [vmem:[#allocation2 + $0x1290] sm:$0xff]
    %v981 = vld [vmem:[#allocation2 + $0x1298] sm:$0xff]
    %v982 = vld [vmem:[#allocation2 + $0x12a0] sm:$0xff]
    %v983 = vld [vmem:[#allocation2 + $0x12a8] sm:$0xff]
    %v984 = vld [vmem:[#allocation2 + $0x12b0] sm:$0xff]
    %v985 = vld [vmem:[#allocation2 + $0x12b8] sm:$0xff]
    %v986 = vld [vmem:[#allocation2 + $0x12c0] sm:$0xff]
    %v987 = vld [vmem:[#allocation2 + $0x12c8] sm:$0xff]
    %v988 = vld [vmem:[#allocation2 + $0x12d0] sm:$0xff]
    %v989 = vld [vmem:[#allocation2 + $0x12d8] sm:$0xff]
    %v990 = vld [vmem:[#allocation2 + $0x12e0] sm:$0xff]
    %v991 = vld [vmem:[#allocation2 + $0x12e8] sm:$0xff]
    %v992 = vld [vmem:[#allocation2 + $0x12f0] sm:$0xff]
    %v993 = vld [vmem:[#allocation2 + $0x12f8] sm:$0xff]
    %v994 = vld [vmem:[#allocation2 + $0x1300] sm:$0xff]
    %v995 = vld [vmem:[#allocation2 + $0x1308] sm:$0xff]
    %v996 = vld [vmem:[#allocation2 + $0x1310] sm:$0xff]
    %v997 = vld [vmem:[#allocation2 + $0x1318] sm:$0xff]
    %v998 = vld [vmem:[#allocation2 + $0x1320] sm:$0xff]
    %v999 = vld [vmem:[#allocation2 + $0x1328] sm:$0xff]
    %v1000 = vld [vmem:[#allocation2 + $0x1330] sm:$0xff]
    %v1001 = vld [vmem:[#allocation2 + $0x1338] sm:$0xff]
    %v1002 = vld [vmem:[#allocation2 + $0x1340] sm:$0xff]
    %v1003 = vld [vmem:[#allocation2 + $0x1348] sm:$0xff]
    %v1004 = vld [vmem:[#allocation2 + $0x1350] sm:$0xff]
    %v1005 = vld [vmem:[#allocation2 + $0x1358] sm:$0xff]
    %v1006 = vld [vmem:[#allocation2 + $0x1360] sm:$0xff]
    %v1007 = vld [vmem:[#allocation2 + $0x1368] sm:$0xff]
    %v1008 = vld [vmem:[#allocation2 + $0x1370] sm:$0xff]
    %v1009 = vld [vmem:[#allocation2 + $0x1378] sm:$0xff]
    %v1010 = vld [vmem:[#allocation2 + $0x1380] sm:$0xff]
    %v1011 = vld [vmem:[#allocation2 + $0x1388] sm:$0xff]
    %v1012 = vld [vmem:[#allocation2 + $0x1390] sm:$0xff]
    %v1013 = vld [vmem:[#allocation2 + $0x1398] sm:$0xff]
    %v1014 = vld [vmem:[#allocation2 + $0x13a0] sm:$0xff]
    %v1015 = vld [vmem:[#allocation2 + $0x13a8] sm:$0xff]
    %v1016 = vld [vmem:[#allocation2 + $0x13b0] sm:$0xff]
    %v1017 = vld [vmem:[#allocation2 + $0x13b8] sm:$0xff]
    %v1018 = vld [vmem:[#allocation2 + $0x13c0] sm:$0xff]
    %v1019 = vld [vmem:[#allocation2 + $0x13c8] sm:$0xff]
    %v1020 = vld [vmem:[#allocation2 + $0x13d0] sm:$0xff]
    %v1021 = vld [vmem:[#allocation2 + $0x13d8] sm:$0xff]
    %v1022 = vld [vmem:[#allocation2 + $0x13e0] sm:$0xff]
    %v1023 = vld [vmem:[#allocation2 + $0x13e8] sm:$0xff]
    %v1024 = vld [vmem:[#allocation2 + $0x13f0] sm:$0xff]
    %v1025 = vld [vmem:[#allocation2 + $0x13f8] sm:$0xff]
    %v1026 = vld [vmem:[#allocation2 + $0x1400] sm:$0xff]
    %v1027 = vld [vmem:[#allocation2 + $0x1408] sm:$0xff]
    %v1028 = vld [vmem:[#allocation2 + $0x1410] sm:$0xff]
    %v1029 = vld [vmem:[#allocation2 + $0x1418] sm:$0xff]
    %v1030 = vld [vmem:[#allocation2 + $0x1420] sm:$0xff]
    %v1031 = vld [vmem:[#allocation2 + $0x1428] sm:$0xff]
    %v1032 = vld [vmem:[#allocation2 + $0x1430] sm:$0xff]
    %v1033 = vld [vmem:[#allocation2 + $0x1438] sm:$0xff]
    %v1034 = vld [vmem:[#allocation2 + $0x1440] sm:$0xff]
    %v1035 = vld [vmem:[#allocation2 + $0x1448] sm:$0xff]
    %v1036 = vld [vmem:[#allocation2 + $0x1450] sm:$0xff]
    %v1037 = vld [vmem:[#allocation2 + $0x1458] sm:$0xff]
    %v1038 = vld [vmem:[#allocation2 + $0x1460] sm:$0xff]
    %v1039 = vld [vmem:[#allocation2 + $0x1468] sm:$0xff]
    %v1040 = vld [vmem:[#allocation2 + $0x1470] sm:$0xff]
    %v1041 = vld [vmem:[#allocation2 + $0x1478] sm:$0xff]
    %v1042 = vld [vmem:[#allocation2 + $0x1480] sm:$0xff]
    %v1043 = vld [vmem:[#allocation2 + $0x1488] sm:$0xff]
    %v1044 = vld [vmem:[#allocation2 + $0x1490] sm:$0xff]
    %v1045 = vld [vmem:[#allocation2 + $0x1498] sm:$0xff]
    %v1046 = vld [vmem:[#allocation2 + $0x14a0] sm:$0xff]
    %v1047 = vld [vmem:[#allocation2 + $0x14a8] sm:$0xff]
    %v1048 = vld [vmem:[#allocation2 + $0x14b0] sm:$0xff]
    %v1049 = vld [vmem:[#allocation2 + $0x14b8] sm:$0xff]
    %v1050 = vld [vmem:[#allocation2 + $0x14c0] sm:$0xff]
    %v1051 = vld [vmem:[#allocation2 + $0x14c8] sm:$0xff]
    %v1052 = vld [vmem:[#allocation2 + $0x14d0] sm:$0xff]
    %v1053 = vld [vmem:[#allocation2 + $0x14d8] sm:$0xff]
    %v1054 = vld [vmem:[#allocation2 + $0x14e0] sm:$0xff]
    %v1055 = vld [vmem:[#allocation2 + $0x14e8] sm:$0xff]
    %v1056 = vld [vmem:[#allocation2 + $0x14f0] sm:$0xff]
    %v1057 = vld [vmem:[#allocation2 + $0x14f8] sm:$0xff]
    %v1058 = vld [vmem:[#allocation2 + $0x1500] sm:$0xff]
    %v1059 = vld [vmem:[#allocation2 + $0x1508] sm:$0xff]
    %v1060 = vld [vmem:[#allocation2 + $0x1510] sm:$0xff]
    %v1061 = vld [vmem:[#allocation2 + $0x1518] sm:$0xff]
    %v1062 = vld [vmem:[#allocation2 + $0x1520] sm:$0xff]
    %v1063 = vld [vmem:[#allocation2 + $0x1528] sm:$0xff]
    %v1064 = vld [vmem:[#allocation2 + $0x1530] sm:$0xff]
    %v1065 = vld [vmem:[#allocation2 + $0x1538] sm:$0xff]
    %v1066 = vld [vmem:[#allocation2 + $0x1540] sm:$0xff]
    %v1067 = vld [vmem:[#allocation2 + $0x1548] sm:$0xff]
    %v1068 = vld [vmem:[#allocation2 + $0x1550] sm:$0xff]
    %v1069 = vld [vmem:[#allocation2 + $0x1558] sm:$0xff]
    %v1070 = vld [vmem:[#allocation2 + $0x1560] sm:$0xff]
    %v1071 = vld [vmem:[#allocation2 + $0x1568] sm:$0xff]
    %v1072 = vld [vmem:[#allocation2 + $0x1570] sm:$0xff]
    %v1073 = vld [vmem:[#allocation2 + $0x1578] sm:$0xff]
    %v1074 = vld [vmem:[#allocation2 + $0x1580] sm:$0xff]
    %v1075 = vld [vmem:[#allocation2 + $0x1588] sm:$0xff]
    %v1076 = vld [vmem:[#allocation2 + $0x1590] sm:$0xff]
    %v1077 = vld [vmem:[#allocation2 + $0x1598] sm:$0xff]
    %v1078 = vld [vmem:[#allocation2 + $0x15a0] sm:$0xff]
    %v1079 = vld [vmem:[#allocation2 + $0x15a8] sm:$0xff]
    %v1080 = vld [vmem:[#allocation2 + $0x15b0] sm:$0xff]
    %v1081 = vld [vmem:[#allocation2 + $0x15b8] sm:$0xff]
    %v1082 = vld [vmem:[#allocation2 + $0x15c0] sm:$0xff]
    %v1083 = vld [vmem:[#allocation2 + $0x15c8] sm:$0xff]
    %v1084 = vld [vmem:[#allocation2 + $0x15d0] sm:$0xff]
    %v1085 = vld [vmem:[#allocation2 + $0x15d8] sm:$0xff]
    %v1086 = vld [vmem:[#allocation2 + $0x15e0] sm:$0xff]
    %v1087 = vld [vmem:[#allocation2 + $0x15e8] sm:$0xff]
    %v1088 = vld [vmem:[#allocation2 + $0x15f0] sm:$0xff]
    %v1089 = vld [vmem:[#allocation2 + $0x15f8] sm:$0xff]
    %v1090 = vld [vmem:[#allocation2 + $0x1600] sm:$0xff]
    %v1091 = vld [vmem:[#allocation2 + $0x1608] sm:$0xff]
    %v1092 = vld [vmem:[#allocation2 + $0x1610] sm:$0xff]
    %v1093 = vld [vmem:[#allocation2 + $0x1618] sm:$0xff]
    %v1094 = vld [vmem:[#allocation2 + $0x1620] sm:$0xff]
    %v1095 = vld [vmem:[#allocation2 + $0x1628] sm:$0xff]
    %v1096 = vld [vmem:[#allocation2 + $0x1630] sm:$0xff]
    %v1097 = vld [vmem:[#allocation2 + $0x1638] sm:$0xff]
    %v1098 = vld [vmem:[#allocation2 + $0x1640] sm:$0xff]
    %v1099 = vld [vmem:[#allocation2 + $0x1648] sm:$0xff]
    %v1100 = vld [vmem:[#allocation2 + $0x1650] sm:$0xff]
    %v1101 = vld [vmem:[#allocation2 + $0x1658] sm:$0xff]
    %v1102 = vld [vmem:[#allocation2 + $0x1660] sm:$0xff]
    %v1103 = vld [vmem:[#allocation2 + $0x1668] sm:$0xff]
    %v1104 = vld [vmem:[#allocation2 + $0x1670] sm:$0xff]
    %v1105 = vld [vmem:[#allocation2 + $0x1678] sm:$0xff]
    %v1106 = vld [vmem:[#allocation2 + $0x1680] sm:$0xff]
    %v1107 = vld [vmem:[#allocation2 + $0x1688] sm:$0xff]
    %v1108 = vld [vmem:[#allocation2 + $0x1690] sm:$0xff]
    %v1109 = vld [vmem:[#allocation2 + $0x1698] sm:$0xff]
    %v1110 = vld [vmem:[#allocation2 + $0x16a0] sm:$0xff]
    %v1111 = vld [vmem:[#allocation2 + $0x16a8] sm:$0xff]
    %v1112 = vld [vmem:[#allocation2 + $0x16b0] sm:$0xff]
    %v1113 = vld [vmem:[#allocation2 + $0x16b8] sm:$0xff]
    %v1114 = vld [vmem:[#allocation2 + $0x16c0] sm:$0xff]
    %v1115 = vld [vmem:[#allocation2 + $0x16c8] sm:$0xff]
    %v1116 = vld [vmem:[#allocation2 + $0x16d0] sm:$0xff]
    %v1117 = vld [vmem:[#allocation2 + $0x16d8] sm:$0xff]
    %v1118 = vld [vmem:[#allocation2 + $0x16e0] sm:$0xff]
    %v1119 = vld [vmem:[#allocation2 + $0x16e8] sm:$0xff]
    %v1120 = vld [vmem:[#allocation2 + $0x16f0] sm:$0xff]
    %v1121 = vld [vmem:[#allocation2 + $0x16f8] sm:$0xff]
    %v1122 = vld [vmem:[#allocation2 + $0x1700] sm:$0xff]
    %v1123 = vld [vmem:[#allocation2 + $0x1708] sm:$0xff]
    %v1124 = vld [vmem:[#allocation2 + $0x1710] sm:$0xff]
    %v1125 = vld [vmem:[#allocation2 + $0x1718] sm:$0xff]
    %v1126 = vld [vmem:[#allocation2 + $0x1720] sm:$0xff]
    %v1127 = vld [vmem:[#allocation2 + $0x1728] sm:$0xff]
    %v1128 = vld [vmem:[#allocation2 + $0x1730] sm:$0xff]
    %v1129 = vld [vmem:[#allocation2 + $0x1738] sm:$0xff]
    %v1130 = vld [vmem:[#allocation2 + $0x1740] sm:$0xff]
    %v1131 = vld [vmem:[#allocation2 + $0x1748] sm:$0xff]
    %v1132 = vld [vmem:[#allocation2 + $0x1750] sm:$0xff]
    %v1133 = vld [vmem:[#allocation2 + $0x1758] sm:$0xff]
    %v1134 = vld [vmem:[#allocation2 + $0x1760] sm:$0xff]
    %v1135 = vld [vmem:[#allocation2 + $0x1768] sm:$0xff]
    %v1136 = vld [vmem:[#allocation2 + $0x1770] sm:$0xff]
    %v1137 = vld [vmem:[#allocation2 + $0x1778] sm:$0xff]
    %v1138 = vld [vmem:[#allocation2 + $0x1780] sm:$0xff]
    %v1139 = vld [vmem:[#allocation2 + $0x1788] sm:$0xff]
    %v1140 = vld [vmem:[#allocation2 + $0x1790] sm:$0xff]
    %v1141 = vld [vmem:[#allocation2 + $0x1798] sm:$0xff]
    %v1142 = vld [vmem:[#allocation2 + $0x17a0] sm:$0xff]
    %v1143 = vld [vmem:[#allocation2 + $0x17a8] sm:$0xff]
    %v1144 = vld [vmem:[#allocation2 + $0x17b0] sm:$0xff]
    %v1145 = vld [vmem:[#allocation2 + $0x17b8] sm:$0xff]
    %v1146 = vld [vmem:[#allocation2 + $0x17c0] sm:$0xff]
    %v1147 = vld [vmem:[#allocation2 + $0x17c8] sm:$0xff]
    %v1148 = vld [vmem:[#allocation2 + $0x17d0] sm:$0xff]
    %v1149 = vld [vmem:[#allocation2 + $0x17d8] sm:$0xff]
    %v1150 = vld [vmem:[#allocation2 + $0x17e0] sm:$0xff]
    %v1151 = vld [vmem:[#allocation2 + $0x17e8] sm:$0xff]
    %v1152 = vld [vmem:[#allocation2 + $0x17f0] sm:$0xff]
    %v1153 = vld [vmem:[#allocation2 + $0x17f8] sm:$0xff]
    %v1154 = vld [vmem:[#allocation5] sm:$0xf]
    %v1156 = vperm.slane %v1154, 0
    %v1157 = vperm.slane %v1154, 1
    %v1158 = vperm.slane %v1154, 2
    %v1159 = vperm.slane %v1154, 3
    %v1932 = vunpack.c.l.b16 %v386
    %v1933 = vunpack.c.h.b16 %v386
    %v1934 = vunpack.c.l.b16 %v387
    %v1935 = vunpack.c.h.b16 %v387
    %v1936 = vunpack.c.l.b16 %v388
    %v1937 = vunpack.c.h.b16 %v388
    %v1938 = vunpack.c.l.b16 %v389
    %v1939 = vunpack.c.h.b16 %v389
    %v1940 = vunpack.c.l.b16 %v390
    %v1941 = vunpack.c.h.b16 %v390
    %v1942 = vunpack.c.l.b16 %v391
    %v1943 = vunpack.c.h.b16 %v391
    %v1944 = vunpack.c.l.b16 %v392
    %v1945 = vunpack.c.h.b16 %v392
    %v1946 = vunpack.c.l.b16 %v393
    %v1947 = vunpack.c.h.b16 %v393
    %v1948 = vunpack.c.l.b16 %v394
    %v1949 = vunpack.c.h.b16 %v394
    %v1950 = vunpack.c.l.b16 %v395
    %v1951 = vunpack.c.h.b16 %v395
    %v1952 = vunpack.c.l.b16 %v396
    %v1953 = vunpack.c.h.b16 %v396
    %v1954 = vunpack.c.l.b16 %v397
    %v1955 = vunpack.c.h.b16 %v397
    %v1956 = vunpack.c.l.b16 %v398
    %v1957 = vunpack.c.h.b16 %v398
    %v1958 = vunpack.c.l.b16 %v399
    %v1959 = vunpack.c.h.b16 %v399
    %v1960 = vunpack.c.l.b16 %v400
    %v1961 = vunpack.c.h.b16 %v400
    %v1962 = vunpack.c.l.b16 %v401
    %v1963 = vunpack.c.h.b16 %v401
    %v1964 = vunpack.c.l.b16 %v402
    %v1965 = vunpack.c.h.b16 %v402
    %v1966 = vunpack.c.l.b16 %v403
    %v1967 = vunpack.c.h.b16 %v403
    %v1968 = vunpack.c.l.b16 %v404
    %v1969 = vunpack.c.h.b16 %v404
    %v1970 = vunpack.c.l.b16 %v405
    %v1971 = vunpack.c.h.b16 %v405
    %v1972 = vunpack.c.l.b16 %v406
    %v1973 = vunpack.c.h.b16 %v406
    %v1974 = vunpack.c.l.b16 %v407
    %v1975 = vunpack.c.h.b16 %v407
    %v1976 = vunpack.c.l.b16 %v408
    %v1977 = vunpack.c.h.b16 %v408
    %v1978 = vunpack.c.l.b16 %v409
    %v1979 = vunpack.c.h.b16 %v409
    %v1980 = vunpack.c.l.b16 %v410
    %v1981 = vunpack.c.h.b16 %v410
    %v1982 = vunpack.c.l.b16 %v411
    %v1983 = vunpack.c.h.b16 %v411
    %v1984 = vunpack.c.l.b16 %v412
    %v1985 = vunpack.c.h.b16 %v412
    %v1986 = vunpack.c.l.b16 %v413
    %v1987 = vunpack.c.h.b16 %v413
    %v1988 = vunpack.c.l.b16 %v414
    %v1989 = vunpack.c.h.b16 %v414
    %v1990 = vunpack.c.l.b16 %v415
    %v1991 = vunpack.c.h.b16 %v415
    %v1992 = vunpack.c.l.b16 %v416
    %v1993 = vunpack.c.h.b16 %v416
    %v1994 = vunpack.c.l.b16 %v417
    %v1995 = vunpack.c.h.b16 %v417
    %v1996 = vunpack.c.l.b16 %v418
    %v1997 = vunpack.c.h.b16 %v418
    %v1998 = vunpack.c.l.b16 %v419
    %v1999 = vunpack.c.h.b16 %v419
    %v2000 = vunpack.c.l.b16 %v420
    %v2001 = vunpack.c.h.b16 %v420
    %v2002 = vunpack.c.l.b16 %v421
    %v2003 = vunpack.c.h.b16 %v421
    %v2004 = vunpack.c.l.b16 %v422
    %v2005 = vunpack.c.h.b16 %v422
    %v2006 = vunpack.c.l.b16 %v423
    %v2007 = vunpack.c.h.b16 %v423
    %v2008 = vunpack.c.l.b16 %v424
    %v2009 = vunpack.c.h.b16 %v424
    %v2010 = vunpack.c.l.b16 %v425
    %v2011 = vunpack.c.h.b16 %v425
    %v2012 = vunpack.c.l.b16 %v426
    %v2013 = vunpack.c.h.b16 %v426
    %v2014 = vunpack.c.l.b16 %v427
    %v2015 = vunpack.c.h.b16 %v427
    %v2016 = vunpack.c.l.b16 %v428
    %v2017 = vunpack.c.h.b16 %v428
    %v2018 = vunpack.c.l.b16 %v429
    %v2019 = vunpack.c.h.b16 %v429
    %v2020 = vunpack.c.l.b16 %v430
    %v2021 = vunpack.c.h.b16 %v430
    %v2022 = vunpack.c.l.b16 %v431
    %v2023 = vunpack.c.h.b16 %v431
    %v2024 = vunpack.c.l.b16 %v432
    %v2025 = vunpack.c.h.b16 %v432
    %v2026 = vunpack.c.l.b16 %v433
    %v2027 = vunpack.c.h.b16 %v433
    %v2028 = vunpack.c.l.b16 %v434
    %v2029 = vunpack.c.h.b16 %v434
    %v2030 = vunpack.c.l.b16 %v435
    %v2031 = vunpack.c.h.b16 %v435
    %v2032 = vunpack.c.l.b16 %v436
    %v2033 = vunpack.c.h.b16 %v436
    %v2034 = vunpack.c.l.b16 %v437
    %v2035 = vunpack.c.h.b16 %v437
    %v2036 = vunpack.c.l.b16 %v438
    %v2037 = vunpack.c.h.b16 %v438
    %v2038 = vunpack.c.l.b16 %v439
    %v2039 = vunpack.c.h.b16 %v439
    %v2040 = vunpack.c.l.b16 %v440
    %v2041 = vunpack.c.h.b16 %v440
    %v2042 = vunpack.c.l.b16 %v441
    %v2043 = vunpack.c.h.b16 %v441
    %v2044 = vunpack.c.l.b16 %v442
    %v2045 = vunpack.c.h.b16 %v442
    %v2046 = vunpack.c.l.b16 %v443
    %v2047 = vunpack.c.h.b16 %v443
    %v2048 = vunpack.c.l.b16 %v444
    %v2049 = vunpack.c.h.b16 %v444
    %v2050 = vunpack.c.l.b16 %v445
    %v2051 = vunpack.c.h.b16 %v445
    %v2052 = vunpack.c.l.b16 %v446
    %v2053 = vunpack.c.h.b16 %v446
    %v2054 = vunpack.c.l.b16 %v447
    %v2055 = vunpack.c.h.b16 %v447
    %v2056 = vunpack.c.l.b16 %v448
    %v2057 = vunpack.c.h.b16 %v448
    %v2058 = vunpack.c.l.b16 %v449
    %v2059 = vunpack.c.h.b16 %v449
    %v2060 = vunpack.c.l.b16 %v450
    %v2061 = vunpack.c.h.b16 %v450
    %v2062 = vunpack.c.l.b16 %v451
    %v2063 = vunpack.c.h.b16 %v451
    %v2064 = vunpack.c.l.b16 %v452
    %v2065 = vunpack.c.h.b16 %v452
    %v2066 = vunpack.c.l.b16 %v453
    %v2067 = vunpack.c.h.b16 %v453
    %v2068 = vunpack.c.l.b16 %v454
    %v2069 = vunpack.c.h.b16 %v454
    %v2070 = vunpack.c.l.b16 %v455
    %v2071 = vunpack.c.h.b16 %v455
    %v2072 = vunpack.c.l.b16 %v456
    %v2073 = vunpack.c.h.b16 %v456
    %v2074 = vunpack.c.l.b16 %v457
    %v2075 = vunpack.c.h.b16 %v457
    %v2076 = vunpack.c.l.b16 %v458
    %v2077 = vunpack.c.h.b16 %v458
    %v2078 = vunpack.c.l.b16 %v459
    %v2079 = vunpack.c.h.b16 %v459
    %v2080 = vunpack.c.l.b16 %v460
    %v2081 = vunpack.c.h.b16 %v460
    %v2082 = vunpack.c.l.b16 %v461
    %v2083 = vunpack.c.h.b16 %v461
    %v2084 = vunpack.c.l.b16 %v462
    %v2085 = vunpack.c.h.b16 %v462
    %v2086 = vunpack.c.l.b16 %v463
    %v2087 = vunpack.c.h.b16 %v463
    %v2088 = vunpack.c.l.b16 %v464
    %v2089 = vunpack.c.h.b16 %v464
    %v2090 = vunpack.c.l.b16 %v465
    %v2091 = vunpack.c.h.b16 %v465
    %v2092 = vunpack.c.l.b16 %v466
    %v2093 = vunpack.c.h.b16 %v466
    %v2094 = vunpack.c.l.b16 %v467
    %v2095 = vunpack.c.h.b16 %v467
    %v2096 = vunpack.c.l.b16 %v468
    %v2097 = vunpack.c.h.b16 %v468
    %v2098 = vunpack.c.l.b16 %v469
    %v2099 = vunpack.c.h.b16 %v469
    %v2100 = vunpack.c.l.b16 %v470
    %v2101 = vunpack.c.h.b16 %v470
    %v2102 = vunpack.c.l.b16 %v471
    %v2103 = vunpack.c.h.b16 %v471
    %v2104 = vunpack.c.l.b16 %v472
    %v2105 = vunpack.c.h.b16 %v472
    %v2106 = vunpack.c.l.b16 %v473
    %v2107 = vunpack.c.h.b16 %v473
    %v2108 = vunpack.c.l.b16 %v474
    %v2109 = vunpack.c.h.b16 %v474
    %v2110 = vunpack.c.l.b16 %v475
    %v2111 = vunpack.c.h.b16 %v475
    %v2112 = vunpack.c.l.b16 %v476
    %v2113 = vunpack.c.h.b16 %v476
    %v2114 = vunpack.c.l.b16 %v477
    %v2115 = vunpack.c.h.b16 %v477
    %v2116 = vunpack.c.l.b16 %v478
    %v2117 = vunpack.c.h.b16 %v478
    %v2118 = vunpack.c.l.b16 %v479
    %v2119 = vunpack.c.h.b16 %v479
    %v2120 = vunpack.c.l.b16 %v480
    %v2121 = vunpack.c.h.b16 %v480
    %v2122 = vunpack.c.l.b16 %v481
    %v2123 = vunpack.c.h.b16 %v481
    %v2124 = vunpack.c.l.b16 %v482
    %v2125 = vunpack.c.h.b16 %v482
    %v2126 = vunpack.c.l.b16 %v483
    %v2127 = vunpack.c.h.b16 %v483
    %v2128 = vunpack.c.l.b16 %v484
    %v2129 = vunpack.c.h.b16 %v484
    %v2130 = vunpack.c.l.b16 %v485
    %v2131 = vunpack.c.h.b16 %v485
    %v2132 = vunpack.c.l.b16 %v486
    %v2133 = vunpack.c.h.b16 %v486
    %v2134 = vunpack.c.l.b16 %v487
    %v2135 = vunpack.c.h.b16 %v487
    %v2136 = vunpack.c.l.b16 %v488
    %v2137 = vunpack.c.h.b16 %v488
    %v2138 = vunpack.c.l.b16 %v489
    %v2139 = vunpack.c.h.b16 %v489
    %v2140 = vunpack.c.l.b16 %v490
    %v2141 = vunpack.c.h.b16 %v490
    %v2142 = vunpack.c.l.b16 %v491
    %v2143 = vunpack.c.h.b16 %v491
    %v2144 = vunpack.c.l.b16 %v492
    %v2145 = vunpack.c.h.b16 %v492
    %v2146 = vunpack.c.l.b16 %v493
    %v2147 = vunpack.c.h.b16 %v493
    %v2148 = vunpack.c.l.b16 %v494
    %v2149 = vunpack.c.h.b16 %v494
    %v2150 = vunpack.c.l.b16 %v495
    %v2151 = vunpack.c.h.b16 %v495
    %v2152 = vunpack.c.l.b16 %v496
    %v2153 = vunpack.c.h.b16 %v496
    %v2154 = vunpack.c.l.b16 %v497
    %v2155 = vunpack.c.h.b16 %v497
    %v2156 = vunpack.c.l.b16 %v498
    %v2157 = vunpack.c.h.b16 %v498
    %v2158 = vunpack.c.l.b16 %v499
    %v2159 = vunpack.c.h.b16 %v499
    %v2160 = vunpack.c.l.b16 %v500
    %v2161 = vunpack.c.h.b16 %v500
    %v2162 = vunpack.c.l.b16 %v501
    %v2163 = vunpack.c.h.b16 %v501
    %v2164 = vunpack.c.l.b16 %v502
    %v2165 = vunpack.c.h.b16 %v502
    %v2166 = vunpack.c.l.b16 %v503
    %v2167 = vunpack.c.h.b16 %v503
    %v2168 = vunpack.c.l.b16 %v504
    %v2169 = vunpack.c.h.b16 %v504
    %v2170 = vunpack.c.l.b16 %v505
    %v2171 = vunpack.c.h.b16 %v505
    %v2172 = vunpack.c.l.b16 %v506
    %v2173 = vunpack.c.h.b16 %v506
    %v2174 = vunpack.c.l.b16 %v507
    %v2175 = vunpack.c.h.b16 %v507
    %v2176 = vunpack.c.l.b16 %v508
    %v2177 = vunpack.c.h.b16 %v508
    %v2178 = vunpack.c.l.b16 %v509
    %v2179 = vunpack.c.h.b16 %v509
    %v2180 = vunpack.c.l.b16 %v510
    %v2181 = vunpack.c.h.b16 %v510
    %v2182 = vunpack.c.l.b16 %v511
    %v2183 = vunpack.c.h.b16 %v511
    %v2184 = vunpack.c.l.b16 %v512
    %v2185 = vunpack.c.h.b16 %v512
    %v2186 = vunpack.c.l.b16 %v513
    %v2187 = vunpack.c.h.b16 %v513
    %v2188 = vunpack.c.l.b16 %v514
    %v2189 = vunpack.c.h.b16 %v514
    %v2190 = vunpack.c.l.b16 %v515
    %v2191 = vunpack.c.h.b16 %v515
    %v2192 = vunpack.c.l.b16 %v516
    %v2193 = vunpack.c.h.b16 %v516
    %v2194 = vunpack.c.l.b16 %v517
    %v2195 = vunpack.c.h.b16 %v517
    %v2196 = vunpack.c.l.b16 %v518
    %v2197 = vunpack.c.h.b16 %v518
    %v2198 = vunpack.c.l.b16 %v519
    %v2199 = vunpack.c.h.b16 %v519
    %v2200 = vunpack.c.l.b16 %v520
    %v2201 = vunpack.c.h.b16 %v520
    %v2202 = vunpack.c.l.b16 %v521
    %v2203 = vunpack.c.h.b16 %v521
    %v2204 = vunpack.c.l.b16 %v522
    %v2205 = vunpack.c.h.b16 %v522
    %v2206 = vunpack.c.l.b16 %v523
    %v2207 = vunpack.c.h.b16 %v523
    %v2208 = vunpack.c.l.b16 %v524
    %v2209 = vunpack.c.h.b16 %v524
    %v2210 = vunpack.c.l.b16 %v525
    %v2211 = vunpack.c.h.b16 %v525
    %v2212 = vunpack.c.l.b16 %v526
    %v2213 = vunpack.c.h.b16 %v526
    %v2214 = vunpack.c.l.b16 %v527
    %v2215 = vunpack.c.h.b16 %v527
    %v2216 = vunpack.c.l.b16 %v528
    %v2217 = vunpack.c.h.b16 %v528
    %v2218 = vunpack.c.l.b16 %v529
    %v2219 = vunpack.c.h.b16 %v529
    %v2220 = vunpack.c.l.b16 %v530
    %v2221 = vunpack.c.h.b16 %v530
    %v2222 = vunpack.c.l.b16 %v531
    %v2223 = vunpack.c.h.b16 %v531
    %v2224 = vunpack.c.l.b16 %v532
    %v2225 = vunpack.c.h.b16 %v532
    %v2226 = vunpack.c.l.b16 %v533
    %v2227 = vunpack.c.h.b16 %v533
    %v2228 = vunpack.c.l.b16 %v534
    %v2229 = vunpack.c.h.b16 %v534
    %v2230 = vunpack.c.l.b16 %v535
    %v2231 = vunpack.c.h.b16 %v535
    %v2232 = vunpack.c.l.b16 %v536
    %v2233 = vunpack.c.h.b16 %v536
    %v2234 = vunpack.c.l.b16 %v537
    %v2235 = vunpack.c.h.b16 %v537
    %v2236 = vunpack.c.l.b16 %v538
    %v2237 = vunpack.c.h.b16 %v538
    %v2238 = vunpack.c.l.b16 %v539
    %v2239 = vunpack.c.h.b16 %v539
    %v2240 = vunpack.c.l.b16 %v540
    %v2241 = vunpack.c.h.b16 %v540
    %v2242 = vunpack.c.l.b16 %v541
    %v2243 = vunpack.c.h.b16 %v541
    %v2244 = vunpack.c.l.b16 %v542
    %v2245 = vunpack.c.h.b16 %v542
    %v2246 = vunpack.c.l.b16 %v543
    %v2247 = vunpack.c.h.b16 %v543
    %v2248 = vunpack.c.l.b16 %v544
    %v2249 = vunpack.c.h.b16 %v544
    %v2250 = vunpack.c.l.b16 %v545
    %v2251 = vunpack.c.h.b16 %v545
    %v2252 = vunpack.c.l.b16 %v546
    %v2253 = vunpack.c.h.b16 %v546
    %v2254 = vunpack.c.l.b16 %v547
    %v2255 = vunpack.c.h.b16 %v547
    %v2256 = vunpack.c.l.b16 %v548
    %v2257 = vunpack.c.h.b16 %v548
    %v2258 = vunpack.c.l.b16 %v549
    %v2259 = vunpack.c.h.b16 %v549
    %v2260 = vunpack.c.l.b16 %v550
    %v2261 = vunpack.c.h.b16 %v550
    %v2262 = vunpack.c.l.b16 %v551
    %v2263 = vunpack.c.h.b16 %v551
    %v2264 = vunpack.c.l.b16 %v552
    %v2265 = vunpack.c.h.b16 %v552
    %v2266 = vunpack.c.l.b16 %v553
    %v2267 = vunpack.c.h.b16 %v553
    %v2268 = vunpack.c.l.b16 %v554
    %v2269 = vunpack.c.h.b16 %v554
    %v2270 = vunpack.c.l.b16 %v555
    %v2271 = vunpack.c.h.b16 %v555
    %v2272 = vunpack.c.l.b16 %v556
    %v2273 = vunpack.c.h.b16 %v556
    %v2274 = vunpack.c.l.b16 %v557
    %v2275 = vunpack.c.h.b16 %v557
    %v2276 = vunpack.c.l.b16 %v558
    %v2277 = vunpack.c.h.b16 %v558
    %v2278 = vunpack.c.l.b16 %v559
    %v2279 = vunpack.c.h.b16 %v559
    %v2280 = vunpack.c.l.b16 %v560
    %v2281 = vunpack.c.h.b16 %v560
    %v2282 = vunpack.c.l.b16 %v561
    %v2283 = vunpack.c.h.b16 %v561
    %v2284 = vunpack.c.l.b16 %v562
    %v2285 = vunpack.c.h.b16 %v562
    %v2286 = vunpack.c.l.b16 %v563
    %v2287 = vunpack.c.h.b16 %v563
    %v2288 = vunpack.c.l.b16 %v564
    %v2289 = vunpack.c.h.b16 %v564
    %v2290 = vunpack.c.l.b16 %v565
    %v2291 = vunpack.c.h.b16 %v565
    %v2292 = vunpack.c.l.b16 %v566
    %v2293 = vunpack.c.h.b16 %v566
    %v2294 = vunpack.c.l.b16 %v567
    %v2295 = vunpack.c.h.b16 %v567
    %v2296 = vunpack.c.l.b16 %v568
    %v2297 = vunpack.c.h.b16 %v568
    %v2298 = vunpack.c.l.b16 %v569
    %v2299 = vunpack.c.h.b16 %v569
    %v2300 = vunpack.c.l.b16 %v570
    %v2301 = vunpack.c.h.b16 %v570
    %v2302 = vunpack.c.l.b16 %v571
    %v2303 = vunpack.c.h.b16 %v571
    %v2304 = vunpack.c.l.b16 %v572
    %v2305 = vunpack.c.h.b16 %v572
    %v2306 = vunpack.c.l.b16 %v573
    %v2307 = vunpack.c.h.b16 %v573
    %v2308 = vunpack.c.l.b16 %v574
    %v2309 = vunpack.c.h.b16 %v574
    %v2310 = vunpack.c.l.b16 %v575
    %v2311 = vunpack.c.h.b16 %v575
    %v2312 = vunpack.c.l.b16 %v576
    %v2313 = vunpack.c.h.b16 %v576
    %v2314 = vunpack.c.l.b16 %v577
    %v2315 = vunpack.c.h.b16 %v577
    %v2316 = vunpack.c.l.b16 %v578
    %v2317 = vunpack.c.h.b16 %v578
    %v2318 = vunpack.c.l.b16 %v579
    %v2319 = vunpack.c.h.b16 %v579
    %v2320 = vunpack.c.l.b16 %v580
    %v2321 = vunpack.c.h.b16 %v580
    %v2322 = vunpack.c.l.b16 %v581
    %v2323 = vunpack.c.h.b16 %v581
    %v2324 = vunpack.c.l.b16 %v582
    %v2325 = vunpack.c.h.b16 %v582
    %v2326 = vunpack.c.l.b16 %v583
    %v2327 = vunpack.c.h.b16 %v583
    %v2328 = vunpack.c.l.b16 %v584
    %v2329 = vunpack.c.h.b16 %v584
    %v2330 = vunpack.c.l.b16 %v585
    %v2331 = vunpack.c.h.b16 %v585
    %v2332 = vunpack.c.l.b16 %v586
    %v2333 = vunpack.c.h.b16 %v586
    %v2334 = vunpack.c.l.b16 %v587
    %v2335 = vunpack.c.h.b16 %v587
    %v2336 = vunpack.c.l.b16 %v588
    %v2337 = vunpack.c.h.b16 %v588
    %v2338 = vunpack.c.l.b16 %v589
    %v2339 = vunpack.c.h.b16 %v589
    %v2340 = vunpack.c.l.b16 %v590
    %v2341 = vunpack.c.h.b16 %v590
    %v2342 = vunpack.c.l.b16 %v591
    %v2343 = vunpack.c.h.b16 %v591
    %v2344 = vunpack.c.l.b16 %v592
    %v2345 = vunpack.c.h.b16 %v592
    %v2346 = vunpack.c.l.b16 %v593
    %v2347 = vunpack.c.h.b16 %v593
    %v2348 = vunpack.c.l.b16 %v594
    %v2349 = vunpack.c.h.b16 %v594
    %v2350 = vunpack.c.l.b16 %v595
    %v2351 = vunpack.c.h.b16 %v595
    %v2352 = vunpack.c.l.b16 %v596
    %v2353 = vunpack.c.h.b16 %v596
    %v2354 = vunpack.c.l.b16 %v597
    %v2355 = vunpack.c.h.b16 %v597
    %v2356 = vunpack.c.l.b16 %v598
    %v2357 = vunpack.c.h.b16 %v598
    %v2358 = vunpack.c.l.b16 %v599
    %v2359 = vunpack.c.h.b16 %v599
    %v2360 = vunpack.c.l.b16 %v600
    %v2361 = vunpack.c.h.b16 %v600
    %v2362 = vunpack.c.l.b16 %v601
    %v2363 = vunpack.c.h.b16 %v601
    %v2364 = vunpack.c.l.b16 %v602
    %v2365 = vunpack.c.h.b16 %v602
    %v2366 = vunpack.c.l.b16 %v603
    %v2367 = vunpack.c.h.b16 %v603
    %v2368 = vunpack.c.l.b16 %v604
    %v2369 = vunpack.c.h.b16 %v604
    %v2370 = vunpack.c.l.b16 %v605
    %v2371 = vunpack.c.h.b16 %v605
    %v2372 = vunpack.c.l.b16 %v606
    %v2373 = vunpack.c.h.b16 %v606
    %v2374 = vunpack.c.l.b16 %v607
    %v2375 = vunpack.c.h.b16 %v607
    %v2376 = vunpack.c.l.b16 %v608
    %v2377 = vunpack.c.h.b16 %v608
    %v2378 = vunpack.c.l.b16 %v609
    %v2379 = vunpack.c.h.b16 %v609
    %v2380 = vunpack.c.l.b16 %v610
    %v2381 = vunpack.c.h.b16 %v610
    %v2382 = vunpack.c.l.b16 %v611
    %v2383 = vunpack.c.h.b16 %v611
    %v2384 = vunpack.c.l.b16 %v612
    %v2385 = vunpack.c.h.b16 %v612
    %v2386 = vunpack.c.l.b16 %v613
    %v2387 = vunpack.c.h.b16 %v613
    %v2388 = vunpack.c.l.b16 %v614
    %v2389 = vunpack.c.h.b16 %v614
    %v2390 = vunpack.c.l.b16 %v615
    %v2391 = vunpack.c.h.b16 %v615
    %v2392 = vunpack.c.l.b16 %v616
    %v2393 = vunpack.c.h.b16 %v616
    %v2394 = vunpack.c.l.b16 %v617
    %v2395 = vunpack.c.h.b16 %v617
    %v2396 = vunpack.c.l.b16 %v618
    %v2397 = vunpack.c.h.b16 %v618
    %v2398 = vunpack.c.l.b16 %v619
    %v2399 = vunpack.c.h.b16 %v619
    %v2400 = vunpack.c.l.b16 %v620
    %v2401 = vunpack.c.h.b16 %v620
    %v2402 = vunpack.c.l.b16 %v621
    %v2403 = vunpack.c.h.b16 %v621
    %v2404 = vunpack.c.l.b16 %v622
    %v2405 = vunpack.c.h.b16 %v622
    %v2406 = vunpack.c.l.b16 %v623
    %v2407 = vunpack.c.h.b16 %v623
    %v2408 = vunpack.c.l.b16 %v624
    %v2409 = vunpack.c.h.b16 %v624
    %v2410 = vunpack.c.l.b16 %v625
    %v2411 = vunpack.c.h.b16 %v625
    %v2412 = vunpack.c.l.b16 %v626
    %v2413 = vunpack.c.h.b16 %v626
    %v2414 = vunpack.c.l.b16 %v627
    %v2415 = vunpack.c.h.b16 %v627
    %v2416 = vunpack.c.l.b16 %v628
    %v2417 = vunpack.c.h.b16 %v628
    %v2418 = vunpack.c.l.b16 %v629
    %v2419 = vunpack.c.h.b16 %v629
    %v2420 = vunpack.c.l.b16 %v630
    %v2421 = vunpack.c.h.b16 %v630
    %v2422 = vunpack.c.l.b16 %v631
    %v2423 = vunpack.c.h.b16 %v631
    %v2424 = vunpack.c.l.b16 %v632
    %v2425 = vunpack.c.h.b16 %v632
    %v2426 = vunpack.c.l.b16 %v633
    %v2427 = vunpack.c.h.b16 %v633
    %v2428 = vunpack.c.l.b16 %v634
    %v2429 = vunpack.c.h.b16 %v634
    %v2430 = vunpack.c.l.b16 %v635
    %v2431 = vunpack.c.h.b16 %v635
    %v2432 = vunpack.c.l.b16 %v636
    %v2433 = vunpack.c.h.b16 %v636
    %v2434 = vunpack.c.l.b16 %v637
    %v2435 = vunpack.c.h.b16 %v637
    %v2436 = vunpack.c.l.b16 %v638
    %v2437 = vunpack.c.h.b16 %v638
    %v2438 = vunpack.c.l.b16 %v639
    %v2439 = vunpack.c.h.b16 %v639
    %v2440 = vunpack.c.l.b16 %v640
    %v2441 = vunpack.c.h.b16 %v640
    %v2442 = vunpack.c.l.b16 %v641
    %v2443 = vunpack.c.h.b16 %v641
    %v2444 = vunpack.c.l.b16 %v642
    %v2445 = vunpack.c.h.b16 %v642
    %v2446 = vunpack.c.l.b16 %v643
    %v2447 = vunpack.c.h.b16 %v643
    %v2448 = vunpack.c.l.b16 %v644
    %v2449 = vunpack.c.h.b16 %v644
    %v2450 = vunpack.c.l.b16 %v645
    %v2451 = vunpack.c.h.b16 %v645
    %v2452 = vunpack.c.l.b16 %v646
    %v2453 = vunpack.c.h.b16 %v646
    %v2454 = vunpack.c.l.b16 %v647
    %v2455 = vunpack.c.h.b16 %v647
    %v2456 = vunpack.c.l.b16 %v648
    %v2457 = vunpack.c.h.b16 %v648
    %v2458 = vunpack.c.l.b16 %v649
    %v2459 = vunpack.c.h.b16 %v649
    %v2460 = vunpack.c.l.b16 %v650
    %v2461 = vunpack.c.h.b16 %v650
    %v2462 = vunpack.c.l.b16 %v651
    %v2463 = vunpack.c.h.b16 %v651
    %v2464 = vunpack.c.l.b16 %v652
    %v2465 = vunpack.c.h.b16 %v652
    %v2466 = vunpack.c.l.b16 %v653
    %v2467 = vunpack.c.h.b16 %v653
    %v2468 = vunpack.c.l.b16 %v654
    %v2469 = vunpack.c.h.b16 %v654
    %v2470 = vunpack.c.l.b16 %v655
    %v2471 = vunpack.c.h.b16 %v655
    %v2472 = vunpack.c.l.b16 %v656
    %v2473 = vunpack.c.h.b16 %v656
    %v2474 = vunpack.c.l.b16 %v657
    %v2475 = vunpack.c.h.b16 %v657
    %v2476 = vunpack.c.l.b16 %v658
    %v2477 = vunpack.c.h.b16 %v658
    %v2478 = vunpack.c.l.b16 %v659
    %v2479 = vunpack.c.h.b16 %v659
    %v2480 = vunpack.c.l.b16 %v660
    %v2481 = vunpack.c.h.b16 %v660
    %v2482 = vunpack.c.l.b16 %v661
    %v2483 = vunpack.c.h.b16 %v661
    %v2484 = vunpack.c.l.b16 %v662
    %v2485 = vunpack.c.h.b16 %v662
    %v2486 = vunpack.c.l.b16 %v663
    %v2487 = vunpack.c.h.b16 %v663
    %v2488 = vunpack.c.l.b16 %v664
    %v2489 = vunpack.c.h.b16 %v664
    %v2490 = vunpack.c.l.b16 %v665
    %v2491 = vunpack.c.h.b16 %v665
    %v2492 = vunpack.c.l.b16 %v666
    %v2493 = vunpack.c.h.b16 %v666
    %v2494 = vunpack.c.l.b16 %v667
    %v2495 = vunpack.c.h.b16 %v667
    %v2496 = vunpack.c.l.b16 %v668
    %v2497 = vunpack.c.h.b16 %v668
    %v2498 = vunpack.c.l.b16 %v669
    %v2499 = vunpack.c.h.b16 %v669
    %v2500 = vunpack.c.l.b16 %v670
    %v2501 = vunpack.c.h.b16 %v670
    %v2502 = vunpack.c.l.b16 %v671
    %v2503 = vunpack.c.h.b16 %v671
    %v2504 = vunpack.c.l.b16 %v672
    %v2505 = vunpack.c.h.b16 %v672
    %v2506 = vunpack.c.l.b16 %v673
    %v2507 = vunpack.c.h.b16 %v673
    %v2508 = vunpack.c.l.b16 %v674
    %v2509 = vunpack.c.h.b16 %v674
    %v2510 = vunpack.c.l.b16 %v675
    %v2511 = vunpack.c.h.b16 %v675
    %v2512 = vunpack.c.l.b16 %v676
    %v2513 = vunpack.c.h.b16 %v676
    %v2514 = vunpack.c.l.b16 %v677
    %v2515 = vunpack.c.h.b16 %v677
    %v2516 = vunpack.c.l.b16 %v678
    %v2517 = vunpack.c.h.b16 %v678
    %v2518 = vunpack.c.l.b16 %v679
    %v2519 = vunpack.c.h.b16 %v679
    %v2520 = vunpack.c.l.b16 %v680
    %v2521 = vunpack.c.h.b16 %v680
    %v2522 = vunpack.c.l.b16 %v681
    %v2523 = vunpack.c.h.b16 %v681
    %v2524 = vunpack.c.l.b16 %v682
    %v2525 = vunpack.c.h.b16 %v682
    %v2526 = vunpack.c.l.b16 %v683
    %v2527 = vunpack.c.h.b16 %v683
    %v2528 = vunpack.c.l.b16 %v684
    %v2529 = vunpack.c.h.b16 %v684
    %v2530 = vunpack.c.l.b16 %v685
    %v2531 = vunpack.c.h.b16 %v685
    %v2532 = vunpack.c.l.b16 %v686
    %v2533 = vunpack.c.h.b16 %v686
    %v2534 = vunpack.c.l.b16 %v687
    %v2535 = vunpack.c.h.b16 %v687
    %v2536 = vunpack.c.l.b16 %v688
    %v2537 = vunpack.c.h.b16 %v688
    %v2538 = vunpack.c.l.b16 %v689
    %v2539 = vunpack.c.h.b16 %v689
    %v2540 = vunpack.c.l.b16 %v690
    %v2541 = vunpack.c.h.b16 %v690
    %v2542 = vunpack.c.l.b16 %v691
    %v2543 = vunpack.c.h.b16 %v691
    %v2544 = vunpack.c.l.b16 %v692
    %v2545 = vunpack.c.h.b16 %v692
    %v2546 = vunpack.c.l.b16 %v693
    %v2547 = vunpack.c.h.b16 %v693
    %v2548 = vunpack.c.l.b16 %v694
    %v2549 = vunpack.c.h.b16 %v694
    %v2550 = vunpack.c.l.b16 %v695
    %v2551 = vunpack.c.h.b16 %v695
    %v2552 = vunpack.c.l.b16 %v696
    %v2553 = vunpack.c.h.b16 %v696
    %v2554 = vunpack.c.l.b16 %v697
    %v2555 = vunpack.c.h.b16 %v697
    %v2556 = vunpack.c.l.b16 %v698
    %v2557 = vunpack.c.h.b16 %v698
    %v2558 = vunpack.c.l.b16 %v699
    %v2559 = vunpack.c.h.b16 %v699
    %v2560 = vunpack.c.l.b16 %v700
    %v2561 = vunpack.c.h.b16 %v700
    %v2562 = vunpack.c.l.b16 %v701
    %v2563 = vunpack.c.h.b16 %v701
    %v2564 = vunpack.c.l.b16 %v702
    %v2565 = vunpack.c.h.b16 %v702
    %v2566 = vunpack.c.l.b16 %v703
    %v2567 = vunpack.c.h.b16 %v703
    %v2568 = vunpack.c.l.b16 %v704
    %v2569 = vunpack.c.h.b16 %v704
    %v2570 = vunpack.c.l.b16 %v705
    %v2571 = vunpack.c.h.b16 %v705
    %v2572 = vunpack.c.l.b16 %v706
    %v2573 = vunpack.c.h.b16 %v706
    %v2574 = vunpack.c.l.b16 %v707
    %v2575 = vunpack.c.h.b16 %v707
    %v2576 = vunpack.c.l.b16 %v708
    %v2577 = vunpack.c.h.b16 %v708
    %v2578 = vunpack.c.l.b16 %v709
    %v2579 = vunpack.c.h.b16 %v709
    %v2580 = vunpack.c.l.b16 %v710
    %v2581 = vunpack.c.h.b16 %v710
    %v2582 = vunpack.c.l.b16 %v711
    %v2583 = vunpack.c.h.b16 %v711
    %v2584 = vunpack.c.l.b16 %v712
    %v2585 = vunpack.c.h.b16 %v712
    %v2586 = vunpack.c.l.b16 %v713
    %v2587 = vunpack.c.h.b16 %v713
    %v2588 = vunpack.c.l.b16 %v714
    %v2589 = vunpack.c.h.b16 %v714
    %v2590 = vunpack.c.l.b16 %v715
    %v2591 = vunpack.c.h.b16 %v715
    %v2592 = vunpack.c.l.b16 %v716
    %v2593 = vunpack.c.h.b16 %v716
    %v2594 = vunpack.c.l.b16 %v717
    %v2595 = vunpack.c.h.b16 %v717
    %v2596 = vunpack.c.l.b16 %v718
    %v2597 = vunpack.c.h.b16 %v718
    %v2598 = vunpack.c.l.b16 %v719
    %v2599 = vunpack.c.h.b16 %v719
    %v2600 = vunpack.c.l.b16 %v720
    %v2601 = vunpack.c.h.b16 %v720
    %v2602 = vunpack.c.l.b16 %v721
    %v2603 = vunpack.c.h.b16 %v721
    %v2604 = vunpack.c.l.b16 %v722
    %v2605 = vunpack.c.h.b16 %v722
    %v2606 = vunpack.c.l.b16 %v723
    %v2607 = vunpack.c.h.b16 %v723
    %v2608 = vunpack.c.l.b16 %v724
    %v2609 = vunpack.c.h.b16 %v724
    %v2610 = vunpack.c.l.b16 %v725
    %v2611 = vunpack.c.h.b16 %v725
    %v2612 = vunpack.c.l.b16 %v726
    %v2613 = vunpack.c.h.b16 %v726
    %v2614 = vunpack.c.l.b16 %v727
    %v2615 = vunpack.c.h.b16 %v727
    %v2616 = vunpack.c.l.b16 %v728
    %v2617 = vunpack.c.h.b16 %v728
    %v2618 = vunpack.c.l.b16 %v729
    %v2619 = vunpack.c.h.b16 %v729
    %v2620 = vunpack.c.l.b16 %v730
    %v2621 = vunpack.c.h.b16 %v730
    %v2622 = vunpack.c.l.b16 %v731
    %v2623 = vunpack.c.h.b16 %v731
    %v2624 = vunpack.c.l.b16 %v732
    %v2625 = vunpack.c.h.b16 %v732
    %v2626 = vunpack.c.l.b16 %v733
    %v2627 = vunpack.c.h.b16 %v733
    %v2628 = vunpack.c.l.b16 %v734
    %v2629 = vunpack.c.h.b16 %v734
    %v2630 = vunpack.c.l.b16 %v735
    %v2631 = vunpack.c.h.b16 %v735
    %v2632 = vunpack.c.l.b16 %v736
    %v2633 = vunpack.c.h.b16 %v736
    %v2634 = vunpack.c.l.b16 %v737
    %v2635 = vunpack.c.h.b16 %v737
    %v2636 = vunpack.c.l.b16 %v738
    %v2637 = vunpack.c.h.b16 %v738
    %v2638 = vunpack.c.l.b16 %v739
    %v2639 = vunpack.c.h.b16 %v739
    %v2640 = vunpack.c.l.b16 %v740
    %v2641 = vunpack.c.h.b16 %v740
    %v2642 = vunpack.c.l.b16 %v741
    %v2643 = vunpack.c.h.b16 %v741
    %v2644 = vunpack.c.l.b16 %v742
    %v2645 = vunpack.c.h.b16 %v742
    %v2646 = vunpack.c.l.b16 %v743
    %v2647 = vunpack.c.h.b16 %v743
    %v2648 = vunpack.c.l.b16 %v744
    %v2649 = vunpack.c.h.b16 %v744
    %v2650 = vunpack.c.l.b16 %v745
    %v2651 = vunpack.c.h.b16 %v745
    %v2652 = vunpack.c.l.b16 %v746
    %v2653 = vunpack.c.h.b16 %v746
    %v2654 = vunpack.c.l.b16 %v747
    %v2655 = vunpack.c.h.b16 %v747
    %v2656 = vunpack.c.l.b16 %v748
    %v2657 = vunpack.c.h.b16 %v748
    %v2658 = vunpack.c.l.b16 %v749
    %v2659 = vunpack.c.h.b16 %v749
    %v2660 = vunpack.c.l.b16 %v750
    %v2661 = vunpack.c.h.b16 %v750
    %v2662 = vunpack.c.l.b16 %v751
    %v2663 = vunpack.c.h.b16 %v751
    %v2664 = vunpack.c.l.b16 %v752
    %v2665 = vunpack.c.h.b16 %v752
    %v2666 = vunpack.c.l.b16 %v753
    %v2667 = vunpack.c.h.b16 %v753
    %v2668 = vunpack.c.l.b16 %v754
    %v2669 = vunpack.c.h.b16 %v754
    %v2670 = vunpack.c.l.b16 %v755
    %v2671 = vunpack.c.h.b16 %v755
    %v2672 = vunpack.c.l.b16 %v756
    %v2673 = vunpack.c.h.b16 %v756
    %v2674 = vunpack.c.l.b16 %v757
    %v2675 = vunpack.c.h.b16 %v757
    %v2676 = vunpack.c.l.b16 %v758
    %v2677 = vunpack.c.h.b16 %v758
    %v2678 = vunpack.c.l.b16 %v759
    %v2679 = vunpack.c.h.b16 %v759
    %v2680 = vunpack.c.l.b16 %v760
    %v2681 = vunpack.c.h.b16 %v760
    %v2682 = vunpack.c.l.b16 %v761
    %v2683 = vunpack.c.h.b16 %v761
    %v2684 = vunpack.c.l.b16 %v762
    %v2685 = vunpack.c.h.b16 %v762
    %v2686 = vunpack.c.l.b16 %v763
    %v2687 = vunpack.c.h.b16 %v763
    %v2688 = vunpack.c.l.b16 %v764
    %v2689 = vunpack.c.h.b16 %v764
    %v2690 = vunpack.c.l.b16 %v765
    %v2691 = vunpack.c.h.b16 %v765
    %v2692 = vunpack.c.l.b16 %v766
    %v2693 = vunpack.c.h.b16 %v766
    %v2694 = vunpack.c.l.b16 %v767
    %v2695 = vunpack.c.h.b16 %v767
    %v2696 = vunpack.c.l.b16 %v768
    %v2697 = vunpack.c.h.b16 %v768
    %v2698 = vunpack.c.l.b16 %v769
    %v2699 = vunpack.c.h.b16 %v769
    %v2700 = vunpack.c.l.b16 %v770
    %v2701 = vunpack.c.h.b16 %v770
    %v2702 = vunpack.c.l.b16 %v771
    %v2703 = vunpack.c.h.b16 %v771
    %v2704 = vunpack.c.l.b16 %v772
    %v2705 = vunpack.c.h.b16 %v772
    %v2706 = vunpack.c.l.b16 %v773
    %v2707 = vunpack.c.h.b16 %v773
    %v2708 = vunpack.c.l.b16 %v774
    %v2709 = vunpack.c.h.b16 %v774
    %v2710 = vunpack.c.l.b16 %v775
    %v2711 = vunpack.c.h.b16 %v775
    %v2712 = vunpack.c.l.b16 %v776
    %v2713 = vunpack.c.h.b16 %v776
    %v2714 = vunpack.c.l.b16 %v777
    %v2715 = vunpack.c.h.b16 %v777
    %v2716 = vunpack.c.l.b16 %v778
    %v2717 = vunpack.c.h.b16 %v778
    %v2718 = vunpack.c.l.b16 %v779
    %v2719 = vunpack.c.h.b16 %v779
    %v2720 = vunpack.c.l.b16 %v780
    %v2721 = vunpack.c.h.b16 %v780
    %v2722 = vunpack.c.l.b16 %v781
    %v2723 = vunpack.c.h.b16 %v781
    %v2724 = vunpack.c.l.b16 %v782
    %v2725 = vunpack.c.h.b16 %v782
    %v2726 = vunpack.c.l.b16 %v783
    %v2727 = vunpack.c.h.b16 %v783
    %v2728 = vunpack.c.l.b16 %v784
    %v2729 = vunpack.c.h.b16 %v784
    %v2730 = vunpack.c.l.b16 %v785
    %v2731 = vunpack.c.h.b16 %v785
    %v2732 = vunpack.c.l.b16 %v786
    %v2733 = vunpack.c.h.b16 %v786
    %v2734 = vunpack.c.l.b16 %v787
    %v2735 = vunpack.c.h.b16 %v787
    %v2736 = vunpack.c.l.b16 %v788
    %v2737 = vunpack.c.h.b16 %v788
    %v2738 = vunpack.c.l.b16 %v789
    %v2739 = vunpack.c.h.b16 %v789
    %v2740 = vunpack.c.l.b16 %v790
    %v2741 = vunpack.c.h.b16 %v790
    %v2742 = vunpack.c.l.b16 %v791
    %v2743 = vunpack.c.h.b16 %v791
    %v2744 = vunpack.c.l.b16 %v792
    %v2745 = vunpack.c.h.b16 %v792
    %v2746 = vunpack.c.l.b16 %v793
    %v2747 = vunpack.c.h.b16 %v793
    %v2748 = vunpack.c.l.b16 %v794
    %v2749 = vunpack.c.h.b16 %v794
    %v2750 = vunpack.c.l.b16 %v795
    %v2751 = vunpack.c.h.b16 %v795
    %v2752 = vunpack.c.l.b16 %v796
    %v2753 = vunpack.c.h.b16 %v796
    %v2754 = vunpack.c.l.b16 %v797
    %v2755 = vunpack.c.h.b16 %v797
    %v2756 = vunpack.c.l.b16 %v798
    %v2757 = vunpack.c.h.b16 %v798
    %v2758 = vunpack.c.l.b16 %v799
    %v2759 = vunpack.c.h.b16 %v799
    %v2760 = vunpack.c.l.b16 %v800
    %v2761 = vunpack.c.h.b16 %v800
    %v2762 = vunpack.c.l.b16 %v801
    %v2763 = vunpack.c.h.b16 %v801
    %v2764 = vunpack.c.l.b16 %v802
    %v2765 = vunpack.c.h.b16 %v802
    %v2766 = vunpack.c.l.b16 %v803
    %v2767 = vunpack.c.h.b16 %v803
    %v2768 = vunpack.c.l.b16 %v804
    %v2769 = vunpack.c.h.b16 %v804
    %v2770 = vunpack.c.l.b16 %v805
    %v2771 = vunpack.c.h.b16 %v805
    %v2772 = vunpack.c.l.b16 %v806
    %v2773 = vunpack.c.h.b16 %v806
    %v2774 = vunpack.c.l.b16 %v807
    %v2775 = vunpack.c.h.b16 %v807
    %v2776 = vunpack.c.l.b16 %v808
    %v2777 = vunpack.c.h.b16 %v808
    %v2778 = vunpack.c.l.b16 %v809
    %v2779 = vunpack.c.h.b16 %v809
    %v2780 = vunpack.c.l.b16 %v810
    %v2781 = vunpack.c.h.b16 %v810
    %v2782 = vunpack.c.l.b16 %v811
    %v2783 = vunpack.c.h.b16 %v811
    %v2784 = vunpack.c.l.b16 %v812
    %v2785 = vunpack.c.h.b16 %v812
    %v2786 = vunpack.c.l.b16 %v813
    %v2787 = vunpack.c.h.b16 %v813
    %v2788 = vunpack.c.l.b16 %v814
    %v2789 = vunpack.c.h.b16 %v814
    %v2790 = vunpack.c.l.b16 %v815
    %v2791 = vunpack.c.h.b16 %v815
    %v2792 = vunpack.c.l.b16 %v816
    %v2793 = vunpack.c.h.b16 %v816
    %v2794 = vunpack.c.l.b16 %v817
    %v2795 = vunpack.c.h.b16 %v817
    %v2796 = vunpack.c.l.b16 %v818
    %v2797 = vunpack.c.h.b16 %v818
    %v2798 = vunpack.c.l.b16 %v819
    %v2799 = vunpack.c.h.b16 %v819
    %v2800 = vunpack.c.l.b16 %v820
    %v2801 = vunpack.c.h.b16 %v820
    %v2802 = vunpack.c.l.b16 %v821
    %v2803 = vunpack.c.h.b16 %v821
    %v2804 = vunpack.c.l.b16 %v822
    %v2805 = vunpack.c.h.b16 %v822
    %v2806 = vunpack.c.l.b16 %v823
    %v2807 = vunpack.c.h.b16 %v823
    %v2808 = vunpack.c.l.b16 %v824
    %v2809 = vunpack.c.h.b16 %v824
    %v2810 = vunpack.c.l.b16 %v825
    %v2811 = vunpack.c.h.b16 %v825
    %v2812 = vunpack.c.l.b16 %v826
    %v2813 = vunpack.c.h.b16 %v826
    %v2814 = vunpack.c.l.b16 %v827
    %v2815 = vunpack.c.h.b16 %v827
    %v2816 = vunpack.c.l.b16 %v828
    %v2817 = vunpack.c.h.b16 %v828
    %v2818 = vunpack.c.l.b16 %v829
    %v2819 = vunpack.c.h.b16 %v829
    %v2820 = vunpack.c.l.b16 %v830
    %v2821 = vunpack.c.h.b16 %v830
    %v2822 = vunpack.c.l.b16 %v831
    %v2823 = vunpack.c.h.b16 %v831
    %v2824 = vunpack.c.l.b16 %v832
    %v2825 = vunpack.c.h.b16 %v832
    %v2826 = vunpack.c.l.b16 %v833
    %v2827 = vunpack.c.h.b16 %v833
    %v2828 = vunpack.c.l.b16 %v834
    %v2829 = vunpack.c.h.b16 %v834
    %v2830 = vunpack.c.l.b16 %v835
    %v2831 = vunpack.c.h.b16 %v835
    %v2832 = vunpack.c.l.b16 %v836
    %v2833 = vunpack.c.h.b16 %v836
    %v2834 = vunpack.c.l.b16 %v837
    %v2835 = vunpack.c.h.b16 %v837
    %v2836 = vunpack.c.l.b16 %v838
    %v2837 = vunpack.c.h.b16 %v838
    %v2838 = vunpack.c.l.b16 %v839
    %v2839 = vunpack.c.h.b16 %v839
    %v2840 = vunpack.c.l.b16 %v840
    %v2841 = vunpack.c.h.b16 %v840
    %v2842 = vunpack.c.l.b16 %v841
    %v2843 = vunpack.c.h.b16 %v841
    %v2844 = vunpack.c.l.b16 %v842
    %v2845 = vunpack.c.h.b16 %v842
    %v2846 = vunpack.c.l.b16 %v843
    %v2847 = vunpack.c.h.b16 %v843
    %v2848 = vunpack.c.l.b16 %v844
    %v2849 = vunpack.c.h.b16 %v844
    %v2850 = vunpack.c.l.b16 %v845
    %v2851 = vunpack.c.h.b16 %v845
    %v2852 = vunpack.c.l.b16 %v846
    %v2853 = vunpack.c.h.b16 %v846
    %v2854 = vunpack.c.l.b16 %v847
    %v2855 = vunpack.c.h.b16 %v847
    %v2856 = vunpack.c.l.b16 %v848
    %v2857 = vunpack.c.h.b16 %v848
    %v2858 = vunpack.c.l.b16 %v849
    %v2859 = vunpack.c.h.b16 %v849
    %v2860 = vunpack.c.l.b16 %v850
    %v2861 = vunpack.c.h.b16 %v850
    %v2862 = vunpack.c.l.b16 %v851
    %v2863 = vunpack.c.h.b16 %v851
    %v2864 = vunpack.c.l.b16 %v852
    %v2865 = vunpack.c.h.b16 %v852
    %v2866 = vunpack.c.l.b16 %v853
    %v2867 = vunpack.c.h.b16 %v853
    %v2868 = vunpack.c.l.b16 %v854
    %v2869 = vunpack.c.h.b16 %v854
    %v2870 = vunpack.c.l.b16 %v855
    %v2871 = vunpack.c.h.b16 %v855
    %v2872 = vunpack.c.l.b16 %v856
    %v2873 = vunpack.c.h.b16 %v856
    %v2874 = vunpack.c.l.b16 %v857
    %v2875 = vunpack.c.h.b16 %v857
    %v2876 = vunpack.c.l.b16 %v858
    %v2877 = vunpack.c.h.b16 %v858
    %v2878 = vunpack.c.l.b16 %v859
    %v2879 = vunpack.c.h.b16 %v859
    %v2880 = vunpack.c.l.b16 %v860
    %v2881 = vunpack.c.h.b16 %v860
    %v2882 = vunpack.c.l.b16 %v861
    %v2883 = vunpack.c.h.b16 %v861
    %v2884 = vunpack.c.l.b16 %v862
    %v2885 = vunpack.c.h.b16 %v862
    %v2886 = vunpack.c.l.b16 %v863
    %v2887 = vunpack.c.h.b16 %v863
    %v2888 = vunpack.c.l.b16 %v864
    %v2889 = vunpack.c.h.b16 %v864
    %v2890 = vunpack.c.l.b16 %v865
    %v2891 = vunpack.c.h.b16 %v865
    %v2892 = vunpack.c.l.b16 %v866
    %v2893 = vunpack.c.h.b16 %v866
    %v2894 = vunpack.c.l.b16 %v867
    %v2895 = vunpack.c.h.b16 %v867
    %v2896 = vunpack.c.l.b16 %v868
    %v2897 = vunpack.c.h.b16 %v868
    %v2898 = vunpack.c.l.b16 %v869
    %v2899 = vunpack.c.h.b16 %v869
    %v2900 = vunpack.c.l.b16 %v870
    %v2901 = vunpack.c.h.b16 %v870
    %v2902 = vunpack.c.l.b16 %v871
    %v2903 = vunpack.c.h.b16 %v871
    %v2904 = vunpack.c.l.b16 %v872
    %v2905 = vunpack.c.h.b16 %v872
    %v2906 = vunpack.c.l.b16 %v873
    %v2907 = vunpack.c.h.b16 %v873
    %v2908 = vunpack.c.l.b16 %v874
    %v2909 = vunpack.c.h.b16 %v874
    %v2910 = vunpack.c.l.b16 %v875
    %v2911 = vunpack.c.h.b16 %v875
    %v2912 = vunpack.c.l.b16 %v876
    %v2913 = vunpack.c.h.b16 %v876
    %v2914 = vunpack.c.l.b16 %v877
    %v2915 = vunpack.c.h.b16 %v877
    %v2916 = vunpack.c.l.b16 %v878
    %v2917 = vunpack.c.h.b16 %v878
    %v2918 = vunpack.c.l.b16 %v879
    %v2919 = vunpack.c.h.b16 %v879
    %v2920 = vunpack.c.l.b16 %v880
    %v2921 = vunpack.c.h.b16 %v880
    %v2922 = vunpack.c.l.b16 %v881
    %v2923 = vunpack.c.h.b16 %v881
    %v2924 = vunpack.c.l.b16 %v882
    %v2925 = vunpack.c.h.b16 %v882
    %v2926 = vunpack.c.l.b16 %v883
    %v2927 = vunpack.c.h.b16 %v883
    %v2928 = vunpack.c.l.b16 %v884
    %v2929 = vunpack.c.h.b16 %v884
    %v2930 = vunpack.c.l.b16 %v885
    %v2931 = vunpack.c.h.b16 %v885
    %v2932 = vunpack.c.l.b16 %v886
    %v2933 = vunpack.c.h.b16 %v886
    %v2934 = vunpack.c.l.b16 %v887
    %v2935 = vunpack.c.h.b16 %v887
    %v2936 = vunpack.c.l.b16 %v888
    %v2937 = vunpack.c.h.b16 %v888
    %v2938 = vunpack.c.l.b16 %v889
    %v2939 = vunpack.c.h.b16 %v889
    %v2940 = vunpack.c.l.b16 %v890
    %v2941 = vunpack.c.h.b16 %v890
    %v2942 = vunpack.c.l.b16 %v891
    %v2943 = vunpack.c.h.b16 %v891
    %v2944 = vunpack.c.l.b16 %v892
    %v2945 = vunpack.c.h.b16 %v892
    %v2946 = vunpack.c.l.b16 %v893
    %v2947 = vunpack.c.h.b16 %v893
    %v2948 = vunpack.c.l.b16 %v894
    %v2949 = vunpack.c.h.b16 %v894
    %v2950 = vunpack.c.l.b16 %v895
    %v2951 = vunpack.c.h.b16 %v895
    %v2952 = vunpack.c.l.b16 %v896
    %v2953 = vunpack.c.h.b16 %v896
    %v2954 = vunpack.c.l.b16 %v897
    %v2955 = vunpack.c.h.b16 %v897
    %v2956 = vunpack.c.l.b16 %v898
    %v2957 = vunpack.c.h.b16 %v898
    %v2958 = vunpack.c.l.b16 %v899
    %v2959 = vunpack.c.h.b16 %v899
    %v2960 = vunpack.c.l.b16 %v900
    %v2961 = vunpack.c.h.b16 %v900
    %v2962 = vunpack.c.l.b16 %v901
    %v2963 = vunpack.c.h.b16 %v901
    %v2964 = vunpack.c.l.b16 %v902
    %v2965 = vunpack.c.h.b16 %v902
    %v2966 = vunpack.c.l.b16 %v903
    %v2967 = vunpack.c.h.b16 %v903
    %v2968 = vunpack.c.l.b16 %v904
    %v2969 = vunpack.c.h.b16 %v904
    %v2970 = vunpack.c.l.b16 %v905
    %v2971 = vunpack.c.h.b16 %v905
    %v2972 = vunpack.c.l.b16 %v906
    %v2973 = vunpack.c.h.b16 %v906
    %v2974 = vunpack.c.l.b16 %v907
    %v2975 = vunpack.c.h.b16 %v907
    %v2976 = vunpack.c.l.b16 %v908
    %v2977 = vunpack.c.h.b16 %v908
    %v2978 = vunpack.c.l.b16 %v909
    %v2979 = vunpack.c.h.b16 %v909
    %v2980 = vunpack.c.l.b16 %v910
    %v2981 = vunpack.c.h.b16 %v910
    %v2982 = vunpack.c.l.b16 %v911
    %v2983 = vunpack.c.h.b16 %v911
    %v2984 = vunpack.c.l.b16 %v912
    %v2985 = vunpack.c.h.b16 %v912
    %v2986 = vunpack.c.l.b16 %v913
    %v2987 = vunpack.c.h.b16 %v913
    %v2988 = vunpack.c.l.b16 %v914
    %v2989 = vunpack.c.h.b16 %v914
    %v2990 = vunpack.c.l.b16 %v915
    %v2991 = vunpack.c.h.b16 %v915
    %v2992 = vunpack.c.l.b16 %v916
    %v2993 = vunpack.c.h.b16 %v916
    %v2994 = vunpack.c.l.b16 %v917
    %v2995 = vunpack.c.h.b16 %v917
    %v2996 = vunpack.c.l.b16 %v918
    %v2997 = vunpack.c.h.b16 %v918
    %v2998 = vunpack.c.l.b16 %v919
    %v2999 = vunpack.c.h.b16 %v919
    %v3000 = vunpack.c.l.b16 %v920
    %v3001 = vunpack.c.h.b16 %v920
    %v3002 = vunpack.c.l.b16 %v921
    %v3003 = vunpack.c.h.b16 %v921
    %v3004 = vunpack.c.l.b16 %v922
    %v3005 = vunpack.c.h.b16 %v922
    %v3006 = vunpack.c.l.b16 %v923
    %v3007 = vunpack.c.h.b16 %v923
    %v3008 = vunpack.c.l.b16 %v924
    %v3009 = vunpack.c.h.b16 %v924
    %v3010 = vunpack.c.l.b16 %v925
    %v3011 = vunpack.c.h.b16 %v925
    %v3012 = vunpack.c.l.b16 %v926
    %v3013 = vunpack.c.h.b16 %v926
    %v3014 = vunpack.c.l.b16 %v927
    %v3015 = vunpack.c.h.b16 %v927
    %v3016 = vunpack.c.l.b16 %v928
    %v3017 = vunpack.c.h.b16 %v928
    %v3018 = vunpack.c.l.b16 %v929
    %v3019 = vunpack.c.h.b16 %v929
    %v3020 = vunpack.c.l.b16 %v930
    %v3021 = vunpack.c.h.b16 %v930
    %v3022 = vunpack.c.l.b16 %v931
    %v3023 = vunpack.c.h.b16 %v931
    %v3024 = vunpack.c.l.b16 %v932
    %v3025 = vunpack.c.h.b16 %v932
    %v3026 = vunpack.c.l.b16 %v933
    %v3027 = vunpack.c.h.b16 %v933
    %v3028 = vunpack.c.l.b16 %v934
    %v3029 = vunpack.c.h.b16 %v934
    %v3030 = vunpack.c.l.b16 %v935
    %v3031 = vunpack.c.h.b16 %v935
    %v3032 = vunpack.c.l.b16 %v936
    %v3033 = vunpack.c.h.b16 %v936
    %v3034 = vunpack.c.l.b16 %v937
    %v3035 = vunpack.c.h.b16 %v937
    %v3036 = vunpack.c.l.b16 %v938
    %v3037 = vunpack.c.h.b16 %v938
    %v3038 = vunpack.c.l.b16 %v939
    %v3039 = vunpack.c.h.b16 %v939
    %v3040 = vunpack.c.l.b16 %v940
    %v3041 = vunpack.c.h.b16 %v940
    %v3042 = vunpack.c.l.b16 %v941
    %v3043 = vunpack.c.h.b16 %v941
    %v3044 = vunpack.c.l.b16 %v942
    %v3045 = vunpack.c.h.b16 %v942
    %v3046 = vunpack.c.l.b16 %v943
    %v3047 = vunpack.c.h.b16 %v943
    %v3048 = vunpack.c.l.b16 %v944
    %v3049 = vunpack.c.h.b16 %v944
    %v3050 = vunpack.c.l.b16 %v945
    %v3051 = vunpack.c.h.b16 %v945
    %v3052 = vunpack.c.l.b16 %v946
    %v3053 = vunpack.c.h.b16 %v946
    %v3054 = vunpack.c.l.b16 %v947
    %v3055 = vunpack.c.h.b16 %v947
    %v3056 = vunpack.c.l.b16 %v948
    %v3057 = vunpack.c.h.b16 %v948
    %v3058 = vunpack.c.l.b16 %v949
    %v3059 = vunpack.c.h.b16 %v949
    %v3060 = vunpack.c.l.b16 %v950
    %v3061 = vunpack.c.h.b16 %v950
    %v3062 = vunpack.c.l.b16 %v951
    %v3063 = vunpack.c.h.b16 %v951
    %v3064 = vunpack.c.l.b16 %v952
    %v3065 = vunpack.c.h.b16 %v952
    %v3066 = vunpack.c.l.b16 %v953
    %v3067 = vunpack.c.h.b16 %v953
    %v3068 = vunpack.c.l.b16 %v954
    %v3069 = vunpack.c.h.b16 %v954
    %v3070 = vunpack.c.l.b16 %v955
    %v3071 = vunpack.c.h.b16 %v955
    %v3072 = vunpack.c.l.b16 %v956
    %v3073 = vunpack.c.h.b16 %v956
    %v3074 = vunpack.c.l.b16 %v957
    %v3075 = vunpack.c.h.b16 %v957
    %v3076 = vunpack.c.l.b16 %v958
    %v3077 = vunpack.c.h.b16 %v958
    %v3078 = vunpack.c.l.b16 %v959
    %v3079 = vunpack.c.h.b16 %v959
    %v3080 = vunpack.c.l.b16 %v960
    %v3081 = vunpack.c.h.b16 %v960
    %v3082 = vunpack.c.l.b16 %v961
    %v3083 = vunpack.c.h.b16 %v961
    %v3084 = vunpack.c.l.b16 %v962
    %v3085 = vunpack.c.h.b16 %v962
    %v3086 = vunpack.c.l.b16 %v963
    %v3087 = vunpack.c.h.b16 %v963
    %v3088 = vunpack.c.l.b16 %v964
    %v3089 = vunpack.c.h.b16 %v964
    %v3090 = vunpack.c.l.b16 %v965
    %v3091 = vunpack.c.h.b16 %v965
    %v3092 = vunpack.c.l.b16 %v966
    %v3093 = vunpack.c.h.b16 %v966
    %v3094 = vunpack.c.l.b16 %v967
    %v3095 = vunpack.c.h.b16 %v967
    %v3096 = vunpack.c.l.b16 %v968
    %v3097 = vunpack.c.h.b16 %v968
    %v3098 = vunpack.c.l.b16 %v969
    %v3099 = vunpack.c.h.b16 %v969
    %v3100 = vunpack.c.l.b16 %v970
    %v3101 = vunpack.c.h.b16 %v970
    %v3102 = vunpack.c.l.b16 %v971
    %v3103 = vunpack.c.h.b16 %v971
    %v3104 = vunpack.c.l.b16 %v972
    %v3105 = vunpack.c.h.b16 %v972
    %v3106 = vunpack.c.l.b16 %v973
    %v3107 = vunpack.c.h.b16 %v973
    %v3108 = vunpack.c.l.b16 %v974
    %v3109 = vunpack.c.h.b16 %v974
    %v3110 = vunpack.c.l.b16 %v975
    %v3111 = vunpack.c.h.b16 %v975
    %v3112 = vunpack.c.l.b16 %v976
    %v3113 = vunpack.c.h.b16 %v976
    %v3114 = vunpack.c.l.b16 %v977
    %v3115 = vunpack.c.h.b16 %v977
    %v3116 = vunpack.c.l.b16 %v978
    %v3117 = vunpack.c.h.b16 %v978
    %v3118 = vunpack.c.l.b16 %v979
    %v3119 = vunpack.c.h.b16 %v979
    %v3120 = vunpack.c.l.b16 %v980
    %v3121 = vunpack.c.h.b16 %v980
    %v3122 = vunpack.c.l.b16 %v981
    %v3123 = vunpack.c.h.b16 %v981
    %v3124 = vunpack.c.l.b16 %v982
    %v3125 = vunpack.c.h.b16 %v982
    %v3126 = vunpack.c.l.b16 %v983
    %v3127 = vunpack.c.h.b16 %v983
    %v3128 = vunpack.c.l.b16 %v984
    %v3129 = vunpack.c.h.b16 %v984
    %v3130 = vunpack.c.l.b16 %v985
    %v3131 = vunpack.c.h.b16 %v985
    %v3132 = vunpack.c.l.b16 %v986
    %v3133 = vunpack.c.h.b16 %v986
    %v3134 = vunpack.c.l.b16 %v987
    %v3135 = vunpack.c.h.b16 %v987
    %v3136 = vunpack.c.l.b16 %v988
    %v3137 = vunpack.c.h.b16 %v988
    %v3138 = vunpack.c.l.b16 %v989
    %v3139 = vunpack.c.h.b16 %v989
    %v3140 = vunpack.c.l.b16 %v990
    %v3141 = vunpack.c.h.b16 %v990
    %v3142 = vunpack.c.l.b16 %v991
    %v3143 = vunpack.c.h.b16 %v991
    %v3144 = vunpack.c.l.b16 %v992
    %v3145 = vunpack.c.h.b16 %v992
    %v3146 = vunpack.c.l.b16 %v993
    %v3147 = vunpack.c.h.b16 %v993
    %v3148 = vunpack.c.l.b16 %v994
    %v3149 = vunpack.c.h.b16 %v994
    %v3150 = vunpack.c.l.b16 %v995
    %v3151 = vunpack.c.h.b16 %v995
    %v3152 = vunpack.c.l.b16 %v996
    %v3153 = vunpack.c.h.b16 %v996
    %v3154 = vunpack.c.l.b16 %v997
    %v3155 = vunpack.c.h.b16 %v997
    %v3156 = vunpack.c.l.b16 %v998
    %v3157 = vunpack.c.h.b16 %v998
    %v3158 = vunpack.c.l.b16 %v999
    %v3159 = vunpack.c.h.b16 %v999
    %v3160 = vunpack.c.l.b16 %v1000
    %v3161 = vunpack.c.h.b16 %v1000
    %v3162 = vunpack.c.l.b16 %v1001
    %v3163 = vunpack.c.h.b16 %v1001
    %v3164 = vunpack.c.l.b16 %v1002
    %v3165 = vunpack.c.h.b16 %v1002
    %v3166 = vunpack.c.l.b16 %v1003
    %v3167 = vunpack.c.h.b16 %v1003
    %v3168 = vunpack.c.l.b16 %v1004
    %v3169 = vunpack.c.h.b16 %v1004
    %v3170 = vunpack.c.l.b16 %v1005
    %v3171 = vunpack.c.h.b16 %v1005
    %v3172 = vunpack.c.l.b16 %v1006
    %v3173 = vunpack.c.h.b16 %v1006
    %v3174 = vunpack.c.l.b16 %v1007
    %v3175 = vunpack.c.h.b16 %v1007
    %v3176 = vunpack.c.l.b16 %v1008
    %v3177 = vunpack.c.h.b16 %v1008
    %v3178 = vunpack.c.l.b16 %v1009
    %v3179 = vunpack.c.h.b16 %v1009
    %v3180 = vunpack.c.l.b16 %v1010
    %v3181 = vunpack.c.h.b16 %v1010
    %v3182 = vunpack.c.l.b16 %v1011
    %v3183 = vunpack.c.h.b16 %v1011
    %v3184 = vunpack.c.l.b16 %v1012
    %v3185 = vunpack.c.h.b16 %v1012
    %v3186 = vunpack.c.l.b16 %v1013
    %v3187 = vunpack.c.h.b16 %v1013
    %v3188 = vunpack.c.l.b16 %v1014
    %v3189 = vunpack.c.h.b16 %v1014
    %v3190 = vunpack.c.l.b16 %v1015
    %v3191 = vunpack.c.h.b16 %v1015
    %v3192 = vunpack.c.l.b16 %v1016
    %v3193 = vunpack.c.h.b16 %v1016
    %v3194 = vunpack.c.l.b16 %v1017
    %v3195 = vunpack.c.h.b16 %v1017
    %v3196 = vunpack.c.l.b16 %v1018
    %v3197 = vunpack.c.h.b16 %v1018
    %v3198 = vunpack.c.l.b16 %v1019
    %v3199 = vunpack.c.h.b16 %v1019
    %v3200 = vunpack.c.l.b16 %v1020
    %v3201 = vunpack.c.h.b16 %v1020
    %v3202 = vunpack.c.l.b16 %v1021
    %v3203 = vunpack.c.h.b16 %v1021
    %v3204 = vunpack.c.l.b16 %v1022
    %v3205 = vunpack.c.h.b16 %v1022
    %v3206 = vunpack.c.l.b16 %v1023
    %v3207 = vunpack.c.h.b16 %v1023
    %v3208 = vunpack.c.l.b16 %v1024
    %v3209 = vunpack.c.h.b16 %v1024
    %v3210 = vunpack.c.l.b16 %v1025
    %v3211 = vunpack.c.h.b16 %v1025
    %v3212 = vunpack.c.l.b16 %v1026
    %v3213 = vunpack.c.h.b16 %v1026
    %v3214 = vunpack.c.l.b16 %v1027
    %v3215 = vunpack.c.h.b16 %v1027
    %v3216 = vunpack.c.l.b16 %v1028
    %v3217 = vunpack.c.h.b16 %v1028
    %v3218 = vunpack.c.l.b16 %v1029
    %v3219 = vunpack.c.h.b16 %v1029
    %v3220 = vunpack.c.l.b16 %v1030
    %v3221 = vunpack.c.h.b16 %v1030
    %v3222 = vunpack.c.l.b16 %v1031
    %v3223 = vunpack.c.h.b16 %v1031
    %v3224 = vunpack.c.l.b16 %v1032
    %v3225 = vunpack.c.h.b16 %v1032
    %v3226 = vunpack.c.l.b16 %v1033
    %v3227 = vunpack.c.h.b16 %v1033
    %v3228 = vunpack.c.l.b16 %v1034
    %v3229 = vunpack.c.h.b16 %v1034
    %v3230 = vunpack.c.l.b16 %v1035
    %v3231 = vunpack.c.h.b16 %v1035
    %v3232 = vunpack.c.l.b16 %v1036
    %v3233 = vunpack.c.h.b16 %v1036
    %v3234 = vunpack.c.l.b16 %v1037
    %v3235 = vunpack.c.h.b16 %v1037
    %v3236 = vunpack.c.l.b16 %v1038
    %v3237 = vunpack.c.h.b16 %v1038
    %v3238 = vunpack.c.l.b16 %v1039
    %v3239 = vunpack.c.h.b16 %v1039
    %v3240 = vunpack.c.l.b16 %v1040
    %v3241 = vunpack.c.h.b16 %v1040
    %v3242 = vunpack.c.l.b16 %v1041
    %v3243 = vunpack.c.h.b16 %v1041
    %v3244 = vunpack.c.l.b16 %v1042
    %v3245 = vunpack.c.h.b16 %v1042
    %v3246 = vunpack.c.l.b16 %v1043
    %v3247 = vunpack.c.h.b16 %v1043
    %v3248 = vunpack.c.l.b16 %v1044
    %v3249 = vunpack.c.h.b16 %v1044
    %v3250 = vunpack.c.l.b16 %v1045
    %v3251 = vunpack.c.h.b16 %v1045
    %v3252 = vunpack.c.l.b16 %v1046
    %v3253 = vunpack.c.h.b16 %v1046
    %v3254 = vunpack.c.l.b16 %v1047
    %v3255 = vunpack.c.h.b16 %v1047
    %v3256 = vunpack.c.l.b16 %v1048
    %v3257 = vunpack.c.h.b16 %v1048
    %v3258 = vunpack.c.l.b16 %v1049
    %v3259 = vunpack.c.h.b16 %v1049
    %v3260 = vunpack.c.l.b16 %v1050
    %v3261 = vunpack.c.h.b16 %v1050
    %v3262 = vunpack.c.l.b16 %v1051
    %v3263 = vunpack.c.h.b16 %v1051
    %v3264 = vunpack.c.l.b16 %v1052
    %v3265 = vunpack.c.h.b16 %v1052
    %v3266 = vunpack.c.l.b16 %v1053
    %v3267 = vunpack.c.h.b16 %v1053
    %v3268 = vunpack.c.l.b16 %v1054
    %v3269 = vunpack.c.h.b16 %v1054
    %v3270 = vunpack.c.l.b16 %v1055
    %v3271 = vunpack.c.h.b16 %v1055
    %v3272 = vunpack.c.l.b16 %v1056
    %v3273 = vunpack.c.h.b16 %v1056
    %v3274 = vunpack.c.l.b16 %v1057
    %v3275 = vunpack.c.h.b16 %v1057
    %v3276 = vunpack.c.l.b16 %v1058
    %v3277 = vunpack.c.h.b16 %v1058
    %v3278 = vunpack.c.l.b16 %v1059
    %v3279 = vunpack.c.h.b16 %v1059
    %v3280 = vunpack.c.l.b16 %v1060
    %v3281 = vunpack.c.h.b16 %v1060
    %v3282 = vunpack.c.l.b16 %v1061
    %v3283 = vunpack.c.h.b16 %v1061
    %v3284 = vunpack.c.l.b16 %v1062
    %v3285 = vunpack.c.h.b16 %v1062
    %v3286 = vunpack.c.l.b16 %v1063
    %v3287 = vunpack.c.h.b16 %v1063
    %v3288 = vunpack.c.l.b16 %v1064
    %v3289 = vunpack.c.h.b16 %v1064
    %v3290 = vunpack.c.l.b16 %v1065
    %v3291 = vunpack.c.h.b16 %v1065
    %v3292 = vunpack.c.l.b16 %v1066
    %v3293 = vunpack.c.h.b16 %v1066
    %v3294 = vunpack.c.l.b16 %v1067
    %v3295 = vunpack.c.h.b16 %v1067
    %v3296 = vunpack.c.l.b16 %v1068
    %v3297 = vunpack.c.h.b16 %v1068
    %v3298 = vunpack.c.l.b16 %v1069
    %v3299 = vunpack.c.h.b16 %v1069
    %v3300 = vunpack.c.l.b16 %v1070
    %v3301 = vunpack.c.h.b16 %v1070
    %v3302 = vunpack.c.l.b16 %v1071
    %v3303 = vunpack.c.h.b16 %v1071
    %v3304 = vunpack.c.l.b16 %v1072
    %v3305 = vunpack.c.h.b16 %v1072
    %v3306 = vunpack.c.l.b16 %v1073
    %v3307 = vunpack.c.h.b16 %v1073
    %v3308 = vunpack.c.l.b16 %v1074
    %v3309 = vunpack.c.h.b16 %v1074
    %v3310 = vunpack.c.l.b16 %v1075
    %v3311 = vunpack.c.h.b16 %v1075
    %v3312 = vunpack.c.l.b16 %v1076
    %v3313 = vunpack.c.h.b16 %v1076
    %v3314 = vunpack.c.l.b16 %v1077
    %v3315 = vunpack.c.h.b16 %v1077
    %v3316 = vunpack.c.l.b16 %v1078
    %v3317 = vunpack.c.h.b16 %v1078
    %v3318 = vunpack.c.l.b16 %v1079
    %v3319 = vunpack.c.h.b16 %v1079
    %v3320 = vunpack.c.l.b16 %v1080
    %v3321 = vunpack.c.h.b16 %v1080
    %v3322 = vunpack.c.l.b16 %v1081
    %v3323 = vunpack.c.h.b16 %v1081
    %v3324 = vunpack.c.l.b16 %v1082
    %v3325 = vunpack.c.h.b16 %v1082
    %v3326 = vunpack.c.l.b16 %v1083
    %v3327 = vunpack.c.h.b16 %v1083
    %v3328 = vunpack.c.l.b16 %v1084
    %v3329 = vunpack.c.h.b16 %v1084
    %v3330 = vunpack.c.l.b16 %v1085
    %v3331 = vunpack.c.h.b16 %v1085
    %v3332 = vunpack.c.l.b16 %v1086
    %v3333 = vunpack.c.h.b16 %v1086
    %v3334 = vunpack.c.l.b16 %v1087
    %v3335 = vunpack.c.h.b16 %v1087
    %v3336 = vunpack.c.l.b16 %v1088
    %v3337 = vunpack.c.h.b16 %v1088
    %v3338 = vunpack.c.l.b16 %v1089
    %v3339 = vunpack.c.h.b16 %v1089
    %v3340 = vunpack.c.l.b16 %v1090
    %v3341 = vunpack.c.h.b16 %v1090
    %v3342 = vunpack.c.l.b16 %v1091
    %v3343 = vunpack.c.h.b16 %v1091
    %v3344 = vunpack.c.l.b16 %v1092
    %v3345 = vunpack.c.h.b16 %v1092
    %v3346 = vunpack.c.l.b16 %v1093
    %v3347 = vunpack.c.h.b16 %v1093
    %v3348 = vunpack.c.l.b16 %v1094
    %v3349 = vunpack.c.h.b16 %v1094
    %v3350 = vunpack.c.l.b16 %v1095
    %v3351 = vunpack.c.h.b16 %v1095
    %v3352 = vunpack.c.l.b16 %v1096
    %v3353 = vunpack.c.h.b16 %v1096
    %v3354 = vunpack.c.l.b16 %v1097
    %v3355 = vunpack.c.h.b16 %v1097
    %v3356 = vunpack.c.l.b16 %v1098
    %v3357 = vunpack.c.h.b16 %v1098
    %v3358 = vunpack.c.l.b16 %v1099
    %v3359 = vunpack.c.h.b16 %v1099
    %v3360 = vunpack.c.l.b16 %v1100
    %v3361 = vunpack.c.h.b16 %v1100
    %v3362 = vunpack.c.l.b16 %v1101
    %v3363 = vunpack.c.h.b16 %v1101
    %v3364 = vunpack.c.l.b16 %v1102
    %v3365 = vunpack.c.h.b16 %v1102
    %v3366 = vunpack.c.l.b16 %v1103
    %v3367 = vunpack.c.h.b16 %v1103
    %v3368 = vunpack.c.l.b16 %v1104
    %v3369 = vunpack.c.h.b16 %v1104
    %v3370 = vunpack.c.l.b16 %v1105
    %v3371 = vunpack.c.h.b16 %v1105
    %v3372 = vunpack.c.l.b16 %v1106
    %v3373 = vunpack.c.h.b16 %v1106
    %v3374 = vunpack.c.l.b16 %v1107
    %v3375 = vunpack.c.h.b16 %v1107
    %v3376 = vunpack.c.l.b16 %v1108
    %v3377 = vunpack.c.h.b16 %v1108
    %v3378 = vunpack.c.l.b16 %v1109
    %v3379 = vunpack.c.h.b16 %v1109
    %v3380 = vunpack.c.l.b16 %v1110
    %v3381 = vunpack.c.h.b16 %v1110
    %v3382 = vunpack.c.l.b16 %v1111
    %v3383 = vunpack.c.h.b16 %v1111
    %v3384 = vunpack.c.l.b16 %v1112
    %v3385 = vunpack.c.h.b16 %v1112
    %v3386 = vunpack.c.l.b16 %v1113
    %v3387 = vunpack.c.h.b16 %v1113
    %v3388 = vunpack.c.l.b16 %v1114
    %v3389 = vunpack.c.h.b16 %v1114
    %v3390 = vunpack.c.l.b16 %v1115
    %v3391 = vunpack.c.h.b16 %v1115
    %v3392 = vunpack.c.l.b16 %v1116
    %v3393 = vunpack.c.h.b16 %v1116
    %v3394 = vunpack.c.l.b16 %v1117
    %v3395 = vunpack.c.h.b16 %v1117
    %v3396 = vunpack.c.l.b16 %v1118
    %v3397 = vunpack.c.h.b16 %v1118
    %v3398 = vunpack.c.l.b16 %v1119
    %v3399 = vunpack.c.h.b16 %v1119
    %v3400 = vunpack.c.l.b16 %v1120
    %v3401 = vunpack.c.h.b16 %v1120
    %v3402 = vunpack.c.l.b16 %v1121
    %v3403 = vunpack.c.h.b16 %v1121
    %v3404 = vunpack.c.l.b16 %v1122
    %v3405 = vunpack.c.h.b16 %v1122
    %v3406 = vunpack.c.l.b16 %v1123
    %v3407 = vunpack.c.h.b16 %v1123
    %v3408 = vunpack.c.l.b16 %v1124
    %v3409 = vunpack.c.h.b16 %v1124
    %v3410 = vunpack.c.l.b16 %v1125
    %v3411 = vunpack.c.h.b16 %v1125
    %v3412 = vunpack.c.l.b16 %v1126
    %v3413 = vunpack.c.h.b16 %v1126
    %v3414 = vunpack.c.l.b16 %v1127
    %v3415 = vunpack.c.h.b16 %v1127
    %v3416 = vunpack.c.l.b16 %v1128
    %v3417 = vunpack.c.h.b16 %v1128
    %v3418 = vunpack.c.l.b16 %v1129
    %v3419 = vunpack.c.h.b16 %v1129
    %v3420 = vunpack.c.l.b16 %v1130
    %v3421 = vunpack.c.h.b16 %v1130
    %v3422 = vunpack.c.l.b16 %v1131
    %v3423 = vunpack.c.h.b16 %v1131
    %v3424 = vunpack.c.l.b16 %v1132
    %v3425 = vunpack.c.h.b16 %v1132
    %v3426 = vunpack.c.l.b16 %v1133
    %v3427 = vunpack.c.h.b16 %v1133
    %v3428 = vunpack.c.l.b16 %v1134
    %v3429 = vunpack.c.h.b16 %v1134
    %v3430 = vunpack.c.l.b16 %v1135
    %v3431 = vunpack.c.h.b16 %v1135
    %v3432 = vunpack.c.l.b16 %v1136
    %v3433 = vunpack.c.h.b16 %v1136
    %v3434 = vunpack.c.l.b16 %v1137
    %v3435 = vunpack.c.h.b16 %v1137
    %v3436 = vunpack.c.l.b16 %v1138
    %v3437 = vunpack.c.h.b16 %v1138
    %v3438 = vunpack.c.l.b16 %v1139
    %v3439 = vunpack.c.h.b16 %v1139
    %v3440 = vunpack.c.l.b16 %v1140
    %v3441 = vunpack.c.h.b16 %v1140
    %v3442 = vunpack.c.l.b16 %v1141
    %v3443 = vunpack.c.h.b16 %v1141
    %v3444 = vunpack.c.l.b16 %v1142
    %v3445 = vunpack.c.h.b16 %v1142
    %v3446 = vunpack.c.l.b16 %v1143
    %v3447 = vunpack.c.h.b16 %v1143
    %v3448 = vunpack.c.l.b16 %v1144
    %v3449 = vunpack.c.h.b16 %v1144
    %v3450 = vunpack.c.l.b16 %v1145
    %v3451 = vunpack.c.h.b16 %v1145
    %v3452 = vunpack.c.l.b16 %v1146
    %v3453 = vunpack.c.h.b16 %v1146
    %v3454 = vunpack.c.l.b16 %v1147
    %v3455 = vunpack.c.h.b16 %v1147
    %v3456 = vunpack.c.l.b16 %v1148
    %v3457 = vunpack.c.h.b16 %v1148
    %v3458 = vunpack.c.l.b16 %v1149
    %v3459 = vunpack.c.h.b16 %v1149
    %v3460 = vunpack.c.l.b16 %v1150
    %v3461 = vunpack.c.h.b16 %v1150
    %v3462 = vunpack.c.l.b16 %v1151
    %v3463 = vunpack.c.h.b16 %v1151
    %v3464 = vunpack.c.l.b16 %v1152
    %v3465 = vunpack.c.h.b16 %v1152
    %v3466 = vunpack.c.l.b16 %v1153
    %v3467 = vunpack.c.h.b16 %v1153
    %v3468 = vpack.c.b16 %v1936, %v1932
    %v3469 = vpack.c.b16 %v1937, %v1933
    %v3470 = vpack.c.b16 %v1938, %v1934
    %v3471 = vpack.c.b16 %v1939, %v1935
    %v3472 = vpack.c.b16 %v1944, %v1940
    %v3473 = vpack.c.b16 %v1945, %v1941
    %v3474 = vpack.c.b16 %v1946, %v1942
    %v3475 = vpack.c.b16 %v1947, %v1943
    %v3476 = vpack.c.b16 %v1952, %v1948
    %v3477 = vpack.c.b16 %v1953, %v1949
    %v3478 = vpack.c.b16 %v1954, %v1950
    %v3479 = vpack.c.b16 %v1955, %v1951
    %v3480 = vpack.c.b16 %v1960, %v1956
    %v3481 = vpack.c.b16 %v1961, %v1957
    %v3482 = vpack.c.b16 %v1962, %v1958
    %v3483 = vpack.c.b16 %v1963, %v1959
    %v3484 = vpack.c.b16 %v1968, %v1964
    %v3485 = vpack.c.b16 %v1969, %v1965
    %v3486 = vpack.c.b16 %v1970, %v1966
    %v3487 = vpack.c.b16 %v1971, %v1967
    %v3488 = vpack.c.b16 %v1976, %v1972
    %v3489 = vpack.c.b16 %v1977, %v1973
    %v3490 = vpack.c.b16 %v1978, %v1974
    %v3491 = vpack.c.b16 %v1979, %v1975
    %v3492 = vpack.c.b16 %v1984, %v1980
    %v3493 = vpack.c.b16 %v1985, %v1981
    %v3494 = vpack.c.b16 %v1986, %v1982
    %v3495 = vpack.c.b16 %v1987, %v1983
    %v3496 = vpack.c.b16 %v1992, %v1988
    %v3497 = vpack.c.b16 %v1993, %v1989
    %v3498 = vpack.c.b16 %v1994, %v1990
    %v3499 = vpack.c.b16 %v1995, %v1991
    %v3500 = vpack.c.b16 %v2000, %v1996
    %v3501 = vpack.c.b16 %v2001, %v1997
    %v3502 = vpack.c.b16 %v2002, %v1998
    %v3503 = vpack.c.b16 %v2003, %v1999
    %v3504 = vpack.c.b16 %v2008, %v2004
    %v3505 = vpack.c.b16 %v2009, %v2005
    %v3506 = vpack.c.b16 %v2010, %v2006
    %v3507 = vpack.c.b16 %v2011, %v2007
    %v3508 = vpack.c.b16 %v2016, %v2012
    %v3509 = vpack.c.b16 %v2017, %v2013
    %v3510 = vpack.c.b16 %v2018, %v2014
    %v3511 = vpack.c.b16 %v2019, %v2015
    %v3512 = vpack.c.b16 %v2024, %v2020
    %v3513 = vpack.c.b16 %v2025, %v2021
    %v3514 = vpack.c.b16 %v2026, %v2022
    %v3515 = vpack.c.b16 %v2027, %v2023
    %v3516 = vpack.c.b16 %v2032, %v2028
    %v3517 = vpack.c.b16 %v2033, %v2029
    %v3518 = vpack.c.b16 %v2034, %v2030
    %v3519 = vpack.c.b16 %v2035, %v2031
    %v3520 = vpack.c.b16 %v2040, %v2036
    %v3521 = vpack.c.b16 %v2041, %v2037
    %v3522 = vpack.c.b16 %v2042, %v2038
    %v3523 = vpack.c.b16 %v2043, %v2039
    %v3524 = vpack.c.b16 %v2048, %v2044
    %v3525 = vpack.c.b16 %v2049, %v2045
    %v3526 = vpack.c.b16 %v2050, %v2046
    %v3527 = vpack.c.b16 %v2051, %v2047
    %v3528 = vpack.c.b16 %v2056, %v2052
    %v3529 = vpack.c.b16 %v2057, %v2053
    %v3530 = vpack.c.b16 %v2058, %v2054
    %v3531 = vpack.c.b16 %v2059, %v2055
    %v3532 = vpack.c.b16 %v2064, %v2060
    %v3533 = vpack.c.b16 %v2065, %v2061
    %v3534 = vpack.c.b16 %v2066, %v2062
    %v3535 = vpack.c.b16 %v2067, %v2063
    %v3536 = vpack.c.b16 %v2072, %v2068
    %v3537 = vpack.c.b16 %v2073, %v2069
    %v3538 = vpack.c.b16 %v2074, %v2070
    %v3539 = vpack.c.b16 %v2075, %v2071
    %v3540 = vpack.c.b16 %v2080, %v2076
    %v3541 = vpack.c.b16 %v2081, %v2077
    %v3542 = vpack.c.b16 %v2082, %v2078
    %v3543 = vpack.c.b16 %v2083, %v2079
    %v3544 = vpack.c.b16 %v2088, %v2084
    %v3545 = vpack.c.b16 %v2089, %v2085
    %v3546 = vpack.c.b16 %v2090, %v2086
    %v3547 = vpack.c.b16 %v2091, %v2087
    %v3548 = vpack.c.b16 %v2096, %v2092
    %v3549 = vpack.c.b16 %v2097, %v2093
    %v3550 = vpack.c.b16 %v2098, %v2094
    %v3551 = vpack.c.b16 %v2099, %v2095
    %v3552 = vpack.c.b16 %v2104, %v2100
    %v3553 = vpack.c.b16 %v2105, %v2101
    %v3554 = vpack.c.b16 %v2106, %v2102
    %v3555 = vpack.c.b16 %v2107, %v2103
    %v3556 = vpack.c.b16 %v2112, %v2108
    %v3557 = vpack.c.b16 %v2113, %v2109
    %v3558 = vpack.c.b16 %v2114, %v2110
    %v3559 = vpack.c.b16 %v2115, %v2111
    %v3560 = vpack.c.b16 %v2120, %v2116
    %v3561 = vpack.c.b16 %v2121, %v2117
    %v3562 = vpack.c.b16 %v2122, %v2118
    %v3563 = vpack.c.b16 %v2123, %v2119
    %v3564 = vpack.c.b16 %v2128, %v2124
    %v3565 = vpack.c.b16 %v2129, %v2125
    %v3566 = vpack.c.b16 %v2130, %v2126
    %v3567 = vpack.c.b16 %v2131, %v2127
    %v3568 = vpack.c.b16 %v2136, %v2132
    %v3569 = vpack.c.b16 %v2137, %v2133
    %v3570 = vpack.c.b16 %v2138, %v2134
    %v3571 = vpack.c.b16 %v2139, %v2135
    %v3572 = vpack.c.b16 %v2144, %v2140
    %v3573 = vpack.c.b16 %v2145, %v2141
    %v3574 = vpack.c.b16 %v2146, %v2142
    %v3575 = vpack.c.b16 %v2147, %v2143
    %v3576 = vpack.c.b16 %v2152, %v2148
    %v3577 = vpack.c.b16 %v2153, %v2149
    %v3578 = vpack.c.b16 %v2154, %v2150
    %v3579 = vpack.c.b16 %v2155, %v2151
    %v3580 = vpack.c.b16 %v2160, %v2156
    %v3581 = vpack.c.b16 %v2161, %v2157
    %v3582 = vpack.c.b16 %v2162, %v2158
    %v3583 = vpack.c.b16 %v2163, %v2159
    %v3584 = vpack.c.b16 %v2168, %v2164
    %v3585 = vpack.c.b16 %v2169, %v2165
    %v3586 = vpack.c.b16 %v2170, %v2166
    %v3587 = vpack.c.b16 %v2171, %v2167
    %v3588 = vpack.c.b16 %v2176, %v2172
    %v3589 = vpack.c.b16 %v2177, %v2173
    %v3590 = vpack.c.b16 %v2178, %v2174
    %v3591 = vpack.c.b16 %v2179, %v2175
    %v3592 = vpack.c.b16 %v2184, %v2180
    %v3593 = vpack.c.b16 %v2185, %v2181
    %v3594 = vpack.c.b16 %v2186, %v2182
    %v3595 = vpack.c.b16 %v2187, %v2183
    %v3596 = vpack.c.b16 %v2192, %v2188
    %v3597 = vpack.c.b16 %v2193, %v2189
    %v3598 = vpack.c.b16 %v2194, %v2190
    %v3599 = vpack.c.b16 %v2195, %v2191
    %v3600 = vpack.c.b16 %v2200, %v2196
    %v3601 = vpack.c.b16 %v2201, %v2197
    %v3602 = vpack.c.b16 %v2202, %v2198
    %v3603 = vpack.c.b16 %v2203, %v2199
    %v3604 = vpack.c.b16 %v2208, %v2204
    %v3605 = vpack.c.b16 %v2209, %v2205
    %v3606 = vpack.c.b16 %v2210, %v2206
    %v3607 = vpack.c.b16 %v2211, %v2207
    %v3608 = vpack.c.b16 %v2216, %v2212
    %v3609 = vpack.c.b16 %v2217, %v2213
    %v3610 = vpack.c.b16 %v2218, %v2214
    %v3611 = vpack.c.b16 %v2219, %v2215
    %v3612 = vpack.c.b16 %v2224, %v2220
    %v3613 = vpack.c.b16 %v2225, %v2221
    %v3614 = vpack.c.b16 %v2226, %v2222
    %v3615 = vpack.c.b16 %v2227, %v2223
    %v3616 = vpack.c.b16 %v2232, %v2228
    %v3617 = vpack.c.b16 %v2233, %v2229
    %v3618 = vpack.c.b16 %v2234, %v2230
    %v3619 = vpack.c.b16 %v2235, %v2231
    %v3620 = vpack.c.b16 %v2240, %v2236
    %v3621 = vpack.c.b16 %v2241, %v2237
    %v3622 = vpack.c.b16 %v2242, %v2238
    %v3623 = vpack.c.b16 %v2243, %v2239
    %v3624 = vpack.c.b16 %v2248, %v2244
    %v3625 = vpack.c.b16 %v2249, %v2245
    %v3626 = vpack.c.b16 %v2250, %v2246
    %v3627 = vpack.c.b16 %v2251, %v2247
    %v3628 = vpack.c.b16 %v2256, %v2252
    %v3629 = vpack.c.b16 %v2257, %v2253
    %v3630 = vpack.c.b16 %v2258, %v2254
    %v3631 = vpack.c.b16 %v2259, %v2255
    %v3632 = vpack.c.b16 %v2264, %v2260
    %v3633 = vpack.c.b16 %v2265, %v2261
    %v3634 = vpack.c.b16 %v2266, %v2262
    %v3635 = vpack.c.b16 %v2267, %v2263
    %v3636 = vpack.c.b16 %v2272, %v2268
    %v3637 = vpack.c.b16 %v2273, %v2269
    %v3638 = vpack.c.b16 %v2274, %v2270
    %v3639 = vpack.c.b16 %v2275, %v2271
    %v3640 = vpack.c.b16 %v2280, %v2276
    %v3641 = vpack.c.b16 %v2281, %v2277
    %v3642 = vpack.c.b16 %v2282, %v2278
    %v3643 = vpack.c.b16 %v2283, %v2279
    %v3644 = vpack.c.b16 %v2288, %v2284
    %v3645 = vpack.c.b16 %v2289, %v2285
    %v3646 = vpack.c.b16 %v2290, %v2286
    %v3647 = vpack.c.b16 %v2291, %v2287
    %v3648 = vpack.c.b16 %v2296, %v2292
    %v3649 = vpack.c.b16 %v2297, %v2293
    %v3650 = vpack.c.b16 %v2298, %v2294
    %v3651 = vpack.c.b16 %v2299, %v2295
    %v3652 = vpack.c.b16 %v2304, %v2300
    %v3653 = vpack.c.b16 %v2305, %v2301
    %v3654 = vpack.c.b16 %v2306, %v2302
    %v3655 = vpack.c.b16 %v2307, %v2303
    %v3656 = vpack.c.b16 %v2312, %v2308
    %v3657 = vpack.c.b16 %v2313, %v2309
    %v3658 = vpack.c.b16 %v2314, %v2310
    %v3659 = vpack.c.b16 %v2315, %v2311
    %v3660 = vpack.c.b16 %v2320, %v2316
    %v3661 = vpack.c.b16 %v2321, %v2317
    %v3662 = vpack.c.b16 %v2322, %v2318
    %v3663 = vpack.c.b16 %v2323, %v2319
    %v3664 = vpack.c.b16 %v2328, %v2324
    %v3665 = vpack.c.b16 %v2329, %v2325
    %v3666 = vpack.c.b16 %v2330, %v2326
    %v3667 = vpack.c.b16 %v2331, %v2327
    %v3668 = vpack.c.b16 %v2336, %v2332
    %v3669 = vpack.c.b16 %v2337, %v2333
    %v3670 = vpack.c.b16 %v2338, %v2334
    %v3671 = vpack.c.b16 %v2339, %v2335
    %v3672 = vpack.c.b16 %v2344, %v2340
    %v3673 = vpack.c.b16 %v2345, %v2341
    %v3674 = vpack.c.b16 %v2346, %v2342
    %v3675 = vpack.c.b16 %v2347, %v2343
    %v3676 = vpack.c.b16 %v2352, %v2348
    %v3677 = vpack.c.b16 %v2353, %v2349
    %v3678 = vpack.c.b16 %v2354, %v2350
    %v3679 = vpack.c.b16 %v2355, %v2351
    %v3680 = vpack.c.b16 %v2360, %v2356
    %v3681 = vpack.c.b16 %v2361, %v2357
    %v3682 = vpack.c.b16 %v2362, %v2358
    %v3683 = vpack.c.b16 %v2363, %v2359
    %v3684 = vpack.c.b16 %v2368, %v2364
    %v3685 = vpack.c.b16 %v2369, %v2365
    %v3686 = vpack.c.b16 %v2370, %v2366
    %v3687 = vpack.c.b16 %v2371, %v2367
    %v3688 = vpack.c.b16 %v2376, %v2372
    %v3689 = vpack.c.b16 %v2377, %v2373
    %v3690 = vpack.c.b16 %v2378, %v2374
    %v3691 = vpack.c.b16 %v2379, %v2375
    %v3692 = vpack.c.b16 %v2384, %v2380
    %v3693 = vpack.c.b16 %v2385, %v2381
    %v3694 = vpack.c.b16 %v2386, %v2382
    %v3695 = vpack.c.b16 %v2387, %v2383
    %v3696 = vpack.c.b16 %v2392, %v2388
    %v3697 = vpack.c.b16 %v2393, %v2389
    %v3698 = vpack.c.b16 %v2394, %v2390
    %v3699 = vpack.c.b16 %v2395, %v2391
    %v3700 = vpack.c.b16 %v2400, %v2396
    %v3701 = vpack.c.b16 %v2401, %v2397
    %v3702 = vpack.c.b16 %v2402, %v2398
    %v3703 = vpack.c.b16 %v2403, %v2399
    %v3704 = vpack.c.b16 %v2408, %v2404
    %v3705 = vpack.c.b16 %v2409, %v2405
    %v3706 = vpack.c.b16 %v2410, %v2406
    %v3707 = vpack.c.b16 %v2411, %v2407
    %v3708 = vpack.c.b16 %v2416, %v2412
    %v3709 = vpack.c.b16 %v2417, %v2413
    %v3710 = vpack.c.b16 %v2418, %v2414
    %v3711 = vpack.c.b16 %v2419, %v2415
    %v3712 = vpack.c.b16 %v2424, %v2420
    %v3713 = vpack.c.b16 %v2425, %v2421
    %v3714 = vpack.c.b16 %v2426, %v2422
    %v3715 = vpack.c.b16 %v2427, %v2423
    %v3716 = vpack.c.b16 %v2432, %v2428
    %v3717 = vpack.c.b16 %v2433, %v2429
    %v3718 = vpack.c.b16 %v2434, %v2430
    %v3719 = vpack.c.b16 %v2435, %v2431
    %v3720 = vpack.c.b16 %v2440, %v2436
    %v3721 = vpack.c.b16 %v2441, %v2437
    %v3722 = vpack.c.b16 %v2442, %v2438
    %v3723 = vpack.c.b16 %v2443, %v2439
    %v3724 = vpack.c.b16 %v2448, %v2444
    %v3725 = vpack.c.b16 %v2449, %v2445
    %v3726 = vpack.c.b16 %v2450, %v2446
    %v3727 = vpack.c.b16 %v2451, %v2447
    %v3728 = vpack.c.b16 %v2456, %v2452
    %v3729 = vpack.c.b16 %v2457, %v2453
    %v3730 = vpack.c.b16 %v2458, %v2454
    %v3731 = vpack.c.b16 %v2459, %v2455
    %v3732 = vpack.c.b16 %v2464, %v2460
    %v3733 = vpack.c.b16 %v2465, %v2461
    %v3734 = vpack.c.b16 %v2466, %v2462
    %v3735 = vpack.c.b16 %v2467, %v2463
    %v3736 = vpack.c.b16 %v2472, %v2468
    %v3737 = vpack.c.b16 %v2473, %v2469
    %v3738 = vpack.c.b16 %v2474, %v2470
    %v3739 = vpack.c.b16 %v2475, %v2471
    %v3740 = vpack.c.b16 %v2480, %v2476
    %v3741 = vpack.c.b16 %v2481, %v2477
    %v3742 = vpack.c.b16 %v2482, %v2478
    %v3743 = vpack.c.b16 %v2483, %v2479
    %v3744 = vpack.c.b16 %v2488, %v2484
    %v3745 = vpack.c.b16 %v2489, %v2485
    %v3746 = vpack.c.b16 %v2490, %v2486
    %v3747 = vpack.c.b16 %v2491, %v2487
    %v3748 = vpack.c.b16 %v2496, %v2492
    %v3749 = vpack.c.b16 %v2497, %v2493
    %v3750 = vpack.c.b16 %v2498, %v2494
    %v3751 = vpack.c.b16 %v2499, %v2495
    %v3752 = vpack.c.b16 %v2504, %v2500
    %v3753 = vpack.c.b16 %v2505, %v2501
    %v3754 = vpack.c.b16 %v2506, %v2502
    %v3755 = vpack.c.b16 %v2507, %v2503
    %v3756 = vpack.c.b16 %v2512, %v2508
    %v3757 = vpack.c.b16 %v2513, %v2509
    %v3758 = vpack.c.b16 %v2514, %v2510
    %v3759 = vpack.c.b16 %v2515, %v2511
    %v3760 = vpack.c.b16 %v2520, %v2516
    %v3761 = vpack.c.b16 %v2521, %v2517
    %v3762 = vpack.c.b16 %v2522, %v2518
    %v3763 = vpack.c.b16 %v2523, %v2519
    %v3764 = vpack.c.b16 %v2528, %v2524
    %v3765 = vpack.c.b16 %v2529, %v2525
    %v3766 = vpack.c.b16 %v2530, %v2526
    %v3767 = vpack.c.b16 %v2531, %v2527
    %v3768 = vpack.c.b16 %v2536, %v2532
    %v3769 = vpack.c.b16 %v2537, %v2533
    %v3770 = vpack.c.b16 %v2538, %v2534
    %v3771 = vpack.c.b16 %v2539, %v2535
    %v3772 = vpack.c.b16 %v2544, %v2540
    %v3773 = vpack.c.b16 %v2545, %v2541
    %v3774 = vpack.c.b16 %v2546, %v2542
    %v3775 = vpack.c.b16 %v2547, %v2543
    %v3776 = vpack.c.b16 %v2552, %v2548
    %v3777 = vpack.c.b16 %v2553, %v2549
    %v3778 = vpack.c.b16 %v2554, %v2550
    %v3779 = vpack.c.b16 %v2555, %v2551
    %v3780 = vpack.c.b16 %v2560, %v2556
    %v3781 = vpack.c.b16 %v2561, %v2557
    %v3782 = vpack.c.b16 %v2562, %v2558
    %v3783 = vpack.c.b16 %v2563, %v2559
    %v3784 = vpack.c.b16 %v2568, %v2564
    %v3785 = vpack.c.b16 %v2569, %v2565
    %v3786 = vpack.c.b16 %v2570, %v2566
    %v3787 = vpack.c.b16 %v2571, %v2567
    %v3788 = vpack.c.b16 %v2576, %v2572
    %v3789 = vpack.c.b16 %v2577, %v2573
    %v3790 = vpack.c.b16 %v2578, %v2574
    %v3791 = vpack.c.b16 %v2579, %v2575
    %v3792 = vpack.c.b16 %v2584, %v2580
    %v3793 = vpack.c.b16 %v2585, %v2581
    %v3794 = vpack.c.b16 %v2586, %v2582
    %v3795 = vpack.c.b16 %v2587, %v2583
    %v3796 = vpack.c.b16 %v2592, %v2588
    %v3797 = vpack.c.b16 %v2593, %v2589
    %v3798 = vpack.c.b16 %v2594, %v2590
    %v3799 = vpack.c.b16 %v2595, %v2591
    %v3800 = vpack.c.b16 %v2600, %v2596
    %v3801 = vpack.c.b16 %v2601, %v2597
    %v3802 = vpack.c.b16 %v2602, %v2598
    %v3803 = vpack.c.b16 %v2603, %v2599
    %v3804 = vpack.c.b16 %v2608, %v2604
    %v3805 = vpack.c.b16 %v2609, %v2605
    %v3806 = vpack.c.b16 %v2610, %v2606
    %v3807 = vpack.c.b16 %v2611, %v2607
    %v3808 = vpack.c.b16 %v2616, %v2612
    %v3809 = vpack.c.b16 %v2617, %v2613
    %v3810 = vpack.c.b16 %v2618, %v2614
    %v3811 = vpack.c.b16 %v2619, %v2615
    %v3812 = vpack.c.b16 %v2624, %v2620
    %v3813 = vpack.c.b16 %v2625, %v2621
    %v3814 = vpack.c.b16 %v2626, %v2622
    %v3815 = vpack.c.b16 %v2627, %v2623
    %v3816 = vpack.c.b16 %v2632, %v2628
    %v3817 = vpack.c.b16 %v2633, %v2629
    %v3818 = vpack.c.b16 %v2634, %v2630
    %v3819 = vpack.c.b16 %v2635, %v2631
    %v3820 = vpack.c.b16 %v2640, %v2636
    %v3821 = vpack.c.b16 %v2641, %v2637
    %v3822 = vpack.c.b16 %v2642, %v2638
    %v3823 = vpack.c.b16 %v2643, %v2639
    %v3824 = vpack.c.b16 %v2648, %v2644
    %v3825 = vpack.c.b16 %v2649, %v2645
    %v3826 = vpack.c.b16 %v2650, %v2646
    %v3827 = vpack.c.b16 %v2651, %v2647
    %v3828 = vpack.c.b16 %v2656, %v2652
    %v3829 = vpack.c.b16 %v2657, %v2653
    %v3830 = vpack.c.b16 %v2658, %v2654
    %v3831 = vpack.c.b16 %v2659, %v2655
    %v3832 = vpack.c.b16 %v2664, %v2660
    %v3833 = vpack.c.b16 %v2665, %v2661
    %v3834 = vpack.c.b16 %v2666, %v2662
    %v3835 = vpack.c.b16 %v2667, %v2663
    %v3836 = vpack.c.b16 %v2672, %v2668
    %v3837 = vpack.c.b16 %v2673, %v2669
    %v3838 = vpack.c.b16 %v2674, %v2670
    %v3839 = vpack.c.b16 %v2675, %v2671
    %v3840 = vpack.c.b16 %v2680, %v2676
    %v3841 = vpack.c.b16 %v2681, %v2677
    %v3842 = vpack.c.b16 %v2682, %v2678
    %v3843 = vpack.c.b16 %v2683, %v2679
    %v3844 = vpack.c.b16 %v2688, %v2684
    %v3845 = vpack.c.b16 %v2689, %v2685
    %v3846 = vpack.c.b16 %v2690, %v2686
    %v3847 = vpack.c.b16 %v2691, %v2687
    %v3848 = vpack.c.b16 %v2696, %v2692
    %v3849 = vpack.c.b16 %v2697, %v2693
    %v3850 = vpack.c.b16 %v2698, %v2694
    %v3851 = vpack.c.b16 %v2699, %v2695
    %v3852 = vpack.c.b16 %v2704, %v2700
    %v3853 = vpack.c.b16 %v2705, %v2701
    %v3854 = vpack.c.b16 %v2706, %v2702
    %v3855 = vpack.c.b16 %v2707, %v2703
    %v3856 = vpack.c.b16 %v2712, %v2708
    %v3857 = vpack.c.b16 %v2713, %v2709
    %v3858 = vpack.c.b16 %v2714, %v2710
    %v3859 = vpack.c.b16 %v2715, %v2711
    %v3860 = vpack.c.b16 %v2720, %v2716
    %v3861 = vpack.c.b16 %v2721, %v2717
    %v3862 = vpack.c.b16 %v2722, %v2718
    %v3863 = vpack.c.b16 %v2723, %v2719
    %v3864 = vpack.c.b16 %v2728, %v2724
    %v3865 = vpack.c.b16 %v2729, %v2725
    %v3866 = vpack.c.b16 %v2730, %v2726
    %v3867 = vpack.c.b16 %v2731, %v2727
    %v3868 = vpack.c.b16 %v2736, %v2732
    %v3869 = vpack.c.b16 %v2737, %v2733
    %v3870 = vpack.c.b16 %v2738, %v2734
    %v3871 = vpack.c.b16 %v2739, %v2735
    %v3872 = vpack.c.b16 %v2744, %v2740
    %v3873 = vpack.c.b16 %v2745, %v2741
    %v3874 = vpack.c.b16 %v2746, %v2742
    %v3875 = vpack.c.b16 %v2747, %v2743
    %v3876 = vpack.c.b16 %v2752, %v2748
    %v3877 = vpack.c.b16 %v2753, %v2749
    %v3878 = vpack.c.b16 %v2754, %v2750
    %v3879 = vpack.c.b16 %v2755, %v2751
    %v3880 = vpack.c.b16 %v2760, %v2756
    %v3881 = vpack.c.b16 %v2761, %v2757
    %v3882 = vpack.c.b16 %v2762, %v2758
    %v3883 = vpack.c.b16 %v2763, %v2759
    %v3884 = vpack.c.b16 %v2768, %v2764
    %v3885 = vpack.c.b16 %v2769, %v2765
    %v3886 = vpack.c.b16 %v2770, %v2766
    %v3887 = vpack.c.b16 %v2771, %v2767
    %v3888 = vpack.c.b16 %v2776, %v2772
    %v3889 = vpack.c.b16 %v2777, %v2773
    %v3890 = vpack.c.b16 %v2778, %v2774
    %v3891 = vpack.c.b16 %v2779, %v2775
    %v3892 = vpack.c.b16 %v2784, %v2780
    %v3893 = vpack.c.b16 %v2785, %v2781
    %v3894 = vpack.c.b16 %v2786, %v2782
    %v3895 = vpack.c.b16 %v2787, %v2783
    %v3896 = vpack.c.b16 %v2792, %v2788
    %v3897 = vpack.c.b16 %v2793, %v2789
    %v3898 = vpack.c.b16 %v2794, %v2790
    %v3899 = vpack.c.b16 %v2795, %v2791
    %v3900 = vpack.c.b16 %v2800, %v2796
    %v3901 = vpack.c.b16 %v2801, %v2797
    %v3902 = vpack.c.b16 %v2802, %v2798
    %v3903 = vpack.c.b16 %v2803, %v2799
    %v3904 = vpack.c.b16 %v2808, %v2804
    %v3905 = vpack.c.b16 %v2809, %v2805
    %v3906 = vpack.c.b16 %v2810, %v2806
    %v3907 = vpack.c.b16 %v2811, %v2807
    %v3908 = vpack.c.b16 %v2816, %v2812
    %v3909 = vpack.c.b16 %v2817, %v2813
    %v3910 = vpack.c.b16 %v2818, %v2814
    %v3911 = vpack.c.b16 %v2819, %v2815
    %v3912 = vpack.c.b16 %v2824, %v2820
    %v3913 = vpack.c.b16 %v2825, %v2821
    %v3914 = vpack.c.b16 %v2826, %v2822
    %v3915 = vpack.c.b16 %v2827, %v2823
    %v3916 = vpack.c.b16 %v2832, %v2828
    %v3917 = vpack.c.b16 %v2833, %v2829
    %v3918 = vpack.c.b16 %v2834, %v2830
    %v3919 = vpack.c.b16 %v2835, %v2831
    %v3920 = vpack.c.b16 %v2840, %v2836
    %v3921 = vpack.c.b16 %v2841, %v2837
    %v3922 = vpack.c.b16 %v2842, %v2838
    %v3923 = vpack.c.b16 %v2843, %v2839
    %v3924 = vpack.c.b16 %v2848, %v2844
    %v3925 = vpack.c.b16 %v2849, %v2845
    %v3926 = vpack.c.b16 %v2850, %v2846
    %v3927 = vpack.c.b16 %v2851, %v2847
    %v3928 = vpack.c.b16 %v2856, %v2852
    %v3929 = vpack.c.b16 %v2857, %v2853
    %v3930 = vpack.c.b16 %v2858, %v2854
    %v3931 = vpack.c.b16 %v2859, %v2855
    %v3932 = vpack.c.b16 %v2864, %v2860
    %v3933 = vpack.c.b16 %v2865, %v2861
    %v3934 = vpack.c.b16 %v2866, %v2862
    %v3935 = vpack.c.b16 %v2867, %v2863
    %v3936 = vpack.c.b16 %v2872, %v2868
    %v3937 = vpack.c.b16 %v2873, %v2869
    %v3938 = vpack.c.b16 %v2874, %v2870
    %v3939 = vpack.c.b16 %v2875, %v2871
    %v3940 = vpack.c.b16 %v2880, %v2876
    %v3941 = vpack.c.b16 %v2881, %v2877
    %v3942 = vpack.c.b16 %v2882, %v2878
    %v3943 = vpack.c.b16 %v2883, %v2879
    %v3944 = vpack.c.b16 %v2888, %v2884
    %v3945 = vpack.c.b16 %v2889, %v2885
    %v3946 = vpack.c.b16 %v2890, %v2886
    %v3947 = vpack.c.b16 %v2891, %v2887
    %v3948 = vpack.c.b16 %v2896, %v2892
    %v3949 = vpack.c.b16 %v2897, %v2893
    %v3950 = vpack.c.b16 %v2898, %v2894
    %v3951 = vpack.c.b16 %v2899, %v2895
    %v3952 = vpack.c.b16 %v2904, %v2900
    %v3953 = vpack.c.b16 %v2905, %v2901
    %v3954 = vpack.c.b16 %v2906, %v2902
    %v3955 = vpack.c.b16 %v2907, %v2903
    %v3956 = vpack.c.b16 %v2912, %v2908
    %v3957 = vpack.c.b16 %v2913, %v2909
    %v3958 = vpack.c.b16 %v2914, %v2910
    %v3959 = vpack.c.b16 %v2915, %v2911
    %v3960 = vpack.c.b16 %v2920, %v2916
    %v3961 = vpack.c.b16 %v2921, %v2917
    %v3962 = vpack.c.b16 %v2922, %v2918
    %v3963 = vpack.c.b16 %v2923, %v2919
    %v3964 = vpack.c.b16 %v2928, %v2924
    %v3965 = vpack.c.b16 %v2929, %v2925
    %v3966 = vpack.c.b16 %v2930, %v2926
    %v3967 = vpack.c.b16 %v2931, %v2927
    %v3968 = vpack.c.b16 %v2936, %v2932
    %v3969 = vpack.c.b16 %v2937, %v2933
    %v3970 = vpack.c.b16 %v2938, %v2934
    %v3971 = vpack.c.b16 %v2939, %v2935
    %v3972 = vpack.c.b16 %v2944, %v2940
    %v3973 = vpack.c.b16 %v2945, %v2941
    %v3974 = vpack.c.b16 %v2946, %v2942
    %v3975 = vpack.c.b16 %v2947, %v2943
    %v3976 = vpack.c.b16 %v2952, %v2948
    %v3977 = vpack.c.b16 %v2953, %v2949
    %v3978 = vpack.c.b16 %v2954, %v2950
    %v3979 = vpack.c.b16 %v2955, %v2951
    %v3980 = vpack.c.b16 %v2960, %v2956
    %v3981 = vpack.c.b16 %v2961, %v2957
    %v3982 = vpack.c.b16 %v2962, %v2958
    %v3983 = vpack.c.b16 %v2963, %v2959
    %v3984 = vpack.c.b16 %v2968, %v2964
    %v3985 = vpack.c.b16 %v2969, %v2965
    %v3986 = vpack.c.b16 %v2970, %v2966
    %v3987 = vpack.c.b16 %v2971, %v2967
    %v3988 = vpack.c.b16 %v2976, %v2972
    %v3989 = vpack.c.b16 %v2977, %v2973
    %v3990 = vpack.c.b16 %v2978, %v2974
    %v3991 = vpack.c.b16 %v2979, %v2975
    %v3992 = vpack.c.b16 %v2984, %v2980
    %v3993 = vpack.c.b16 %v2985, %v2981
    %v3994 = vpack.c.b16 %v2986, %v2982
    %v3995 = vpack.c.b16 %v2987, %v2983
    %v3996 = vpack.c.b16 %v2992, %v2988
    %v3997 = vpack.c.b16 %v2993, %v2989
    %v3998 = vpack.c.b16 %v2994, %v2990
    %v3999 = vpack.c.b16 %v2995, %v2991
    %v4000 = vpack.c.b16 %v3000, %v2996
    %v4001 = vpack.c.b16 %v3001, %v2997
    %v4002 = vpack.c.b16 %v3002, %v2998
    %v4003 = vpack.c.b16 %v3003, %v2999
    %v4004 = vpack.c.b16 %v3008, %v3004
    %v4005 = vpack.c.b16 %v3009, %v3005
    %v4006 = vpack.c.b16 %v3010, %v3006
    %v4007 = vpack.c.b16 %v3011, %v3007
    %v4008 = vpack.c.b16 %v3016, %v3012
    %v4009 = vpack.c.b16 %v3017, %v3013
    %v4010 = vpack.c.b16 %v3018, %v3014
    %v4011 = vpack.c.b16 %v3019, %v3015
    %v4012 = vpack.c.b16 %v3024, %v3020
    %v4013 = vpack.c.b16 %v3025, %v3021
    %v4014 = vpack.c.b16 %v3026, %v3022
    %v4015 = vpack.c.b16 %v3027, %v3023
    %v4016 = vpack.c.b16 %v3032, %v3028
    %v4017 = vpack.c.b16 %v3033, %v3029
    %v4018 = vpack.c.b16 %v3034, %v3030
    %v4019 = vpack.c.b16 %v3035, %v3031
    %v4020 = vpack.c.b16 %v3040, %v3036
    %v4021 = vpack.c.b16 %v3041, %v3037
    %v4022 = vpack.c.b16 %v3042, %v3038
    %v4023 = vpack.c.b16 %v3043, %v3039
    %v4024 = vpack.c.b16 %v3048, %v3044
    %v4025 = vpack.c.b16 %v3049, %v3045
    %v4026 = vpack.c.b16 %v3050, %v3046
    %v4027 = vpack.c.b16 %v3051, %v3047
    %v4028 = vpack.c.b16 %v3056, %v3052
    %v4029 = vpack.c.b16 %v3057, %v3053
    %v4030 = vpack.c.b16 %v3058, %v3054
    %v4031 = vpack.c.b16 %v3059, %v3055
    %v4032 = vpack.c.b16 %v3064, %v3060
    %v4033 = vpack.c.b16 %v3065, %v3061
    %v4034 = vpack.c.b16 %v3066, %v3062
    %v4035 = vpack.c.b16 %v3067, %v3063
    %v4036 = vpack.c.b16 %v3072, %v3068
    %v4037 = vpack.c.b16 %v3073, %v3069
    %v4038 = vpack.c.b16 %v3074, %v3070
    %v4039 = vpack.c.b16 %v3075, %v3071
    %v4040 = vpack.c.b16 %v3080, %v3076
    %v4041 = vpack.c.b16 %v3081, %v3077
    %v4042 = vpack.c.b16 %v3082, %v3078
    %v4043 = vpack.c.b16 %v3083, %v3079
    %v4044 = vpack.c.b16 %v3088, %v3084
    %v4045 = vpack.c.b16 %v3089, %v3085
    %v4046 = vpack.c.b16 %v3090, %v3086
    %v4047 = vpack.c.b16 %v3091, %v3087
    %v4048 = vpack.c.b16 %v3096, %v3092
    %v4049 = vpack.c.b16 %v3097, %v3093
    %v4050 = vpack.c.b16 %v3098, %v3094
    %v4051 = vpack.c.b16 %v3099, %v3095
    %v4052 = vpack.c.b16 %v3104, %v3100
    %v4053 = vpack.c.b16 %v3105, %v3101
    %v4054 = vpack.c.b16 %v3106, %v3102
    %v4055 = vpack.c.b16 %v3107, %v3103
    %v4056 = vpack.c.b16 %v3112, %v3108
    %v4057 = vpack.c.b16 %v3113, %v3109
    %v4058 = vpack.c.b16 %v3114, %v3110
    %v4059 = vpack.c.b16 %v3115, %v3111
    %v4060 = vpack.c.b16 %v3120, %v3116
    %v4061 = vpack.c.b16 %v3121, %v3117
    %v4062 = vpack.c.b16 %v3122, %v3118
    %v4063 = vpack.c.b16 %v3123, %v3119
    %v4064 = vpack.c.b16 %v3128, %v3124
    %v4065 = vpack.c.b16 %v3129, %v3125
    %v4066 = vpack.c.b16 %v3130, %v3126
    %v4067 = vpack.c.b16 %v3131, %v3127
    %v4068 = vpack.c.b16 %v3136, %v3132
    %v4069 = vpack.c.b16 %v3137, %v3133
    %v4070 = vpack.c.b16 %v3138, %v3134
    %v4071 = vpack.c.b16 %v3139, %v3135
    %v4072 = vpack.c.b16 %v3144, %v3140
    %v4073 = vpack.c.b16 %v3145, %v3141
    %v4074 = vpack.c.b16 %v3146, %v3142
    %v4075 = vpack.c.b16 %v3147, %v3143
    %v4076 = vpack.c.b16 %v3152, %v3148
    %v4077 = vpack.c.b16 %v3153, %v3149
    %v4078 = vpack.c.b16 %v3154, %v3150
    %v4079 = vpack.c.b16 %v3155, %v3151
    %v4080 = vpack.c.b16 %v3160, %v3156
    %v4081 = vpack.c.b16 %v3161, %v3157
    %v4082 = vpack.c.b16 %v3162, %v3158
    %v4083 = vpack.c.b16 %v3163, %v3159
    %v4084 = vpack.c.b16 %v3168, %v3164
    %v4085 = vpack.c.b16 %v3169, %v3165
    %v4086 = vpack.c.b16 %v3170, %v3166
    %v4087 = vpack.c.b16 %v3171, %v3167
    %v4088 = vpack.c.b16 %v3176, %v3172
    %v4089 = vpack.c.b16 %v3177, %v3173
    %v4090 = vpack.c.b16 %v3178, %v3174
    %v4091 = vpack.c.b16 %v3179, %v3175
    %v4092 = vpack.c.b16 %v3184, %v3180
    %v4093 = vpack.c.b16 %v3185, %v3181
    %v4094 = vpack.c.b16 %v3186, %v3182
    %v4095 = vpack.c.b16 %v3187, %v3183
    %v4096 = vpack.c.b16 %v3192, %v3188
    %v4097 = vpack.c.b16 %v3193, %v3189
    %v4098 = vpack.c.b16 %v3194, %v3190
    %v4099 = vpack.c.b16 %v3195, %v3191
    %v4100 = vpack.c.b16 %v3200, %v3196
    %v4101 = vpack.c.b16 %v3201, %v3197
    %v4102 = vpack.c.b16 %v3202, %v3198
    %v4103 = vpack.c.b16 %v3203, %v3199
    %v4104 = vpack.c.b16 %v3208, %v3204
    %v4105 = vpack.c.b16 %v3209, %v3205
    %v4106 = vpack.c.b16 %v3210, %v3206
    %v4107 = vpack.c.b16 %v3211, %v3207
    %v4108 = vpack.c.b16 %v3216, %v3212
    %v4109 = vpack.c.b16 %v3217, %v3213
    %v4110 = vpack.c.b16 %v3218, %v3214
    %v4111 = vpack.c.b16 %v3219, %v3215
    %v4112 = vpack.c.b16 %v3224, %v3220
    %v4113 = vpack.c.b16 %v3225, %v3221
    %v4114 = vpack.c.b16 %v3226, %v3222
    %v4115 = vpack.c.b16 %v3227, %v3223
    %v4116 = vpack.c.b16 %v3232, %v3228
    %v4117 = vpack.c.b16 %v3233, %v3229
    %v4118 = vpack.c.b16 %v3234, %v3230
    %v4119 = vpack.c.b16 %v3235, %v3231
    %v4120 = vpack.c.b16 %v3240, %v3236
    %v4121 = vpack.c.b16 %v3241, %v3237
    %v4122 = vpack.c.b16 %v3242, %v3238
    %v4123 = vpack.c.b16 %v3243, %v3239
    %v4124 = vpack.c.b16 %v3248, %v3244
    %v4125 = vpack.c.b16 %v3249, %v3245
    %v4126 = vpack.c.b16 %v3250, %v3246
    %v4127 = vpack.c.b16 %v3251, %v3247
    %v4128 = vpack.c.b16 %v3256, %v3252
    %v4129 = vpack.c.b16 %v3257, %v3253
    %v4130 = vpack.c.b16 %v3258, %v3254
    %v4131 = vpack.c.b16 %v3259, %v3255
    %v4132 = vpack.c.b16 %v3264, %v3260
    %v4133 = vpack.c.b16 %v3265, %v3261
    %v4134 = vpack.c.b16 %v3266, %v3262
    %v4135 = vpack.c.b16 %v3267, %v3263
    %v4136 = vpack.c.b16 %v3272, %v3268
    %v4137 = vpack.c.b16 %v3273, %v3269
    %v4138 = vpack.c.b16 %v3274, %v3270
    %v4139 = vpack.c.b16 %v3275, %v3271
    %v4140 = vpack.c.b16 %v3280, %v3276
    %v4141 = vpack.c.b16 %v3281, %v3277
    %v4142 = vpack.c.b16 %v3282, %v3278
    %v4143 = vpack.c.b16 %v3283, %v3279
    %v4144 = vpack.c.b16 %v3288, %v3284
    %v4145 = vpack.c.b16 %v3289, %v3285
    %v4146 = vpack.c.b16 %v3290, %v3286
    %v4147 = vpack.c.b16 %v3291, %v3287
    %v4148 = vpack.c.b16 %v3296, %v3292
    %v4149 = vpack.c.b16 %v3297, %v3293
    %v4150 = vpack.c.b16 %v3298, %v3294
    %v4151 = vpack.c.b16 %v3299, %v3295
    %v4152 = vpack.c.b16 %v3304, %v3300
    %v4153 = vpack.c.b16 %v3305, %v3301
    %v4154 = vpack.c.b16 %v3306, %v3302
    %v4155 = vpack.c.b16 %v3307, %v3303
    %v4156 = vpack.c.b16 %v3312, %v3308
    %v4157 = vpack.c.b16 %v3313, %v3309
    %v4158 = vpack.c.b16 %v3314, %v3310
    %v4159 = vpack.c.b16 %v3315, %v3311
    %v4160 = vpack.c.b16 %v3320, %v3316
    %v4161 = vpack.c.b16 %v3321, %v3317
    %v4162 = vpack.c.b16 %v3322, %v3318
    %v4163 = vpack.c.b16 %v3323, %v3319
    %v4164 = vpack.c.b16 %v3328, %v3324
    %v4165 = vpack.c.b16 %v3329, %v3325
    %v4166 = vpack.c.b16 %v3330, %v3326
    %v4167 = vpack.c.b16 %v3331, %v3327
    %v4168 = vpack.c.b16 %v3336, %v3332
    %v4169 = vpack.c.b16 %v3337, %v3333
    %v4170 = vpack.c.b16 %v3338, %v3334
    %v4171 = vpack.c.b16 %v3339, %v3335
    %v4172 = vpack.c.b16 %v3344, %v3340
    %v4173 = vpack.c.b16 %v3345, %v3341
    %v4174 = vpack.c.b16 %v3346, %v3342
    %v4175 = vpack.c.b16 %v3347, %v3343
    %v4176 = vpack.c.b16 %v3352, %v3348
    %v4177 = vpack.c.b16 %v3353, %v3349
    %v4178 = vpack.c.b16 %v3354, %v3350
    %v4179 = vpack.c.b16 %v3355, %v3351
    %v4180 = vpack.c.b16 %v3360, %v3356
    %v4181 = vpack.c.b16 %v3361, %v3357
    %v4182 = vpack.c.b16 %v3362, %v3358
    %v4183 = vpack.c.b16 %v3363, %v3359
    %v4184 = vpack.c.b16 %v3368, %v3364
    %v4185 = vpack.c.b16 %v3369, %v3365
    %v4186 = vpack.c.b16 %v3370, %v3366
    %v4187 = vpack.c.b16 %v3371, %v3367
    %v4188 = vpack.c.b16 %v3376, %v3372
    %v4189 = vpack.c.b16 %v3377, %v3373
    %v4190 = vpack.c.b16 %v3378, %v3374
    %v4191 = vpack.c.b16 %v3379, %v3375
    %v4192 = vpack.c.b16 %v3384, %v3380
    %v4193 = vpack.c.b16 %v3385, %v3381
    %v4194 = vpack.c.b16 %v3386, %v3382
    %v4195 = vpack.c.b16 %v3387, %v3383
    %v4196 = vpack.c.b16 %v3392, %v3388
    %v4197 = vpack.c.b16 %v3393, %v3389
    %v4198 = vpack.c.b16 %v3394, %v3390
    %v4199 = vpack.c.b16 %v3395, %v3391
    %v4200 = vpack.c.b16 %v3400, %v3396
    %v4201 = vpack.c.b16 %v3401, %v3397
    %v4202 = vpack.c.b16 %v3402, %v3398
    %v4203 = vpack.c.b16 %v3403, %v3399
    %v4204 = vpack.c.b16 %v3408, %v3404
    %v4205 = vpack.c.b16 %v3409, %v3405
    %v4206 = vpack.c.b16 %v3410, %v3406
    %v4207 = vpack.c.b16 %v3411, %v3407
    %v4208 = vpack.c.b16 %v3416, %v3412
    %v4209 = vpack.c.b16 %v3417, %v3413
    %v4210 = vpack.c.b16 %v3418, %v3414
    %v4211 = vpack.c.b16 %v3419, %v3415
    %v4212 = vpack.c.b16 %v3424, %v3420
    %v4213 = vpack.c.b16 %v3425, %v3421
    %v4214 = vpack.c.b16 %v3426, %v3422
    %v4215 = vpack.c.b16 %v3427, %v3423
    %v4216 = vpack.c.b16 %v3432, %v3428
    %v4217 = vpack.c.b16 %v3433, %v3429
    %v4218 = vpack.c.b16 %v3434, %v3430
    %v4219 = vpack.c.b16 %v3435, %v3431
    %v4220 = vpack.c.b16 %v3440, %v3436
    %v4221 = vpack.c.b16 %v3441, %v3437
    %v4222 = vpack.c.b16 %v3442, %v3438
    %v4223 = vpack.c.b16 %v3443, %v3439
    %v4224 = vpack.c.b16 %v3448, %v3444
    %v4225 = vpack.c.b16 %v3449, %v3445
    %v4226 = vpack.c.b16 %v3450, %v3446
    %v4227 = vpack.c.b16 %v3451, %v3447
    %v4228 = vpack.c.b16 %v3456, %v3452
    %v4229 = vpack.c.b16 %v3457, %v3453
    %v4230 = vpack.c.b16 %v3458, %v3454
    %v4231 = vpack.c.b16 %v3459, %v3455
    %v4232 = vpack.c.b16 %v3464, %v3460
    %v4233 = vpack.c.b16 %v3465, %v3461
    %v4234 = vpack.c.b16 %v3466, %v3462
    %v4235 = vpack.c.b16 %v3467, %v3463
    %5004 = vmatpush.bf16.msra.mxu0 %v3496
    %5005 = vmatpush.bf16.msra.mxu0 %v3492
    %5006 = vmatpush.bf16.msra.mxu0 %v3488
    %5007 = vmatpush.bf16.msra.mxu0 %v3484
    %5008 = vmatpush.bf16.msra.mxu0 %v3480
    %5009 = vmatpush.bf16.msra.mxu0 %v3476
    %5010 = vmatpush.bf16.msra.mxu0 %v3472
    %5011 = vmatpush.bf16.msra.mxu0 %v3468
    %5012 = vmatmul.bf16.gmra.mxu0 %v362
    %v5013 = vpop.f32.mrf.mxu0
    %v5014 = vadd.f32 %v1156, %v5013
    %v5015 = vpop.f32.mrf.mxu0
    %v5016 = vadd.f32 %v1156, %v5015
    %5017 = vdwg.mxu0
    %5018 = vmatpush.bf16.msra.mxu0 %v3528
    %5019 = vmatpush.bf16.msra.mxu0 %v3524
    %5020 = vmatpush.bf16.msra.mxu0 %v3520
    %5021 = vmatpush.bf16.msra.mxu0 %v3516
    %5022 = vmatpush.bf16.msra.mxu0 %v3512
    %5023 = vmatpush.bf16.msra.mxu0 %v3508
    %5024 = vmatpush.bf16.msra.mxu0 %v3504
    %5025 = vmatpush.bf16.msra.mxu0 %v3500
    %5026 = vmatmul.bf16.gmra.mxu0 %v363
    %v5027 = vpop.f32.mrf.mxu0
    %v5028 = vadd.f32 %v5014, %v5027
    %v5029 = vpop.f32.mrf.mxu0
    %v5030 = vadd.f32 %v5016, %v5029
    %5031 = vdwg.mxu0
    %5032 = vmatpush.bf16.msra.mxu0 %v3560
    %5033 = vmatpush.bf16.msra.mxu0 %v3556
    %5034 = vmatpush.bf16.msra.mxu0 %v3552
    %5035 = vmatpush.bf16.msra.mxu0 %v3548
    %5036 = vmatpush.bf16.msra.mxu0 %v3544
    %5037 = vmatpush.bf16.msra.mxu0 %v3540
    %5038 = vmatpush.bf16.msra.mxu0 %v3536
    %5039 = vmatpush.bf16.msra.mxu0 %v3532
    %5040 = vmatmul.bf16.gmra.mxu0 %v364
    %v5041 = vpop.f32.mrf.mxu0
    %v5042 = vadd.f32 %v5028, %v5041
    %v5043 = vpop.f32.mrf.mxu0
    %v5044 = vadd.f32 %v5030, %v5043
    %5045 = vdwg.mxu0
    %5046 = vmatpush.bf16.msra.mxu0 %v3592
    %5047 = vmatpush.bf16.msra.mxu0 %v3588
    %5048 = vmatpush.bf16.msra.mxu0 %v3584
    %5049 = vmatpush.bf16.msra.mxu0 %v3580
    %5050 = vmatpush.bf16.msra.mxu0 %v3576
    %5051 = vmatpush.bf16.msra.mxu0 %v3572
    %5052 = vmatpush.bf16.msra.mxu0 %v3568
    %5053 = vmatpush.bf16.msra.mxu0 %v3564
    %5054 = vmatmul.bf16.gmra.mxu0 %v365
    %v5055 = vpop.f32.mrf.mxu0
    %v5056 = vadd.f32 %v5042, %v5055
    %v5057 = vpop.f32.mrf.mxu0
    %v5058 = vadd.f32 %v5044, %v5057
    %5059 = vdwg.mxu0
    %5060 = vmatpush.bf16.msra.mxu0 %v3624
    %5061 = vmatpush.bf16.msra.mxu0 %v3620
    %5062 = vmatpush.bf16.msra.mxu0 %v3616
    %5063 = vmatpush.bf16.msra.mxu0 %v3612
    %5064 = vmatpush.bf16.msra.mxu0 %v3608
    %5065 = vmatpush.bf16.msra.mxu0 %v3604
    %5066 = vmatpush.bf16.msra.mxu0 %v3600
    %5067 = vmatpush.bf16.msra.mxu0 %v3596
    %5068 = vmatmul.bf16.gmra.mxu0 %v366
    %v5069 = vpop.f32.mrf.mxu0
    %v5070 = vadd.f32 %v5056, %v5069
    %v5071 = vpop.f32.mrf.mxu0
    %v5072 = vadd.f32 %v5058, %v5071
    %5073 = vdwg.mxu0
    %5074 = vmatpush.bf16.msra.mxu0 %v3656
    %5075 = vmatpush.bf16.msra.mxu0 %v3652
    %5076 = vmatpush.bf16.msra.mxu0 %v3648
    %5077 = vmatpush.bf16.msra.mxu0 %v3644
    %5078 = vmatpush.bf16.msra.mxu0 %v3640
    %5079 = vmatpush.bf16.msra.mxu0 %v3636
    %5080 = vmatpush.bf16.msra.mxu0 %v3632
    %5081 = vmatpush.bf16.msra.mxu0 %v3628
    %5082 = vmatmul.bf16.gmra.mxu0 %v367
    %v5083 = vpop.f32.mrf.mxu0
    %v5084 = vadd.f32 %v5070, %v5083
    %v5085 = vpop.f32.mrf.mxu0
    %v5086 = vadd.f32 %v5072, %v5085
    %5087 = vdwg.mxu0
    %5088 = vmatpush.bf16.msra.mxu0 %v3688
    %5089 = vmatpush.bf16.msra.mxu0 %v3684
    %5090 = vmatpush.bf16.msra.mxu0 %v3680
    %5091 = vmatpush.bf16.msra.mxu0 %v3676
    %5092 = vmatpush.bf16.msra.mxu0 %v3672
    %5093 = vmatpush.bf16.msra.mxu0 %v3668
    %5094 = vmatpush.bf16.msra.mxu0 %v3664
    %5095 = vmatpush.bf16.msra.mxu0 %v3660
    %5096 = vmatmul.bf16.gmra.mxu0 %v368
    %v5097 = vpop.f32.mrf.mxu0
    %v5098 = vadd.f32 %v5084, %v5097
    %v5099 = vpop.f32.mrf.mxu0
    %v5100 = vadd.f32 %v5086, %v5099
    %5101 = vdwg.mxu0
    %5102 = vmatpush.bf16.msra.mxu0 %v3720
    %5103 = vmatpush.bf16.msra.mxu0 %v3716
    %5104 = vmatpush.bf16.msra.mxu0 %v3712
    %5105 = vmatpush.bf16.msra.mxu0 %v3708
    %5106 = vmatpush.bf16.msra.mxu0 %v3704
    %5107 = vmatpush.bf16.msra.mxu0 %v3700
    %5108 = vmatpush.bf16.msra.mxu0 %v3696
    %5109 = vmatpush.bf16.msra.mxu0 %v3692
    %5110 = vmatmul.bf16.gmra.mxu0 %v369
    %v5111 = vpop.f32.mrf.mxu0
    %v5112 = vadd.f32 %v5098, %v5111
    %v5113 = vpop.f32.mrf.mxu0
    %v5114 = vadd.f32 %v5100, %v5113
    %5115 = vdwg.mxu0
    %5116 = vmatpush.bf16.msra.mxu0 %v3752
    %5117 = vmatpush.bf16.msra.mxu0 %v3748
    %5118 = vmatpush.bf16.msra.mxu0 %v3744
    %5119 = vmatpush.bf16.msra.mxu0 %v3740
    %5120 = vmatpush.bf16.msra.mxu0 %v3736
    %5121 = vmatpush.bf16.msra.mxu0 %v3732
    %5122 = vmatpush.bf16.msra.mxu0 %v3728
    %5123 = vmatpush.bf16.msra.mxu0 %v3724
    %5124 = vmatmul.bf16.gmra.mxu0 %v370
    %v5125 = vpop.f32.mrf.mxu0
    %v5126 = vadd.f32 %v5112, %v5125
    %v5127 = vpop.f32.mrf.mxu0
    %v5128 = vadd.f32 %v5114, %v5127
    %5129 = vdwg.mxu0
    %5130 = vmatpush.bf16.msra.mxu0 %v3784
    %5131 = vmatpush.bf16.msra.mxu0 %v3780
    %5132 = vmatpush.bf16.msra.mxu0 %v3776
    %5133 = vmatpush.bf16.msra.mxu0 %v3772
    %5134 = vmatpush.bf16.msra.mxu0 %v3768
    %5135 = vmatpush.bf16.msra.mxu0 %v3764
    %5136 = vmatpush.bf16.msra.mxu0 %v3760
    %5137 = vmatpush.bf16.msra.mxu0 %v3756
    %5138 = vmatmul.bf16.gmra.mxu0 %v371
    %v5139 = vpop.f32.mrf.mxu0
    %v5140 = vadd.f32 %v5126, %v5139
    %v5141 = vpop.f32.mrf.mxu0
    %v5142 = vadd.f32 %v5128, %v5141
    %5143 = vdwg.mxu0
    %5144 = vmatpush.bf16.msra.mxu0 %v3816
    %5145 = vmatpush.bf16.msra.mxu0 %v3812
    %5146 = vmatpush.bf16.msra.mxu0 %v3808
    %5147 = vmatpush.bf16.msra.mxu0 %v3804
    %5148 = vmatpush.bf16.msra.mxu0 %v3800
    %5149 = vmatpush.bf16.msra.mxu0 %v3796
    %5150 = vmatpush.bf16.msra.mxu0 %v3792
    %5151 = vmatpush.bf16.msra.mxu0 %v3788
    %5152 = vmatmul.bf16.gmra.mxu0 %v372
    %v5153 = vpop.f32.mrf.mxu0
    %v5154 = vadd.f32 %v5140, %v5153
    %v5155 = vpop.f32.mrf.mxu0
    %v5156 = vadd.f32 %v5142, %v5155
    %5157 = vdwg.mxu0
    %5158 = vmatpush.bf16.msra.mxu0 %v3848
    %5159 = vmatpush.bf16.msra.mxu0 %v3844
    %5160 = vmatpush.bf16.msra.mxu0 %v3840
    %5161 = vmatpush.bf16.msra.mxu0 %v3836
    %5162 = vmatpush.bf16.msra.mxu0 %v3832
    %5163 = vmatpush.bf16.msra.mxu0 %v3828
    %5164 = vmatpush.bf16.msra.mxu0 %v3824
    %5165 = vmatpush.bf16.msra.mxu0 %v3820
    %5166 = vmatmul.bf16.gmra.mxu0 %v373
    %v5167 = vpop.f32.mrf.mxu0
    %v5168 = vadd.f32 %v5154, %v5167
    %v5169 = vpop.f32.mrf.mxu0
    %v5170 = vadd.f32 %v5156, %v5169
    %5171 = vdwg.mxu0
    %5172 = vmatpush.bf16.msra.mxu0 %v3880
    %5173 = vmatpush.bf16.msra.mxu0 %v3876
    %5174 = vmatpush.bf16.msra.mxu0 %v3872
    %5175 = vmatpush.bf16.msra.mxu0 %v3868
    %5176 = vmatpush.bf16.msra.mxu0 %v3864
    %5177 = vmatpush.bf16.msra.mxu0 %v3860
    %5178 = vmatpush.bf16.msra.mxu0 %v3856
    %5179 = vmatpush.bf16.msra.mxu0 %v3852
    %5180 = vmatmul.bf16.gmra.mxu0 %v374
    %v5181 = vpop.f32.mrf.mxu0
    %v5182 = vadd.f32 %v5168, %v5181
    %v5183 = vpop.f32.mrf.mxu0
    %v5184 = vadd.f32 %v5170, %v5183
    %5185 = vdwg.mxu0
    %5186 = vmatpush.bf16.msra.mxu0 %v3912
    %5187 = vmatpush.bf16.msra.mxu0 %v3908
    %5188 = vmatpush.bf16.msra.mxu0 %v3904
    %5189 = vmatpush.bf16.msra.mxu0 %v3900
    %5190 = vmatpush.bf16.msra.mxu0 %v3896
    %5191 = vmatpush.bf16.msra.mxu0 %v3892
    %5192 = vmatpush.bf16.msra.mxu0 %v3888
    %5193 = vmatpush.bf16.msra.mxu0 %v3884
    %5194 = vmatmul.bf16.gmra.mxu0 %v375
    %v5195 = vpop.f32.mrf.mxu0
    %v5196 = vadd.f32 %v5182, %v5195
    %v5197 = vpop.f32.mrf.mxu0
    %v5198 = vadd.f32 %v5184, %v5197
    %5199 = vdwg.mxu0
    %5200 = vmatpush.bf16.msra.mxu0 %v3944
    %5201 = vmatpush.bf16.msra.mxu0 %v3940
    %5202 = vmatpush.bf16.msra.mxu0 %v3936
    %5203 = vmatpush.bf16.msra.mxu0 %v3932
    %5204 = vmatpush.bf16.msra.mxu0 %v3928
    %5205 = vmatpush.bf16.msra.mxu0 %v3924
    %5206 = vmatpush.bf16.msra.mxu0 %v3920
    %5207 = vmatpush.bf16.msra.mxu0 %v3916
    %5208 = vmatmul.bf16.gmra.mxu0 %v376
    %v5209 = vpop.f32.mrf.mxu0
    %v5210 = vadd.f32 %v5196, %v5209
    %v5211 = vpop.f32.mrf.mxu0
    %v5212 = vadd.f32 %v5198, %v5211
    %5213 = vdwg.mxu0
    %5214 = vmatpush.bf16.msra.mxu0 %v3976
    %5215 = vmatpush.bf16.msra.mxu0 %v3972
    %5216 = vmatpush.bf16.msra.mxu0 %v3968
    %5217 = vmatpush.bf16.msra.mxu0 %v3964
    %5218 = vmatpush.bf16.msra.mxu0 %v3960
    %5219 = vmatpush.bf16.msra.mxu0 %v3956
    %5220 = vmatpush.bf16.msra.mxu0 %v3952
    %5221 = vmatpush.bf16.msra.mxu0 %v3948
    %5222 = vmatmul.bf16.gmra.mxu0 %v377
    %v5223 = vpop.f32.mrf.mxu0
    %v5224 = vadd.f32 %v5210, %v5223
    %v5225 = vpop.f32.mrf.mxu0
    %v5226 = vadd.f32 %v5212, %v5225
    %5227 = vdwg.mxu0
    %5228 = vmatpush.bf16.msra.mxu0 %v4008
    %5229 = vmatpush.bf16.msra.mxu0 %v4004
    %5230 = vmatpush.bf16.msra.mxu0 %v4000
    %5231 = vmatpush.bf16.msra.mxu0 %v3996
    %5232 = vmatpush.bf16.msra.mxu0 %v3992
    %5233 = vmatpush.bf16.msra.mxu0 %v3988
    %5234 = vmatpush.bf16.msra.mxu0 %v3984
    %5235 = vmatpush.bf16.msra.mxu0 %v3980
    %5236 = vmatmul.bf16.gmra.mxu0 %v378
    %v5237 = vpop.f32.mrf.mxu0
    %v5238 = vadd.f32 %v5224, %v5237
    %v5239 = vpop.f32.mrf.mxu0
    %v5240 = vadd.f32 %v5226, %v5239
    %5241 = vdwg.mxu0
    %5242 = vmatpush.bf16.msra.mxu0 %v4040
    %5243 = vmatpush.bf16.msra.mxu0 %v4036
    %5244 = vmatpush.bf16.msra.mxu0 %v4032
    %5245 = vmatpush.bf16.msra.mxu0 %v4028
    %5246 = vmatpush.bf16.msra.mxu0 %v4024
    %5247 = vmatpush.bf16.msra.mxu0 %v4020
    %5248 = vmatpush.bf16.msra.mxu0 %v4016
    %5249 = vmatpush.bf16.msra.mxu0 %v4012
    %5250 = vmatmul.bf16.gmra.mxu0 %v379
    %v5251 = vpop.f32.mrf.mxu0
    %v5252 = vadd.f32 %v5238, %v5251
    %v5253 = vpop.f32.mrf.mxu0
    %v5254 = vadd.f32 %v5240, %v5253
    %5255 = vdwg.mxu0
    %5256 = vmatpush.bf16.msra.mxu0 %v4072
    %5257 = vmatpush.bf16.msra.mxu0 %v4068
    %5258 = vmatpush.bf16.msra.mxu0 %v4064
    %5259 = vmatpush.bf16.msra.mxu0 %v4060
    %5260 = vmatpush.bf16.msra.mxu0 %v4056
    %5261 = vmatpush.bf16.msra.mxu0 %v4052
    %5262 = vmatpush.bf16.msra.mxu0 %v4048
    %5263 = vmatpush.bf16.msra.mxu0 %v4044
    %5264 = vmatmul.bf16.gmra.mxu0 %v380
    %v5265 = vpop.f32.mrf.mxu0
    %v5266 = vadd.f32 %v5252, %v5265
    %v5267 = vpop.f32.mrf.mxu0
    %v5268 = vadd.f32 %v5254, %v5267
    %5269 = vdwg.mxu0
    %5270 = vmatpush.bf16.msra.mxu0 %v4104
    %5271 = vmatpush.bf16.msra.mxu0 %v4100
    %5272 = vmatpush.bf16.msra.mxu0 %v4096
    %5273 = vmatpush.bf16.msra.mxu0 %v4092
    %5274 = vmatpush.bf16.msra.mxu0 %v4088
    %5275 = vmatpush.bf16.msra.mxu0 %v4084
    %5276 = vmatpush.bf16.msra.mxu0 %v4080
    %5277 = vmatpush.bf16.msra.mxu0 %v4076
    %5278 = vmatmul.bf16.gmra.mxu0 %v381
    %v5279 = vpop.f32.mrf.mxu0
    %v5280 = vadd.f32 %v5266, %v5279
    %v5281 = vpop.f32.mrf.mxu0
    %v5282 = vadd.f32 %v5268, %v5281
    %5283 = vdwg.mxu0
    %5284 = vmatpush.bf16.msra.mxu0 %v4136
    %5285 = vmatpush.bf16.msra.mxu0 %v4132
    %5286 = vmatpush.bf16.msra.mxu0 %v4128
    %5287 = vmatpush.bf16.msra.mxu0 %v4124
    %5288 = vmatpush.bf16.msra.mxu0 %v4120
    %5289 = vmatpush.bf16.msra.mxu0 %v4116
    %5290 = vmatpush.bf16.msra.mxu0 %v4112
    %5291 = vmatpush.bf16.msra.mxu0 %v4108
    %5292 = vmatmul.bf16.gmra.mxu0 %v382
    %v5293 = vpop.f32.mrf.mxu0
    %v5294 = vadd.f32 %v5280, %v5293
    %v5295 = vpop.f32.mrf.mxu0
    %v5296 = vadd.f32 %v5282, %v5295
    %5297 = vdwg.mxu0
    %5298 = vmatpush.bf16.msra.mxu0 %v4168
    %5299 = vmatpush.bf16.msra.mxu0 %v4164
    %5300 = vmatpush.bf16.msra.mxu0 %v4160
    %5301 = vmatpush.bf16.msra.mxu0 %v4156
    %5302 = vmatpush.bf16.msra.mxu0 %v4152
    %5303 = vmatpush.bf16.msra.mxu0 %v4148
    %5304 = vmatpush.bf16.msra.mxu0 %v4144
    %5305 = vmatpush.bf16.msra.mxu0 %v4140
    %5306 = vmatmul.bf16.gmra.mxu0 %v383
    %v5307 = vpop.f32.mrf.mxu0
    %v5308 = vadd.f32 %v5294, %v5307
    %v5309 = vpop.f32.mrf.mxu0
    %v5310 = vadd.f32 %v5296, %v5309
    %5311 = vdwg.mxu0
    %5312 = vmatpush.bf16.msra.mxu0 %v4200
    %5313 = vmatpush.bf16.msra.mxu0 %v4196
    %5314 = vmatpush.bf16.msra.mxu0 %v4192
    %5315 = vmatpush.bf16.msra.mxu0 %v4188
    %5316 = vmatpush.bf16.msra.mxu0 %v4184
    %5317 = vmatpush.bf16.msra.mxu0 %v4180
    %5318 = vmatpush.bf16.msra.mxu0 %v4176
    %5319 = vmatpush.bf16.msra.mxu0 %v4172
    %5320 = vmatmul.bf16.gmra.mxu0 %v384
    %v5321 = vpop.f32.mrf.mxu0
    %v5322 = vadd.f32 %v5308, %v5321
    %v5323 = vpop.f32.mrf.mxu0
    %v5324 = vadd.f32 %v5310, %v5323
    %5325 = vdwg.mxu0
    %5326 = vmatpush.bf16.msra.mxu0 %v4232
    %5327 = vmatpush.bf16.msra.mxu0 %v4228
    %5328 = vmatpush.bf16.msra.mxu0 %v4224
    %5329 = vmatpush.bf16.msra.mxu0 %v4220
    %5330 = vmatpush.bf16.msra.mxu0 %v4216
    %5331 = vmatpush.bf16.msra.mxu0 %v4212
    %5332 = vmatpush.bf16.msra.mxu0 %v4208
    %5333 = vmatpush.bf16.msra.mxu0 %v4204
    %5334 = vmatmul.bf16.gmra.mxu0 %v385
    %v5335 = vpop.f32.mrf.mxu0
    %v5336 = vadd.f32 %v5322, %v5335
    %v5337 = vpop.f32.mrf.mxu0
    %v5338 = vadd.f32 %v5324, %v5337
    %5339 = vdwg.mxu0
    %5340 = vmatpush.bf16.msra.mxu0 %v3497
    %5341 = vmatpush.bf16.msra.mxu0 %v3493
    %5342 = vmatpush.bf16.msra.mxu0 %v3489
    %5343 = vmatpush.bf16.msra.mxu0 %v3485
    %5344 = vmatpush.bf16.msra.mxu0 %v3481
    %5345 = vmatpush.bf16.msra.mxu0 %v3477
    %5346 = vmatpush.bf16.msra.mxu0 %v3473
    %5347 = vmatpush.bf16.msra.mxu0 %v3469
    %5348 = vmatmul.bf16.gmra.mxu0 %v362
    %v5349 = vpop.f32.mrf.mxu0
    %v5350 = vadd.f32 %v1157, %v5349
    %v5351 = vpop.f32.mrf.mxu0
    %v5352 = vadd.f32 %v1157, %v5351
    %5353 = vdwg.mxu0
    %5354 = vmatpush.bf16.msra.mxu0 %v3529
    %5355 = vmatpush.bf16.msra.mxu0 %v3525
    %5356 = vmatpush.bf16.msra.mxu0 %v3521
    %5357 = vmatpush.bf16.msra.mxu0 %v3517
    %5358 = vmatpush.bf16.msra.mxu0 %v3513
    %5359 = vmatpush.bf16.msra.mxu0 %v3509
    %5360 = vmatpush.bf16.msra.mxu0 %v3505
    %5361 = vmatpush.bf16.msra.mxu0 %v3501
    %5362 = vmatmul.bf16.gmra.mxu0 %v363
    %v5363 = vpop.f32.mrf.mxu0
    %v5364 = vadd.f32 %v5350, %v5363
    %v5365 = vpop.f32.mrf.mxu0
    %v5366 = vadd.f32 %v5352, %v5365
    %5367 = vdwg.mxu0
    %5368 = vmatpush.bf16.msra.mxu0 %v3561
    %5369 = vmatpush.bf16.msra.mxu0 %v3557
    %5370 = vmatpush.bf16.msra.mxu0 %v3553
    %5371 = vmatpush.bf16.msra.mxu0 %v3549
    %5372 = vmatpush.bf16.msra.mxu0 %v3545
    %5373 = vmatpush.bf16.msra.mxu0 %v3541
    %5374 = vmatpush.bf16.msra.mxu0 %v3537
    %5375 = vmatpush.bf16.msra.mxu0 %v3533
    %5376 = vmatmul.bf16.gmra.mxu0 %v364
    %v5377 = vpop.f32.mrf.mxu0
    %v5378 = vadd.f32 %v5364, %v5377
    %v5379 = vpop.f32.mrf.mxu0
    %v5380 = vadd.f32 %v5366, %v5379
    %5381 = vdwg.mxu0
    %5382 = vmatpush.bf16.msra.mxu0 %v3593
    %5383 = vmatpush.bf16.msra.mxu0 %v3589
    %5384 = vmatpush.bf16.msra.mxu0 %v3585
    %5385 = vmatpush.bf16.msra.mxu0 %v3581
    %5386 = vmatpush.bf16.msra.mxu0 %v3577
    %5387 = vmatpush.bf16.msra.mxu0 %v3573
    %5388 = vmatpush.bf16.msra.mxu0 %v3569
    %5389 = vmatpush.bf16.msra.mxu0 %v3565
    %5390 = vmatmul.bf16.gmra.mxu0 %v365
    %v5391 = vpop.f32.mrf.mxu0
    %v5392 = vadd.f32 %v5378, %v5391
    %v5393 = vpop.f32.mrf.mxu0
    %v5394 = vadd.f32 %v5380, %v5393
    %5395 = vdwg.mxu0
    %5396 = vmatpush.bf16.msra.mxu0 %v3625
    %5397 = vmatpush.bf16.msra.mxu0 %v3621
    %5398 = vmatpush.bf16.msra.mxu0 %v3617
    %5399 = vmatpush.bf16.msra.mxu0 %v3613
    %5400 = vmatpush.bf16.msra.mxu0 %v3609
    %5401 = vmatpush.bf16.msra.mxu0 %v3605
    %5402 = vmatpush.bf16.msra.mxu0 %v3601
    %5403 = vmatpush.bf16.msra.mxu0 %v3597
    %5404 = vmatmul.bf16.gmra.mxu0 %v366
    %v5405 = vpop.f32.mrf.mxu0
    %v5406 = vadd.f32 %v5392, %v5405
    %v5407 = vpop.f32.mrf.mxu0
    %v5408 = vadd.f32 %v5394, %v5407
    %5409 = vdwg.mxu0
    %5410 = vmatpush.bf16.msra.mxu0 %v3657
    %5411 = vmatpush.bf16.msra.mxu0 %v3653
    %5412 = vmatpush.bf16.msra.mxu0 %v3649
    %5413 = vmatpush.bf16.msra.mxu0 %v3645
    %5414 = vmatpush.bf16.msra.mxu0 %v3641
    %5415 = vmatpush.bf16.msra.mxu0 %v3637
    %5416 = vmatpush.bf16.msra.mxu0 %v3633
    %5417 = vmatpush.bf16.msra.mxu0 %v3629
    %5418 = vmatmul.bf16.gmra.mxu0 %v367
    %v5419 = vpop.f32.mrf.mxu0
    %v5420 = vadd.f32 %v5406, %v5419
    %v5421 = vpop.f32.mrf.mxu0
    %v5422 = vadd.f32 %v5408, %v5421
    %5423 = vdwg.mxu0
    %5424 = vmatpush.bf16.msra.mxu0 %v3689
    %5425 = vmatpush.bf16.msra.mxu0 %v3685
    %5426 = vmatpush.bf16.msra.mxu0 %v3681
    %5427 = vmatpush.bf16.msra.mxu0 %v3677
    %5428 = vmatpush.bf16.msra.mxu0 %v3673
    %5429 = vmatpush.bf16.msra.mxu0 %v3669
    %5430 = vmatpush.bf16.msra.mxu0 %v3665
    %5431 = vmatpush.bf16.msra.mxu0 %v3661
    %5432 = vmatmul.bf16.gmra.mxu0 %v368
    %v5433 = vpop.f32.mrf.mxu0
    %v5434 = vadd.f32 %v5420, %v5433
    %v5435 = vpop.f32.mrf.mxu0
    %v5436 = vadd.f32 %v5422, %v5435
    %5437 = vdwg.mxu0
    %5438 = vmatpush.bf16.msra.mxu0 %v3721
    %5439 = vmatpush.bf16.msra.mxu0 %v3717
    %5440 = vmatpush.bf16.msra.mxu0 %v3713
    %5441 = vmatpush.bf16.msra.mxu0 %v3709
    %5442 = vmatpush.bf16.msra.mxu0 %v3705
    %5443 = vmatpush.bf16.msra.mxu0 %v3701
    %5444 = vmatpush.bf16.msra.mxu0 %v3697
    %5445 = vmatpush.bf16.msra.mxu0 %v3693
    %5446 = vmatmul.bf16.gmra.mxu0 %v369
    %v5447 = vpop.f32.mrf.mxu0
    %v5448 = vadd.f32 %v5434, %v5447
    %v5449 = vpop.f32.mrf.mxu0
    %v5450 = vadd.f32 %v5436, %v5449
    %5451 = vdwg.mxu0
    %5452 = vmatpush.bf16.msra.mxu0 %v3753
    %5453 = vmatpush.bf16.msra.mxu0 %v3749
    %5454 = vmatpush.bf16.msra.mxu0 %v3745
    %5455 = vmatpush.bf16.msra.mxu0 %v3741
    %5456 = vmatpush.bf16.msra.mxu0 %v3737
    %5457 = vmatpush.bf16.msra.mxu0 %v3733
    %5458 = vmatpush.bf16.msra.mxu0 %v3729
    %5459 = vmatpush.bf16.msra.mxu0 %v3725
    %5460 = vmatmul.bf16.gmra.mxu0 %v370
    %v5461 = vpop.f32.mrf.mxu0
    %v5462 = vadd.f32 %v5448, %v5461
    %v5463 = vpop.f32.mrf.mxu0
    %v5464 = vadd.f32 %v5450, %v5463
    %5465 = vdwg.mxu0
    %5466 = vmatpush.bf16.msra.mxu0 %v3785
    %5467 = vmatpush.bf16.msra.mxu0 %v3781
    %5468 = vmatpush.bf16.msra.mxu0 %v3777
    %5469 = vmatpush.bf16.msra.mxu0 %v3773
    %5470 = vmatpush.bf16.msra.mxu0 %v3769
    %5471 = vmatpush.bf16.msra.mxu0 %v3765
    %5472 = vmatpush.bf16.msra.mxu0 %v3761
    %5473 = vmatpush.bf16.msra.mxu0 %v3757
    %5474 = vmatmul.bf16.gmra.mxu0 %v371
    %v5475 = vpop.f32.mrf.mxu0
    %v5476 = vadd.f32 %v5462, %v5475
    %v5477 = vpop.f32.mrf.mxu0
    %v5478 = vadd.f32 %v5464, %v5477
    %5479 = vdwg.mxu0
    %5480 = vmatpush.bf16.msra.mxu0 %v3817
    %5481 = vmatpush.bf16.msra.mxu0 %v3813
    %5482 = vmatpush.bf16.msra.mxu0 %v3809
    %5483 = vmatpush.bf16.msra.mxu0 %v3805
    %5484 = vmatpush.bf16.msra.mxu0 %v3801
    %5485 = vmatpush.bf16.msra.mxu0 %v3797
    %5486 = vmatpush.bf16.msra.mxu0 %v3793
    %5487 = vmatpush.bf16.msra.mxu0 %v3789
    %5488 = vmatmul.bf16.gmra.mxu0 %v372
    %v5489 = vpop.f32.mrf.mxu0
    %v5490 = vadd.f32 %v5476, %v5489
    %v5491 = vpop.f32.mrf.mxu0
    %v5492 = vadd.f32 %v5478, %v5491
    %5493 = vdwg.mxu0
    %5494 = vmatpush.bf16.msra.mxu0 %v3849
    %5495 = vmatpush.bf16.msra.mxu0 %v3845
    %5496 = vmatpush.bf16.msra.mxu0 %v3841
    %5497 = vmatpush.bf16.msra.mxu0 %v3837
    %5498 = vmatpush.bf16.msra.mxu0 %v3833
    %5499 = vmatpush.bf16.msra.mxu0 %v3829
    %5500 = vmatpush.bf16.msra.mxu0 %v3825
    %5501 = vmatpush.bf16.msra.mxu0 %v3821
    %5502 = vmatmul.bf16.gmra.mxu0 %v373
    %v5503 = vpop.f32.mrf.mxu0
    %v5504 = vadd.f32 %v5490, %v5503
    %v5505 = vpop.f32.mrf.mxu0
    %v5506 = vadd.f32 %v5492, %v5505
    %5507 = vdwg.mxu0
    %5508 = vmatpush.bf16.msra.mxu0 %v3881
    %5509 = vmatpush.bf16.msra.mxu0 %v3877
    %5510 = vmatpush.bf16.msra.mxu0 %v3873
    %5511 = vmatpush.bf16.msra.mxu0 %v3869
    %5512 = vmatpush.bf16.msra.mxu0 %v3865
    %5513 = vmatpush.bf16.msra.mxu0 %v3861
    %5514 = vmatpush.bf16.msra.mxu0 %v3857
    %5515 = vmatpush.bf16.msra.mxu0 %v3853
    %5516 = vmatmul.bf16.gmra.mxu0 %v374
    %v5517 = vpop.f32.mrf.mxu0
    %v5518 = vadd.f32 %v5504, %v5517
    %v5519 = vpop.f32.mrf.mxu0
    %v5520 = vadd.f32 %v5506, %v5519
    %5521 = vdwg.mxu0
    %5522 = vmatpush.bf16.msra.mxu0 %v3913
    %5523 = vmatpush.bf16.msra.mxu0 %v3909
    %5524 = vmatpush.bf16.msra.mxu0 %v3905
    %5525 = vmatpush.bf16.msra.mxu0 %v3901
    %5526 = vmatpush.bf16.msra.mxu0 %v3897
    %5527 = vmatpush.bf16.msra.mxu0 %v3893
    %5528 = vmatpush.bf16.msra.mxu0 %v3889
    %5529 = vmatpush.bf16.msra.mxu0 %v3885
    %5530 = vmatmul.bf16.gmra.mxu0 %v375
    %v5531 = vpop.f32.mrf.mxu0
    %v5532 = vadd.f32 %v5518, %v5531
    %v5533 = vpop.f32.mrf.mxu0
    %v5534 = vadd.f32 %v5520, %v5533
    %5535 = vdwg.mxu0
    %5536 = vmatpush.bf16.msra.mxu0 %v3945
    %5537 = vmatpush.bf16.msra.mxu0 %v3941
    %5538 = vmatpush.bf16.msra.mxu0 %v3937
    %5539 = vmatpush.bf16.msra.mxu0 %v3933
    %5540 = vmatpush.bf16.msra.mxu0 %v3929
    %5541 = vmatpush.bf16.msra.mxu0 %v3925
    %5542 = vmatpush.bf16.msra.mxu0 %v3921
    %5543 = vmatpush.bf16.msra.mxu0 %v3917
    %5544 = vmatmul.bf16.gmra.mxu0 %v376
    %v5545 = vpop.f32.mrf.mxu0
    %v5546 = vadd.f32 %v5532, %v5545
    %v5547 = vpop.f32.mrf.mxu0
    %v5548 = vadd.f32 %v5534, %v5547
    %5549 = vdwg.mxu0
    %5550 = vmatpush.bf16.msra.mxu0 %v3977
    %5551 = vmatpush.bf16.msra.mxu0 %v3973
    %5552 = vmatpush.bf16.msra.mxu0 %v3969
    %5553 = vmatpush.bf16.msra.mxu0 %v3965
    %5554 = vmatpush.bf16.msra.mxu0 %v3961
    %5555 = vmatpush.bf16.msra.mxu0 %v3957
    %5556 = vmatpush.bf16.msra.mxu0 %v3953
    %5557 = vmatpush.bf16.msra.mxu0 %v3949
    %5558 = vmatmul.bf16.gmra.mxu0 %v377
    %v5559 = vpop.f32.mrf.mxu0
    %v5560 = vadd.f32 %v5546, %v5559
    %v5561 = vpop.f32.mrf.mxu0
    %v5562 = vadd.f32 %v5548, %v5561
    %5563 = vdwg.mxu0
    %5564 = vmatpush.bf16.msra.mxu0 %v4009
    %5565 = vmatpush.bf16.msra.mxu0 %v4005
    %5566 = vmatpush.bf16.msra.mxu0 %v4001
    %5567 = vmatpush.bf16.msra.mxu0 %v3997
    %5568 = vmatpush.bf16.msra.mxu0 %v3993
    %5569 = vmatpush.bf16.msra.mxu0 %v3989
    %5570 = vmatpush.bf16.msra.mxu0 %v3985
    %5571 = vmatpush.bf16.msra.mxu0 %v3981
    %5572 = vmatmul.bf16.gmra.mxu0 %v378
    %v5573 = vpop.f32.mrf.mxu0
    %v5574 = vadd.f32 %v5560, %v5573
    %v5575 = vpop.f32.mrf.mxu0
    %v5576 = vadd.f32 %v5562, %v5575
    %5577 = vdwg.mxu0
    %5578 = vmatpush.bf16.msra.mxu0 %v4041
    %5579 = vmatpush.bf16.msra.mxu0 %v4037
    %5580 = vmatpush.bf16.msra.mxu0 %v4033
    %5581 = vmatpush.bf16.msra.mxu0 %v4029
    %5582 = vmatpush.bf16.msra.mxu0 %v4025
    %5583 = vmatpush.bf16.msra.mxu0 %v4021
    %5584 = vmatpush.bf16.msra.mxu0 %v4017
    %5585 = vmatpush.bf16.msra.mxu0 %v4013
    %5586 = vmatmul.bf16.gmra.mxu0 %v379
    %v5587 = vpop.f32.mrf.mxu0
    %v5588 = vadd.f32 %v5574, %v5587
    %v5589 = vpop.f32.mrf.mxu0
    %v5590 = vadd.f32 %v5576, %v5589
    %5591 = vdwg.mxu0
    %5592 = vmatpush.bf16.msra.mxu0 %v4073
    %5593 = vmatpush.bf16.msra.mxu0 %v4069
    %5594 = vmatpush.bf16.msra.mxu0 %v4065
    %5595 = vmatpush.bf16.msra.mxu0 %v4061
    %5596 = vmatpush.bf16.msra.mxu0 %v4057
    %5597 = vmatpush.bf16.msra.mxu0 %v4053
    %5598 = vmatpush.bf16.msra.mxu0 %v4049
    %5599 = vmatpush.bf16.msra.mxu0 %v4045
    %5600 = vmatmul.bf16.gmra.mxu0 %v380
    %v5601 = vpop.f32.mrf.mxu0
    %v5602 = vadd.f32 %v5588, %v5601
    %v5603 = vpop.f32.mrf.mxu0
    %v5604 = vadd.f32 %v5590, %v5603
    %5605 = vdwg.mxu0
    %5606 = vmatpush.bf16.msra.mxu0 %v4105
    %5607 = vmatpush.bf16.msra.mxu0 %v4101
    %5608 = vmatpush.bf16.msra.mxu0 %v4097
    %5609 = vmatpush.bf16.msra.mxu0 %v4093
    %5610 = vmatpush.bf16.msra.mxu0 %v4089
    %5611 = vmatpush.bf16.msra.mxu0 %v4085
    %5612 = vmatpush.bf16.msra.mxu0 %v4081
    %5613 = vmatpush.bf16.msra.mxu0 %v4077
    %5614 = vmatmul.bf16.gmra.mxu0 %v381
    %v5615 = vpop.f32.mrf.mxu0
    %v5616 = vadd.f32 %v5602, %v5615
    %v5617 = vpop.f32.mrf.mxu0
    %v5618 = vadd.f32 %v5604, %v5617
    %5619 = vdwg.mxu0
    %5620 = vmatpush.bf16.msra.mxu0 %v4137
    %5621 = vmatpush.bf16.msra.mxu0 %v4133
    %5622 = vmatpush.bf16.msra.mxu0 %v4129
    %5623 = vmatpush.bf16.msra.mxu0 %v4125
    %5624 = vmatpush.bf16.msra.mxu0 %v4121
    %5625 = vmatpush.bf16.msra.mxu0 %v4117
    %5626 = vmatpush.bf16.msra.mxu0 %v4113
    %5627 = vmatpush.bf16.msra.mxu0 %v4109
    %5628 = vmatmul.bf16.gmra.mxu0 %v382
    %v5629 = vpop.f32.mrf.mxu0
    %v5630 = vadd.f32 %v5616, %v5629
    %v5631 = vpop.f32.mrf.mxu0
    %v5632 = vadd.f32 %v5618, %v5631
    %5633 = vdwg.mxu0
    %5634 = vmatpush.bf16.msra.mxu0 %v4169
    %5635 = vmatpush.bf16.msra.mxu0 %v4165
    %5636 = vmatpush.bf16.msra.mxu0 %v4161
    %5637 = vmatpush.bf16.msra.mxu0 %v4157
    %5638 = vmatpush.bf16.msra.mxu0 %v4153
    %5639 = vmatpush.bf16.msra.mxu0 %v4149
    %5640 = vmatpush.bf16.msra.mxu0 %v4145
    %5641 = vmatpush.bf16.msra.mxu0 %v4141
    %5642 = vmatmul.bf16.gmra.mxu0 %v383
    %v5643 = vpop.f32.mrf.mxu0
    %v5644 = vadd.f32 %v5630, %v5643
    %v5645 = vpop.f32.mrf.mxu0
    %v5646 = vadd.f32 %v5632, %v5645
    %5647 = vdwg.mxu0
    %5648 = vmatpush.bf16.msra.mxu0 %v4201
    %5649 = vmatpush.bf16.msra.mxu0 %v4197
    %5650 = vmatpush.bf16.msra.mxu0 %v4193
    %5651 = vmatpush.bf16.msra.mxu0 %v4189
    %5652 = vmatpush.bf16.msra.mxu0 %v4185
    %5653 = vmatpush.bf16.msra.mxu0 %v4181
    %5654 = vmatpush.bf16.msra.mxu0 %v4177
    %5655 = vmatpush.bf16.msra.mxu0 %v4173
    %5656 = vmatmul.bf16.gmra.mxu0 %v384
    %v5657 = vpop.f32.mrf.mxu0
    %v5658 = vadd.f32 %v5644, %v5657
    %v5659 = vpop.f32.mrf.mxu0
    %v5660 = vadd.f32 %v5646, %v5659
    %5661 = vdwg.mxu0
    %5662 = vmatpush.bf16.msra.mxu0 %v4233
    %5663 = vmatpush.bf16.msra.mxu0 %v4229
    %5664 = vmatpush.bf16.msra.mxu0 %v4225
    %5665 = vmatpush.bf16.msra.mxu0 %v4221
    %5666 = vmatpush.bf16.msra.mxu0 %v4217
    %5667 = vmatpush.bf16.msra.mxu0 %v4213
    %5668 = vmatpush.bf16.msra.mxu0 %v4209
    %5669 = vmatpush.bf16.msra.mxu0 %v4205
    %5670 = vmatmul.bf16.gmra.mxu0 %v385
    %v5671 = vpop.f32.mrf.mxu0
    %v5672 = vadd.f32 %v5658, %v5671
    %v5673 = vpop.f32.mrf.mxu0
    %v5674 = vadd.f32 %v5660, %v5673
    %5675 = vdwg.mxu0
    %5676 = vmatpush.bf16.msra.mxu0 %v3498
    %5677 = vmatpush.bf16.msra.mxu0 %v3494
    %5678 = vmatpush.bf16.msra.mxu0 %v3490
    %5679 = vmatpush.bf16.msra.mxu0 %v3486
    %5680 = vmatpush.bf16.msra.mxu0 %v3482
    %5681 = vmatpush.bf16.msra.mxu0 %v3478
    %5682 = vmatpush.bf16.msra.mxu0 %v3474
    %5683 = vmatpush.bf16.msra.mxu0 %v3470
    %5684 = vmatmul.bf16.gmra.mxu0 %v362
    %v5685 = vpop.f32.mrf.mxu0
    %v5686 = vadd.f32 %v1158, %v5685
    %v5687 = vpop.f32.mrf.mxu0
    %v5688 = vadd.f32 %v1158, %v5687
    %5689 = vdwg.mxu0
    %5690 = vmatpush.bf16.msra.mxu0 %v3530
    %5691 = vmatpush.bf16.msra.mxu0 %v3526
    %5692 = vmatpush.bf16.msra.mxu0 %v3522
    %5693 = vmatpush.bf16.msra.mxu0 %v3518
    %5694 = vmatpush.bf16.msra.mxu0 %v3514
    %5695 = vmatpush.bf16.msra.mxu0 %v3510
    %5696 = vmatpush.bf16.msra.mxu0 %v3506
    %5697 = vmatpush.bf16.msra.mxu0 %v3502
    %5698 = vmatmul.bf16.gmra.mxu0 %v363
    %v5699 = vpop.f32.mrf.mxu0
    %v5700 = vadd.f32 %v5686, %v5699
    %v5701 = vpop.f32.mrf.mxu0
    %v5702 = vadd.f32 %v5688, %v5701
    %5703 = vdwg.mxu0
    %5704 = vmatpush.bf16.msra.mxu0 %v3562
    %5705 = vmatpush.bf16.msra.mxu0 %v3558
    %5706 = vmatpush.bf16.msra.mxu0 %v3554
    %5707 = vmatpush.bf16.msra.mxu0 %v3550
    %5708 = vmatpush.bf16.msra.mxu0 %v3546
    %5709 = vmatpush.bf16.msra.mxu0 %v3542
    %5710 = vmatpush.bf16.msra.mxu0 %v3538
    %5711 = vmatpush.bf16.msra.mxu0 %v3534
    %5712 = vmatmul.bf16.gmra.mxu0 %v364
    %v5713 = vpop.f32.mrf.mxu0
    %v5714 = vadd.f32 %v5700, %v5713
    %v5715 = vpop.f32.mrf.mxu0
    %v5716 = vadd.f32 %v5702, %v5715
    %5717 = vdwg.mxu0
    %5718 = vmatpush.bf16.msra.mxu0 %v3594
    %5719 = vmatpush.bf16.msra.mxu0 %v3590
    %5720 = vmatpush.bf16.msra.mxu0 %v3586
    %5721 = vmatpush.bf16.msra.mxu0 %v3582
    %5722 = vmatpush.bf16.msra.mxu0 %v3578
    %5723 = vmatpush.bf16.msra.mxu0 %v3574
    %5724 = vmatpush.bf16.msra.mxu0 %v3570
    %5725 = vmatpush.bf16.msra.mxu0 %v3566
    %5726 = vmatmul.bf16.gmra.mxu0 %v365
    %v5727 = vpop.f32.mrf.mxu0
    %v5728 = vadd.f32 %v5714, %v5727
    %v5729 = vpop.f32.mrf.mxu0
    %v5730 = vadd.f32 %v5716, %v5729
    %5731 = vdwg.mxu0
    %5732 = vmatpush.bf16.msra.mxu0 %v3626
    %5733 = vmatpush.bf16.msra.mxu0 %v3622
    %5734 = vmatpush.bf16.msra.mxu0 %v3618
    %5735 = vmatpush.bf16.msra.mxu0 %v3614
    %5736 = vmatpush.bf16.msra.mxu0 %v3610
    %5737 = vmatpush.bf16.msra.mxu0 %v3606
    %5738 = vmatpush.bf16.msra.mxu0 %v3602
    %5739 = vmatpush.bf16.msra.mxu0 %v3598
    %5740 = vmatmul.bf16.gmra.mxu0 %v366
    %v5741 = vpop.f32.mrf.mxu0
    %v5742 = vadd.f32 %v5728, %v5741
    %v5743 = vpop.f32.mrf.mxu0
    %v5744 = vadd.f32 %v5730, %v5743
    %5745 = vdwg.mxu0
    %5746 = vmatpush.bf16.msra.mxu0 %v3658
    %5747 = vmatpush.bf16.msra.mxu0 %v3654
    %5748 = vmatpush.bf16.msra.mxu0 %v3650
    %5749 = vmatpush.bf16.msra.mxu0 %v3646
    %5750 = vmatpush.bf16.msra.mxu0 %v3642
    %5751 = vmatpush.bf16.msra.mxu0 %v3638
    %5752 = vmatpush.bf16.msra.mxu0 %v3634
    %5753 = vmatpush.bf16.msra.mxu0 %v3630
    %5754 = vmatmul.bf16.gmra.mxu0 %v367
    %v5755 = vpop.f32.mrf.mxu0
    %v5756 = vadd.f32 %v5742, %v5755
    %v5757 = vpop.f32.mrf.mxu0
    %v5758 = vadd.f32 %v5744, %v5757
    %5759 = vdwg.mxu0
    %5760 = vmatpush.bf16.msra.mxu0 %v3690
    %5761 = vmatpush.bf16.msra.mxu0 %v3686
    %5762 = vmatpush.bf16.msra.mxu0 %v3682
    %5763 = vmatpush.bf16.msra.mxu0 %v3678
    %5764 = vmatpush.bf16.msra.mxu0 %v3674
    %5765 = vmatpush.bf16.msra.mxu0 %v3670
    %5766 = vmatpush.bf16.msra.mxu0 %v3666
    %5767 = vmatpush.bf16.msra.mxu0 %v3662
    %5768 = vmatmul.bf16.gmra.mxu0 %v368
    %v5769 = vpop.f32.mrf.mxu0
    %v5770 = vadd.f32 %v5756, %v5769
    %v5771 = vpop.f32.mrf.mxu0
    %v5772 = vadd.f32 %v5758, %v5771
    %5773 = vdwg.mxu0
    %5774 = vmatpush.bf16.msra.mxu0 %v3722
    %5775 = vmatpush.bf16.msra.mxu0 %v3718
    %5776 = vmatpush.bf16.msra.mxu0 %v3714
    %5777 = vmatpush.bf16.msra.mxu0 %v3710
    %5778 = vmatpush.bf16.msra.mxu0 %v3706
    %5779 = vmatpush.bf16.msra.mxu0 %v3702
    %5780 = vmatpush.bf16.msra.mxu0 %v3698
    %5781 = vmatpush.bf16.msra.mxu0 %v3694
    %5782 = vmatmul.bf16.gmra.mxu0 %v369
    %v5783 = vpop.f32.mrf.mxu0
    %v5784 = vadd.f32 %v5770, %v5783
    %v5785 = vpop.f32.mrf.mxu0
    %v5786 = vadd.f32 %v5772, %v5785
    %5787 = vdwg.mxu0
    %5788 = vmatpush.bf16.msra.mxu0 %v3754
    %5789 = vmatpush.bf16.msra.mxu0 %v3750
    %5790 = vmatpush.bf16.msra.mxu0 %v3746
    %5791 = vmatpush.bf16.msra.mxu0 %v3742
    %5792 = vmatpush.bf16.msra.mxu0 %v3738
    %5793 = vmatpush.bf16.msra.mxu0 %v3734
    %5794 = vmatpush.bf16.msra.mxu0 %v3730
    %5795 = vmatpush.bf16.msra.mxu0 %v3726
    %5796 = vmatmul.bf16.gmra.mxu0 %v370
    %v5797 = vpop.f32.mrf.mxu0
    %v5798 = vadd.f32 %v5784, %v5797
    %v5799 = vpop.f32.mrf.mxu0
    %v5800 = vadd.f32 %v5786, %v5799
    %5801 = vdwg.mxu0
    %5802 = vmatpush.bf16.msra.mxu0 %v3786
    %5803 = vmatpush.bf16.msra.mxu0 %v3782
    %5804 = vmatpush.bf16.msra.mxu0 %v3778
    %5805 = vmatpush.bf16.msra.mxu0 %v3774
    %5806 = vmatpush.bf16.msra.mxu0 %v3770
    %5807 = vmatpush.bf16.msra.mxu0 %v3766
    %5808 = vmatpush.bf16.msra.mxu0 %v3762
    %5809 = vmatpush.bf16.msra.mxu0 %v3758
    %5810 = vmatmul.bf16.gmra.mxu0 %v371
    %v5811 = vpop.f32.mrf.mxu0
    %v5812 = vadd.f32 %v5798, %v5811
    %v5813 = vpop.f32.mrf.mxu0
    %v5814 = vadd.f32 %v5800, %v5813
    %5815 = vdwg.mxu0
    %5816 = vmatpush.bf16.msra.mxu0 %v3818
    %5817 = vmatpush.bf16.msra.mxu0 %v3814
    %5818 = vmatpush.bf16.msra.mxu0 %v3810
    %5819 = vmatpush.bf16.msra.mxu0 %v3806
    %5820 = vmatpush.bf16.msra.mxu0 %v3802
    %5821 = vmatpush.bf16.msra.mxu0 %v3798
    %5822 = vmatpush.bf16.msra.mxu0 %v3794
    %5823 = vmatpush.bf16.msra.mxu0 %v3790
    %5824 = vmatmul.bf16.gmra.mxu0 %v372
    %v5825 = vpop.f32.mrf.mxu0
    %v5826 = vadd.f32 %v5812, %v5825
    %v5827 = vpop.f32.mrf.mxu0
    %v5828 = vadd.f32 %v5814, %v5827
    %5829 = vdwg.mxu0
    %5830 = vmatpush.bf16.msra.mxu0 %v3850
    %5831 = vmatpush.bf16.msra.mxu0 %v3846
    %5832 = vmatpush.bf16.msra.mxu0 %v3842
    %5833 = vmatpush.bf16.msra.mxu0 %v3838
    %5834 = vmatpush.bf16.msra.mxu0 %v3834
    %5835 = vmatpush.bf16.msra.mxu0 %v3830
    %5836 = vmatpush.bf16.msra.mxu0 %v3826
    %5837 = vmatpush.bf16.msra.mxu0 %v3822
    %5838 = vmatmul.bf16.gmra.mxu0 %v373
    %v5839 = vpop.f32.mrf.mxu0
    %v5840 = vadd.f32 %v5826, %v5839
    %v5841 = vpop.f32.mrf.mxu0
    %v5842 = vadd.f32 %v5828, %v5841
    %5843 = vdwg.mxu0
    %5844 = vmatpush.bf16.msra.mxu0 %v3882
    %5845 = vmatpush.bf16.msra.mxu0 %v3878
    %5846 = vmatpush.bf16.msra.mxu0 %v3874
    %5847 = vmatpush.bf16.msra.mxu0 %v3870
    %5848 = vmatpush.bf16.msra.mxu0 %v3866
    %5849 = vmatpush.bf16.msra.mxu0 %v3862
    %5850 = vmatpush.bf16.msra.mxu0 %v3858
    %5851 = vmatpush.bf16.msra.mxu0 %v3854
    %5852 = vmatmul.bf16.gmra.mxu0 %v374
    %v5853 = vpop.f32.mrf.mxu0
    %v5854 = vadd.f32 %v5840, %v5853
    %v5855 = vpop.f32.mrf.mxu0
    %v5856 = vadd.f32 %v5842, %v5855
    %5857 = vdwg.mxu0
    %5858 = vmatpush.bf16.msra.mxu0 %v3914
    %5859 = vmatpush.bf16.msra.mxu0 %v3910
    %5860 = vmatpush.bf16.msra.mxu0 %v3906
    %5861 = vmatpush.bf16.msra.mxu0 %v3902
    %5862 = vmatpush.bf16.msra.mxu0 %v3898
    %5863 = vmatpush.bf16.msra.mxu0 %v3894
    %5864 = vmatpush.bf16.msra.mxu0 %v3890
    %5865 = vmatpush.bf16.msra.mxu0 %v3886
    %5866 = vmatmul.bf16.gmra.mxu0 %v375
    %v5867 = vpop.f32.mrf.mxu0
    %v5868 = vadd.f32 %v5854, %v5867
    %v5869 = vpop.f32.mrf.mxu0
    %v5870 = vadd.f32 %v5856, %v5869
    %5871 = vdwg.mxu0
    %5872 = vmatpush.bf16.msra.mxu0 %v3946
    %5873 = vmatpush.bf16.msra.mxu0 %v3942
    %5874 = vmatpush.bf16.msra.mxu0 %v3938
    %5875 = vmatpush.bf16.msra.mxu0 %v3934
    %5876 = vmatpush.bf16.msra.mxu0 %v3930
    %5877 = vmatpush.bf16.msra.mxu0 %v3926
    %5878 = vmatpush.bf16.msra.mxu0 %v3922
    %5879 = vmatpush.bf16.msra.mxu0 %v3918
    %5880 = vmatmul.bf16.gmra.mxu0 %v376
    %v5881 = vpop.f32.mrf.mxu0
    %v5882 = vadd.f32 %v5868, %v5881
    %v5883 = vpop.f32.mrf.mxu0
    %v5884 = vadd.f32 %v5870, %v5883
    %5885 = vdwg.mxu0
    %5886 = vmatpush.bf16.msra.mxu0 %v3978
    %5887 = vmatpush.bf16.msra.mxu0 %v3974
    %5888 = vmatpush.bf16.msra.mxu0 %v3970
    %5889 = vmatpush.bf16.msra.mxu0 %v3966
    %5890 = vmatpush.bf16.msra.mxu0 %v3962
    %5891 = vmatpush.bf16.msra.mxu0 %v3958
    %5892 = vmatpush.bf16.msra.mxu0 %v3954
    %5893 = vmatpush.bf16.msra.mxu0 %v3950
    %5894 = vmatmul.bf16.gmra.mxu0 %v377
    %v5895 = vpop.f32.mrf.mxu0
    %v5896 = vadd.f32 %v5882, %v5895
    %v5897 = vpop.f32.mrf.mxu0
    %v5898 = vadd.f32 %v5884, %v5897
    %5899 = vdwg.mxu0
    %5900 = vmatpush.bf16.msra.mxu0 %v4010
    %5901 = vmatpush.bf16.msra.mxu0 %v4006
    %5902 = vmatpush.bf16.msra.mxu0 %v4002
    %5903 = vmatpush.bf16.msra.mxu0 %v3998
    %5904 = vmatpush.bf16.msra.mxu0 %v3994
    %5905 = vmatpush.bf16.msra.mxu0 %v3990
    %5906 = vmatpush.bf16.msra.mxu0 %v3986
    %5907 = vmatpush.bf16.msra.mxu0 %v3982
    %5908 = vmatmul.bf16.gmra.mxu0 %v378
    %v5909 = vpop.f32.mrf.mxu0
    %v5910 = vadd.f32 %v5896, %v5909
    %v5911 = vpop.f32.mrf.mxu0
    %v5912 = vadd.f32 %v5898, %v5911
    %5913 = vdwg.mxu0
    %5914 = vmatpush.bf16.msra.mxu0 %v4042
    %5915 = vmatpush.bf16.msra.mxu0 %v4038
    %5916 = vmatpush.bf16.msra.mxu0 %v4034
    %5917 = vmatpush.bf16.msra.mxu0 %v4030
    %5918 = vmatpush.bf16.msra.mxu0 %v4026
    %5919 = vmatpush.bf16.msra.mxu0 %v4022
    %5920 = vmatpush.bf16.msra.mxu0 %v4018
    %5921 = vmatpush.bf16.msra.mxu0 %v4014
    %5922 = vmatmul.bf16.gmra.mxu0 %v379
    %v5923 = vpop.f32.mrf.mxu0
    %v5924 = vadd.f32 %v5910, %v5923
    %v5925 = vpop.f32.mrf.mxu0
    %v5926 = vadd.f32 %v5912, %v5925
    %5927 = vdwg.mxu0
    %5928 = vmatpush.bf16.msra.mxu0 %v4074
    %5929 = vmatpush.bf16.msra.mxu0 %v4070
    %5930 = vmatpush.bf16.msra.mxu0 %v4066
    %5931 = vmatpush.bf16.msra.mxu0 %v4062
    %5932 = vmatpush.bf16.msra.mxu0 %v4058
    %5933 = vmatpush.bf16.msra.mxu0 %v4054
    %5934 = vmatpush.bf16.msra.mxu0 %v4050
    %5935 = vmatpush.bf16.msra.mxu0 %v4046
    %5936 = vmatmul.bf16.gmra.mxu0 %v380
    %v5937 = vpop.f32.mrf.mxu0
    %v5938 = vadd.f32 %v5924, %v5937
    %v5939 = vpop.f32.mrf.mxu0
    %v5940 = vadd.f32 %v5926, %v5939
    %5941 = vdwg.mxu0
    %5942 = vmatpush.bf16.msra.mxu0 %v4106
    %5943 = vmatpush.bf16.msra.mxu0 %v4102
    %5944 = vmatpush.bf16.msra.mxu0 %v4098
    %5945 = vmatpush.bf16.msra.mxu0 %v4094
    %5946 = vmatpush.bf16.msra.mxu0 %v4090
    %5947 = vmatpush.bf16.msra.mxu0 %v4086
    %5948 = vmatpush.bf16.msra.mxu0 %v4082
    %5949 = vmatpush.bf16.msra.mxu0 %v4078
    %5950 = vmatmul.bf16.gmra.mxu0 %v381
    %v5951 = vpop.f32.mrf.mxu0
    %v5952 = vadd.f32 %v5938, %v5951
    %v5953 = vpop.f32.mrf.mxu0
    %v5954 = vadd.f32 %v5940, %v5953
    %5955 = vdwg.mxu0
    %5956 = vmatpush.bf16.msra.mxu0 %v4138
    %5957 = vmatpush.bf16.msra.mxu0 %v4134
    %5958 = vmatpush.bf16.msra.mxu0 %v4130
    %5959 = vmatpush.bf16.msra.mxu0 %v4126
    %5960 = vmatpush.bf16.msra.mxu0 %v4122
    %5961 = vmatpush.bf16.msra.mxu0 %v4118
    %5962 = vmatpush.bf16.msra.mxu0 %v4114
    %5963 = vmatpush.bf16.msra.mxu0 %v4110
    %5964 = vmatmul.bf16.gmra.mxu0 %v382
    %v5965 = vpop.f32.mrf.mxu0
    %v5966 = vadd.f32 %v5952, %v5965
    %v5967 = vpop.f32.mrf.mxu0
    %v5968 = vadd.f32 %v5954, %v5967
    %5969 = vdwg.mxu0
    %5970 = vmatpush.bf16.msra.mxu0 %v4170
    %5971 = vmatpush.bf16.msra.mxu0 %v4166
    %5972 = vmatpush.bf16.msra.mxu0 %v4162
    %5973 = vmatpush.bf16.msra.mxu0 %v4158
    %5974 = vmatpush.bf16.msra.mxu0 %v4154
    %5975 = vmatpush.bf16.msra.mxu0 %v4150
    %5976 = vmatpush.bf16.msra.mxu0 %v4146
    %5977 = vmatpush.bf16.msra.mxu0 %v4142
    %5978 = vmatmul.bf16.gmra.mxu0 %v383
    %v5979 = vpop.f32.mrf.mxu0
    %v5980 = vadd.f32 %v5966, %v5979
    %v5981 = vpop.f32.mrf.mxu0
    %v5982 = vadd.f32 %v5968, %v5981
    %5983 = vdwg.mxu0
    %5984 = vmatpush.bf16.msra.mxu0 %v4202
    %5985 = vmatpush.bf16.msra.mxu0 %v4198
    %5986 = vmatpush.bf16.msra.mxu0 %v4194
    %5987 = vmatpush.bf16.msra.mxu0 %v4190
    %5988 = vmatpush.bf16.msra.mxu0 %v4186
    %5989 = vmatpush.bf16.msra.mxu0 %v4182
    %5990 = vmatpush.bf16.msra.mxu0 %v4178
    %5991 = vmatpush.bf16.msra.mxu0 %v4174
    %5992 = vmatmul.bf16.gmra.mxu0 %v384
    %v5993 = vpop.f32.mrf.mxu0
    %v5994 = vadd.f32 %v5980, %v5993
    %v5995 = vpop.f32.mrf.mxu0
    %v5996 = vadd.f32 %v5982, %v5995
    %5997 = vdwg.mxu0
    %5998 = vmatpush.bf16.msra.mxu0 %v4234
    %5999 = vmatpush.bf16.msra.mxu0 %v4230
    %6000 = vmatpush.bf16.msra.mxu0 %v4226
    %6001 = vmatpush.bf16.msra.mxu0 %v4222
    %6002 = vmatpush.bf16.msra.mxu0 %v4218
    %6003 = vmatpush.bf16.msra.mxu0 %v4214
    %6004 = vmatpush.bf16.msra.mxu0 %v4210
    %6005 = vmatpush.bf16.msra.mxu0 %v4206
    %6006 = vmatmul.bf16.gmra.mxu0 %v385
    %v6007 = vpop.f32.mrf.mxu0
    %v6008 = vadd.f32 %v5994, %v6007
    %v6009 = vpop.f32.mrf.mxu0
    %v6010 = vadd.f32 %v5996, %v6009
    %6011 = vdwg.mxu0
    %6012 = vmatpush.bf16.msra.mxu0 %v3499
    %6013 = vmatpush.bf16.msra.mxu0 %v3495
    %6014 = vmatpush.bf16.msra.mxu0 %v3491
    %6015 = vmatpush.bf16.msra.mxu0 %v3487
    %6016 = vmatpush.bf16.msra.mxu0 %v3483
    %6017 = vmatpush.bf16.msra.mxu0 %v3479
    %6018 = vmatpush.bf16.msra.mxu0 %v3475
    %6019 = vmatpush.bf16.msra.mxu0 %v3471
    %6020 = vmatmul.bf16.gmra.mxu0 %v362
    %v6021 = vpop.f32.mrf.mxu0
    %v6022 = vadd.f32 %v1159, %v6021
    %v6023 = vpop.f32.mrf.mxu0
    %v6024 = vadd.f32 %v1159, %v6023
    %6025 = vdwg.mxu0
    %6026 = vmatpush.bf16.msra.mxu0 %v3531
    %6027 = vmatpush.bf16.msra.mxu0 %v3527
    %6028 = vmatpush.bf16.msra.mxu0 %v3523
    %6029 = vmatpush.bf16.msra.mxu0 %v3519
    %6030 = vmatpush.bf16.msra.mxu0 %v3515
    %6031 = vmatpush.bf16.msra.mxu0 %v3511
    %6032 = vmatpush.bf16.msra.mxu0 %v3507
    %6033 = vmatpush.bf16.msra.mxu0 %v3503
    %6034 = vmatmul.bf16.gmra.mxu0 %v363
    %v6035 = vpop.f32.mrf.mxu0
    %v6036 = vadd.f32 %v6022, %v6035
    %v6037 = vpop.f32.mrf.mxu0
    %v6038 = vadd.f32 %v6024, %v6037
    %6039 = vdwg.mxu0
    %6040 = vmatpush.bf16.msra.mxu0 %v3563
    %6041 = vmatpush.bf16.msra.mxu0 %v3559
    %6042 = vmatpush.bf16.msra.mxu0 %v3555
    %6043 = vmatpush.bf16.msra.mxu0 %v3551
    %6044 = vmatpush.bf16.msra.mxu0 %v3547
    %6045 = vmatpush.bf16.msra.mxu0 %v3543
    %6046 = vmatpush.bf16.msra.mxu0 %v3539
    %6047 = vmatpush.bf16.msra.mxu0 %v3535
    %6048 = vmatmul.bf16.gmra.mxu0 %v364
    %v6049 = vpop.f32.mrf.mxu0
    %v6050 = vadd.f32 %v6036, %v6049
    %v6051 = vpop.f32.mrf.mxu0
    %v6052 = vadd.f32 %v6038, %v6051
    %6053 = vdwg.mxu0
    %6054 = vmatpush.bf16.msra.mxu0 %v3595
    %6055 = vmatpush.bf16.msra.mxu0 %v3591
    %6056 = vmatpush.bf16.msra.mxu0 %v3587
    %6057 = vmatpush.bf16.msra.mxu0 %v3583
    %6058 = vmatpush.bf16.msra.mxu0 %v3579
    %6059 = vmatpush.bf16.msra.mxu0 %v3575
    %6060 = vmatpush.bf16.msra.mxu0 %v3571
    %6061 = vmatpush.bf16.msra.mxu0 %v3567
    %6062 = vmatmul.bf16.gmra.mxu0 %v365
    %v6063 = vpop.f32.mrf.mxu0
    %v6064 = vadd.f32 %v6050, %v6063
    %v6065 = vpop.f32.mrf.mxu0
    %v6066 = vadd.f32 %v6052, %v6065
    %6067 = vdwg.mxu0
    %6068 = vmatpush.bf16.msra.mxu0 %v3627
    %6069 = vmatpush.bf16.msra.mxu0 %v3623
    %6070 = vmatpush.bf16.msra.mxu0 %v3619
    %6071 = vmatpush.bf16.msra.mxu0 %v3615
    %6072 = vmatpush.bf16.msra.mxu0 %v3611
    %6073 = vmatpush.bf16.msra.mxu0 %v3607
    %6074 = vmatpush.bf16.msra.mxu0 %v3603
    %6075 = vmatpush.bf16.msra.mxu0 %v3599
    %6076 = vmatmul.bf16.gmra.mxu0 %v366
    %v6077 = vpop.f32.mrf.mxu0
    %v6078 = vadd.f32 %v6064, %v6077
    %v6079 = vpop.f32.mrf.mxu0
    %v6080 = vadd.f32 %v6066, %v6079
    %6081 = vdwg.mxu0
    %6082 = vmatpush.bf16.msra.mxu0 %v3659
    %6083 = vmatpush.bf16.msra.mxu0 %v3655
    %6084 = vmatpush.bf16.msra.mxu0 %v3651
    %6085 = vmatpush.bf16.msra.mxu0 %v3647
    %6086 = vmatpush.bf16.msra.mxu0 %v3643
    %6087 = vmatpush.bf16.msra.mxu0 %v3639
    %6088 = vmatpush.bf16.msra.mxu0 %v3635
    %6089 = vmatpush.bf16.msra.mxu0 %v3631
    %6090 = vmatmul.bf16.gmra.mxu0 %v367
    %v6091 = vpop.f32.mrf.mxu0
    %v6092 = vadd.f32 %v6078, %v6091
    %v6093 = vpop.f32.mrf.mxu0
    %v6094 = vadd.f32 %v6080, %v6093
    %6095 = vdwg.mxu0
    %6096 = vmatpush.bf16.msra.mxu0 %v3691
    %6097 = vmatpush.bf16.msra.mxu0 %v3687
    %6098 = vmatpush.bf16.msra.mxu0 %v3683
    %6099 = vmatpush.bf16.msra.mxu0 %v3679
    %6100 = vmatpush.bf16.msra.mxu0 %v3675
    %6101 = vmatpush.bf16.msra.mxu0 %v3671
    %6102 = vmatpush.bf16.msra.mxu0 %v3667
    %6103 = vmatpush.bf16.msra.mxu0 %v3663
    %6104 = vmatmul.bf16.gmra.mxu0 %v368
    %v6105 = vpop.f32.mrf.mxu0
    %v6106 = vadd.f32 %v6092, %v6105
    %v6107 = vpop.f32.mrf.mxu0
    %v6108 = vadd.f32 %v6094, %v6107
    %6109 = vdwg.mxu0
    %6110 = vmatpush.bf16.msra.mxu0 %v3723
    %6111 = vmatpush.bf16.msra.mxu0 %v3719
    %6112 = vmatpush.bf16.msra.mxu0 %v3715
    %6113 = vmatpush.bf16.msra.mxu0 %v3711
    %6114 = vmatpush.bf16.msra.mxu0 %v3707
    %6115 = vmatpush.bf16.msra.mxu0 %v3703
    %6116 = vmatpush.bf16.msra.mxu0 %v3699
    %6117 = vmatpush.bf16.msra.mxu0 %v3695
    %6118 = vmatmul.bf16.gmra.mxu0 %v369
    %v6119 = vpop.f32.mrf.mxu0
    %v6120 = vadd.f32 %v6106, %v6119
    %v6121 = vpop.f32.mrf.mxu0
    %v6122 = vadd.f32 %v6108, %v6121
    %6123 = vdwg.mxu0
    %6124 = vmatpush.bf16.msra.mxu0 %v3755
    %6125 = vmatpush.bf16.msra.mxu0 %v3751
    %6126 = vmatpush.bf16.msra.mxu0 %v3747
    %6127 = vmatpush.bf16.msra.mxu0 %v3743
    %6128 = vmatpush.bf16.msra.mxu0 %v3739
    %6129 = vmatpush.bf16.msra.mxu0 %v3735
    %6130 = vmatpush.bf16.msra.mxu0 %v3731
    %6131 = vmatpush.bf16.msra.mxu0 %v3727
    %6132 = vmatmul.bf16.gmra.mxu0 %v370
    %v6133 = vpop.f32.mrf.mxu0
    %v6134 = vadd.f32 %v6120, %v6133
    %v6135 = vpop.f32.mrf.mxu0
    %v6136 = vadd.f32 %v6122, %v6135
    %6137 = vdwg.mxu0
    %6138 = vmatpush.bf16.msra.mxu0 %v3787
    %6139 = vmatpush.bf16.msra.mxu0 %v3783
    %6140 = vmatpush.bf16.msra.mxu0 %v3779
    %6141 = vmatpush.bf16.msra.mxu0 %v3775
    %6142 = vmatpush.bf16.msra.mxu0 %v3771
    %6143 = vmatpush.bf16.msra.mxu0 %v3767
    %6144 = vmatpush.bf16.msra.mxu0 %v3763
    %6145 = vmatpush.bf16.msra.mxu0 %v3759
    %6146 = vmatmul.bf16.gmra.mxu0 %v371
    %v6147 = vpop.f32.mrf.mxu0
    %v6148 = vadd.f32 %v6134, %v6147
    %v6149 = vpop.f32.mrf.mxu0
    %v6150 = vadd.f32 %v6136, %v6149
    %6151 = vdwg.mxu0
    %6152 = vmatpush.bf16.msra.mxu0 %v3819
    %6153 = vmatpush.bf16.msra.mxu0 %v3815
    %6154 = vmatpush.bf16.msra.mxu0 %v3811
    %6155 = vmatpush.bf16.msra.mxu0 %v3807
    %6156 = vmatpush.bf16.msra.mxu0 %v3803
    %6157 = vmatpush.bf16.msra.mxu0 %v3799
    %6158 = vmatpush.bf16.msra.mxu0 %v3795
    %6159 = vmatpush.bf16.msra.mxu0 %v3791
    %6160 = vmatmul.bf16.gmra.mxu0 %v372
    %v6161 = vpop.f32.mrf.mxu0
    %v6162 = vadd.f32 %v6148, %v6161
    %v6163 = vpop.f32.mrf.mxu0
    %v6164 = vadd.f32 %v6150, %v6163
    %6165 = vdwg.mxu0
    %6166 = vmatpush.bf16.msra.mxu0 %v3851
    %6167 = vmatpush.bf16.msra.mxu0 %v3847
    %6168 = vmatpush.bf16.msra.mxu0 %v3843
    %6169 = vmatpush.bf16.msra.mxu0 %v3839
    %6170 = vmatpush.bf16.msra.mxu0 %v3835
    %6171 = vmatpush.bf16.msra.mxu0 %v3831
    %6172 = vmatpush.bf16.msra.mxu0 %v3827
    %6173 = vmatpush.bf16.msra.mxu0 %v3823
    %6174 = vmatmul.bf16.gmra.mxu0 %v373
    %v6175 = vpop.f32.mrf.mxu0
    %v6176 = vadd.f32 %v6162, %v6175
    %v6177 = vpop.f32.mrf.mxu0
    %v6178 = vadd.f32 %v6164, %v6177
    %6179 = vdwg.mxu0
    %6180 = vmatpush.bf16.msra.mxu0 %v3883
    %6181 = vmatpush.bf16.msra.mxu0 %v3879
    %6182 = vmatpush.bf16.msra.mxu0 %v3875
    %6183 = vmatpush.bf16.msra.mxu0 %v3871
    %6184 = vmatpush.bf16.msra.mxu0 %v3867
    %6185 = vmatpush.bf16.msra.mxu0 %v3863
    %6186 = vmatpush.bf16.msra.mxu0 %v3859
    %6187 = vmatpush.bf16.msra.mxu0 %v3855
    %6188 = vmatmul.bf16.gmra.mxu0 %v374
    %v6189 = vpop.f32.mrf.mxu0
    %v6190 = vadd.f32 %v6176, %v6189
    %v6191 = vpop.f32.mrf.mxu0
    %v6192 = vadd.f32 %v6178, %v6191
    %6193 = vdwg.mxu0
    %6194 = vmatpush.bf16.msra.mxu0 %v3915
    %6195 = vmatpush.bf16.msra.mxu0 %v3911
    %6196 = vmatpush.bf16.msra.mxu0 %v3907
    %6197 = vmatpush.bf16.msra.mxu0 %v3903
    %6198 = vmatpush.bf16.msra.mxu0 %v3899
    %6199 = vmatpush.bf16.msra.mxu0 %v3895
    %6200 = vmatpush.bf16.msra.mxu0 %v3891
    %6201 = vmatpush.bf16.msra.mxu0 %v3887
    %6202 = vmatmul.bf16.gmra.mxu0 %v375
    %v6203 = vpop.f32.mrf.mxu0
    %v6204 = vadd.f32 %v6190, %v6203
    %v6205 = vpop.f32.mrf.mxu0
    %v6206 = vadd.f32 %v6192, %v6205
    %6207 = vdwg.mxu0
    %6208 = vmatpush.bf16.msra.mxu0 %v3947
    %6209 = vmatpush.bf16.msra.mxu0 %v3943
    %6210 = vmatpush.bf16.msra.mxu0 %v3939
    %6211 = vmatpush.bf16.msra.mxu0 %v3935
    %6212 = vmatpush.bf16.msra.mxu0 %v3931
    %6213 = vmatpush.bf16.msra.mxu0 %v3927
    %6214 = vmatpush.bf16.msra.mxu0 %v3923
    %6215 = vmatpush.bf16.msra.mxu0 %v3919
    %6216 = vmatmul.bf16.gmra.mxu0 %v376
    %v6217 = vpop.f32.mrf.mxu0
    %v6218 = vadd.f32 %v6204, %v6217
    %v6219 = vpop.f32.mrf.mxu0
    %v6220 = vadd.f32 %v6206, %v6219
    %6221 = vdwg.mxu0
    %6222 = vmatpush.bf16.msra.mxu0 %v3979
    %6223 = vmatpush.bf16.msra.mxu0 %v3975
    %6224 = vmatpush.bf16.msra.mxu0 %v3971
    %6225 = vmatpush.bf16.msra.mxu0 %v3967
    %6226 = vmatpush.bf16.msra.mxu0 %v3963
    %6227 = vmatpush.bf16.msra.mxu0 %v3959
    %6228 = vmatpush.bf16.msra.mxu0 %v3955
    %6229 = vmatpush.bf16.msra.mxu0 %v3951
    %6230 = vmatmul.bf16.gmra.mxu0 %v377
    %v6231 = vpop.f32.mrf.mxu0
    %v6232 = vadd.f32 %v6218, %v6231
    %v6233 = vpop.f32.mrf.mxu0
    %v6234 = vadd.f32 %v6220, %v6233
    %6235 = vdwg.mxu0
    %6236 = vmatpush.bf16.msra.mxu0 %v4011
    %6237 = vmatpush.bf16.msra.mxu0 %v4007
    %6238 = vmatpush.bf16.msra.mxu0 %v4003
    %6239 = vmatpush.bf16.msra.mxu0 %v3999
    %6240 = vmatpush.bf16.msra.mxu0 %v3995
    %6241 = vmatpush.bf16.msra.mxu0 %v3991
    %6242 = vmatpush.bf16.msra.mxu0 %v3987
    %6243 = vmatpush.bf16.msra.mxu0 %v3983
    %6244 = vmatmul.bf16.gmra.mxu0 %v378
    %v6245 = vpop.f32.mrf.mxu0
    %v6246 = vadd.f32 %v6232, %v6245
    %v6247 = vpop.f32.mrf.mxu0
    %v6248 = vadd.f32 %v6234, %v6247
    %6249 = vdwg.mxu0
    %6250 = vmatpush.bf16.msra.mxu0 %v4043
    %6251 = vmatpush.bf16.msra.mxu0 %v4039
    %6252 = vmatpush.bf16.msra.mxu0 %v4035
    %6253 = vmatpush.bf16.msra.mxu0 %v4031
    %6254 = vmatpush.bf16.msra.mxu0 %v4027
    %6255 = vmatpush.bf16.msra.mxu0 %v4023
    %6256 = vmatpush.bf16.msra.mxu0 %v4019
    %6257 = vmatpush.bf16.msra.mxu0 %v4015
    %6258 = vmatmul.bf16.gmra.mxu0 %v379
    %v6259 = vpop.f32.mrf.mxu0
    %v6260 = vadd.f32 %v6246, %v6259
    %v6261 = vpop.f32.mrf.mxu0
    %v6262 = vadd.f32 %v6248, %v6261
    %6263 = vdwg.mxu0
    %6264 = vmatpush.bf16.msra.mxu0 %v4075
    %6265 = vmatpush.bf16.msra.mxu0 %v4071
    %6266 = vmatpush.bf16.msra.mxu0 %v4067
    %6267 = vmatpush.bf16.msra.mxu0 %v4063
    %6268 = vmatpush.bf16.msra.mxu0 %v4059
    %6269 = vmatpush.bf16.msra.mxu0 %v4055
    %6270 = vmatpush.bf16.msra.mxu0 %v4051
    %6271 = vmatpush.bf16.msra.mxu0 %v4047
    %6272 = vmatmul.bf16.gmra.mxu0 %v380
    %v6273 = vpop.f32.mrf.mxu0
    %v6274 = vadd.f32 %v6260, %v6273
    %v6275 = vpop.f32.mrf.mxu0
    %v6276 = vadd.f32 %v6262, %v6275
    %6277 = vdwg.mxu0
    %6278 = vmatpush.bf16.msra.mxu0 %v4107
    %6279 = vmatpush.bf16.msra.mxu0 %v4103
    %6280 = vmatpush.bf16.msra.mxu0 %v4099
    %6281 = vmatpush.bf16.msra.mxu0 %v4095
    %6282 = vmatpush.bf16.msra.mxu0 %v4091
    %6283 = vmatpush.bf16.msra.mxu0 %v4087
    %6284 = vmatpush.bf16.msra.mxu0 %v4083
    %6285 = vmatpush.bf16.msra.mxu0 %v4079
    %6286 = vmatmul.bf16.gmra.mxu0 %v381
    %v6287 = vpop.f32.mrf.mxu0
    %v6288 = vadd.f32 %v6274, %v6287
    %v6289 = vpop.f32.mrf.mxu0
    %v6290 = vadd.f32 %v6276, %v6289
    %6291 = vdwg.mxu0
    %6292 = vmatpush.bf16.msra.mxu0 %v4139
    %6293 = vmatpush.bf16.msra.mxu0 %v4135
    %6294 = vmatpush.bf16.msra.mxu0 %v4131
    %6295 = vmatpush.bf16.msra.mxu0 %v4127
    %6296 = vmatpush.bf16.msra.mxu0 %v4123
    %6297 = vmatpush.bf16.msra.mxu0 %v4119
    %6298 = vmatpush.bf16.msra.mxu0 %v4115
    %6299 = vmatpush.bf16.msra.mxu0 %v4111
    %6300 = vmatmul.bf16.gmra.mxu0 %v382
    %v6301 = vpop.f32.mrf.mxu0
    %v6302 = vadd.f32 %v6288, %v6301
    %v6303 = vpop.f32.mrf.mxu0
    %v6304 = vadd.f32 %v6290, %v6303
    %6305 = vdwg.mxu0
    %6306 = vmatpush.bf16.msra.mxu0 %v4171
    %6307 = vmatpush.bf16.msra.mxu0 %v4167
    %6308 = vmatpush.bf16.msra.mxu0 %v4163
    %6309 = vmatpush.bf16.msra.mxu0 %v4159
    %6310 = vmatpush.bf16.msra.mxu0 %v4155
    %6311 = vmatpush.bf16.msra.mxu0 %v4151
    %6312 = vmatpush.bf16.msra.mxu0 %v4147
    %6313 = vmatpush.bf16.msra.mxu0 %v4143
    %6314 = vmatmul.bf16.gmra.mxu0 %v383
    %v6315 = vpop.f32.mrf.mxu0
    %v6316 = vadd.f32 %v6302, %v6315
    %v6317 = vpop.f32.mrf.mxu0
    %v6318 = vadd.f32 %v6304, %v6317
    %6319 = vdwg.mxu0
    %6320 = vmatpush.bf16.msra.mxu0 %v4203
    %6321 = vmatpush.bf16.msra.mxu0 %v4199
    %6322 = vmatpush.bf16.msra.mxu0 %v4195
    %6323 = vmatpush.bf16.msra.mxu0 %v4191
    %6324 = vmatpush.bf16.msra.mxu0 %v4187
    %6325 = vmatpush.bf16.msra.mxu0 %v4183
    %6326 = vmatpush.bf16.msra.mxu0 %v4179
    %6327 = vmatpush.bf16.msra.mxu0 %v4175
    %6328 = vmatmul.bf16.gmra.mxu0 %v384
    %v6329 = vpop.f32.mrf.mxu0
    %v6330 = vadd.f32 %v6316, %v6329
    %v6331 = vpop.f32.mrf.mxu0
    %v6332 = vadd.f32 %v6318, %v6331
    %6333 = vdwg.mxu0
    %6334 = vmatpush.bf16.msra.mxu0 %v4235
    %6335 = vmatpush.bf16.msra.mxu0 %v4231
    %6336 = vmatpush.bf16.msra.mxu0 %v4227
    %6337 = vmatpush.bf16.msra.mxu0 %v4223
    %6338 = vmatpush.bf16.msra.mxu0 %v4219
    %6339 = vmatpush.bf16.msra.mxu0 %v4215
    %6340 = vmatpush.bf16.msra.mxu0 %v4211
    %6341 = vmatpush.bf16.msra.mxu0 %v4207
    %6342 = vmatmul.bf16.gmra.mxu0 %v385
    %v6343 = vpop.f32.mrf.mxu0
    %v6344 = vadd.f32 %v6330, %v6343
    %v6345 = vpop.f32.mrf.mxu0
    %v6346 = vadd.f32 %v6332, %v6345
    %6347 = vdwg.mxu0
    %v6348 = vmax.f32 %v5336, 0.0
    %v6349 = vmax.f32 %v5672, 0.0
    %v6350 = vmax.f32 %v6008, 0.0
    %v6351 = vmax.f32 %v6344, 0.0
    %v6352 = vmax.f32 %v5338, 0.0
    %v6353 = vmax.f32 %v5674, 0.0
    %v6354 = vmax.f32 %v6010, 0.0
    %v6355 = vmax.f32 %v6346, 0.0
    %v6356 = vpack.c.bf16 %v6352, %v6348
    %v6357 = vpack.c.bf16 %v6353, %v6349
    %v6358 = vpack.c.bf16 %v6354, %v6350
    %v6359 = vpack.c.bf16 %v6355, %v6351
    %v6360 = vld [vmem:[#allocation7] sm:$0xff]
    %v6361 = vld [vmem:[#allocation7 + $0x8] sm:$0xff]
    %v6362 = vld [vmem:[#allocation7 + $0x10] sm:$0xff]
    %v6363 = vld [vmem:[#allocation7 + $0x18] sm:$0xff]
    %v6364 = vld [vmem:[#allocation7 + $0x20] sm:$0xff]
    %v6365 = vld [vmem:[#allocation7 + $0x28] sm:$0xff]
    %v6366 = vld [vmem:[#allocation7 + $0x30] sm:$0xff]
    %v6367 = vld [vmem:[#allocation7 + $0x38] sm:$0xff]
    %v6368 = vld [vmem:[#allocation7 + $0x40] sm:$0xff]
    %v6369 = vld [vmem:[#allocation7 + $0x48] sm:$0xff]
    %v6370 = vld [vmem:[#allocation7 + $0x50] sm:$0xff]
    %v6371 = vld [vmem:[#allocation7 + $0x58] sm:$0xff]
    %v6372 = vld [vmem:[#allocation7 + $0x60] sm:$0xff]
    %v6373 = vld [vmem:[#allocation7 + $0x68] sm:$0xff]
    %v6374 = vld [vmem:[#allocation7 + $0x70] sm:$0xff]
    %v6375 = vld [vmem:[#allocation7 + $0x78] sm:$0xff]
    %v6376 = vld [vmem:[#allocation7 + $0x80] sm:$0xff]
    %v6377 = vld [vmem:[#allocation7 + $0x88] sm:$0xff]
    %v6378 = vld [vmem:[#allocation7 + $0x90] sm:$0xff]
    %v6379 = vld [vmem:[#allocation7 + $0x98] sm:$0xff]
    %v6380 = vld [vmem:[#allocation7 + $0xa0] sm:$0xff]
    %v6381 = vld [vmem:[#allocation7 + $0xa8] sm:$0xff]
    %v6382 = vld [vmem:[#allocation7 + $0xb0] sm:$0xff]
    %v6383 = vld [vmem:[#allocation7 + $0xb8] sm:$0xff]
    %v6384 = vld [vmem:[#allocation7 + $0xc0] sm:$0xff]
    %v6385 = vld [vmem:[#allocation7 + $0xc8] sm:$0xff]
    %v6386 = vld [vmem:[#allocation7 + $0xd0] sm:$0xff]
    %v6387 = vld [vmem:[#allocation7 + $0xd8] sm:$0xff]
    %v6388 = vld [vmem:[#allocation7 + $0xe0] sm:$0xff]
    %v6389 = vld [vmem:[#allocation7 + $0xe8] sm:$0xff]
    %v6390 = vld [vmem:[#allocation7 + $0xf0] sm:$0xff]
    %v6391 = vld [vmem:[#allocation7 + $0xf8] sm:$0xff]
    %v6392 = vld [vmem:[#allocation7 + $0x100] sm:$0xff]
    %v6393 = vld [vmem:[#allocation7 + $0x108] sm:$0xff]
    %v6394 = vld [vmem:[#allocation7 + $0x110] sm:$0xff]
    %v6395 = vld [vmem:[#allocation7 + $0x118] sm:$0xff]
    %v6396 = vld [vmem:[#allocation7 + $0x120] sm:$0xff]
    %v6397 = vld [vmem:[#allocation7 + $0x128] sm:$0xff]
    %v6398 = vld [vmem:[#allocation7 + $0x130] sm:$0xff]
    %v6399 = vld [vmem:[#allocation7 + $0x138] sm:$0xff]
    %v6400 = vld [vmem:[#allocation7 + $0x140] sm:$0xff]
    %v6401 = vld [vmem:[#allocation7 + $0x148] sm:$0xff]
    %v6402 = vld [vmem:[#allocation7 + $0x150] sm:$0xff]
    %v6403 = vld [vmem:[#allocation7 + $0x158] sm:$0xff]
    %v6404 = vld [vmem:[#allocation7 + $0x160] sm:$0xff]
    %v6405 = vld [vmem:[#allocation7 + $0x168] sm:$0xff]
    %v6406 = vld [vmem:[#allocation7 + $0x170] sm:$0xff]
    %v6407 = vld [vmem:[#allocation7 + $0x178] sm:$0xff]
    %v6408 = vld [vmem:[#allocation7 + $0x180] sm:$0xff]
    %v6409 = vld [vmem:[#allocation7 + $0x188] sm:$0xff]
    %v6410 = vld [vmem:[#allocation7 + $0x190] sm:$0xff]
    %v6411 = vld [vmem:[#allocation7 + $0x198] sm:$0xff]
    %v6412 = vld [vmem:[#allocation7 + $0x1a0] sm:$0xff]
    %v6413 = vld [vmem:[#allocation7 + $0x1a8] sm:$0xff]
    %v6414 = vld [vmem:[#allocation7 + $0x1b0] sm:$0xff]
    %v6415 = vld [vmem:[#allocation7 + $0x1b8] sm:$0xff]
    %v6416 = vld [vmem:[#allocation7 + $0x1c0] sm:$0xff]
    %v6417 = vld [vmem:[#allocation7 + $0x1c8] sm:$0xff]
    %v6418 = vld [vmem:[#allocation7 + $0x1d0] sm:$0xff]
    %v6419 = vld [vmem:[#allocation7 + $0x1d8] sm:$0xff]
    %v6420 = vld [vmem:[#allocation7 + $0x1e0] sm:$0xff]
    %v6421 = vld [vmem:[#allocation7 + $0x1e8] sm:$0xff]
    %v6422 = vld [vmem:[#allocation7 + $0x1f0] sm:$0xff]
    %v6423 = vld [vmem:[#allocation7 + $0x1f8] sm:$0xff]
    %v6424 = vld [vmem:[#allocation8] sm:$0x3]
    %v6426 = vperm.slane %v6424, 0
    %v6427 = vperm.slane %v6424, 1
    %v6494 = vunpack.c.l.b16 %v6360
    %v6495 = vunpack.c.h.b16 %v6360
    %v6496 = vunpack.c.l.b16 %v6361
    %v6497 = vunpack.c.h.b16 %v6361
    %v6498 = vunpack.c.l.b16 %v6362
    %v6499 = vunpack.c.h.b16 %v6362
    %v6500 = vunpack.c.l.b16 %v6363
    %v6501 = vunpack.c.h.b16 %v6363
    %v6502 = vunpack.c.l.b16 %v6364
    %v6503 = vunpack.c.h.b16 %v6364
    %v6504 = vunpack.c.l.b16 %v6365
    %v6505 = vunpack.c.h.b16 %v6365
    %v6506 = vunpack.c.l.b16 %v6366
    %v6507 = vunpack.c.h.b16 %v6366
    %v6508 = vunpack.c.l.b16 %v6367
    %v6509 = vunpack.c.h.b16 %v6367
    %v6510 = vunpack.c.l.b16 %v6368
    %v6511 = vunpack.c.h.b16 %v6368
    %v6512 = vunpack.c.l.b16 %v6369
    %v6513 = vunpack.c.h.b16 %v6369
    %v6514 = vunpack.c.l.b16 %v6370
    %v6515 = vunpack.c.h.b16 %v6370
    %v6516 = vunpack.c.l.b16 %v6371
    %v6517 = vunpack.c.h.b16 %v6371
    %v6518 = vunpack.c.l.b16 %v6372
    %v6519 = vunpack.c.h.b16 %v6372
    %v6520 = vunpack.c.l.b16 %v6373
    %v6521 = vunpack.c.h.b16 %v6373
    %v6522 = vunpack.c.l.b16 %v6374
    %v6523 = vunpack.c.h.b16 %v6374
    %v6524 = vunpack.c.l.b16 %v6375
    %v6525 = vunpack.c.h.b16 %v6375
    %v6526 = vunpack.c.l.b16 %v6376
    %v6527 = vunpack.c.h.b16 %v6376
    %v6528 = vunpack.c.l.b16 %v6377
    %v6529 = vunpack.c.h.b16 %v6377
    %v6530 = vunpack.c.l.b16 %v6378
    %v6531 = vunpack.c.h.b16 %v6378
    %v6532 = vunpack.c.l.b16 %v6379
    %v6533 = vunpack.c.h.b16 %v6379
    %v6534 = vunpack.c.l.b16 %v6380
    %v6535 = vunpack.c.h.b16 %v6380
    %v6536 = vunpack.c.l.b16 %v6381
    %v6537 = vunpack.c.h.b16 %v6381
    %v6538 = vunpack.c.l.b16 %v6382
    %v6539 = vunpack.c.h.b16 %v6382
    %v6540 = vunpack.c.l.b16 %v6383
    %v6541 = vunpack.c.h.b16 %v6383
    %v6542 = vunpack.c.l.b16 %v6384
    %v6543 = vunpack.c.h.b16 %v6384
    %v6544 = vunpack.c.l.b16 %v6385
    %v6545 = vunpack.c.h.b16 %v6385
    %v6546 = vunpack.c.l.b16 %v6386
    %v6547 = vunpack.c.h.b16 %v6386
    %v6548 = vunpack.c.l.b16 %v6387
    %v6549 = vunpack.c.h.b16 %v6387
    %v6550 = vunpack.c.l.b16 %v6388
    %v6551 = vunpack.c.h.b16 %v6388
    %v6552 = vunpack.c.l.b16 %v6389
    %v6553 = vunpack.c.h.b16 %v6389
    %v6554 = vunpack.c.l.b16 %v6390
    %v6555 = vunpack.c.h.b16 %v6390
    %v6556 = vunpack.c.l.b16 %v6391
    %v6557 = vunpack.c.h.b16 %v6391
    %v6558 = vunpack.c.l.b16 %v6392
    %v6559 = vunpack.c.h.b16 %v6392
    %v6560 = vunpack.c.l.b16 %v6393
    %v6561 = vunpack.c.h.b16 %v6393
    %v6562 = vunpack.c.l.b16 %v6394
    %v6563 = vunpack.c.h.b16 %v6394
    %v6564 = vunpack.c.l.b16 %v6395
    %v6565 = vunpack.c.h.b16 %v6395
    %v6566 = vunpack.c.l.b16 %v6396
    %v6567 = vunpack.c.h.b16 %v6396
    %v6568 = vunpack.c.l.b16 %v6397
    %v6569 = vunpack.c.h.b16 %v6397
    %v6570 = vunpack.c.l.b16 %v6398
    %v6571 = vunpack.c.h.b16 %v6398
    %v6572 = vunpack.c.l.b16 %v6399
    %v6573 = vunpack.c.h.b16 %v6399
    %v6574 = vunpack.c.l.b16 %v6400
    %v6575 = vunpack.c.h.b16 %v6400
    %v6576 = vunpack.c.l.b16 %v6401
    %v6577 = vunpack.c.h.b16 %v6401
    %v6578 = vunpack.c.l.b16 %v6402
    %v6579 = vunpack.c.h.b16 %v6402
    %v6580 = vunpack.c.l.b16 %v6403
    %v6581 = vunpack.c.h.b16 %v6403
    %v6582 = vunpack.c.l.b16 %v6404
    %v6583 = vunpack.c.h.b16 %v6404
    %v6584 = vunpack.c.l.b16 %v6405
    %v6585 = vunpack.c.h.b16 %v6405
    %v6586 = vunpack.c.l.b16 %v6406
    %v6587 = vunpack.c.h.b16 %v6406
    %v6588 = vunpack.c.l.b16 %v6407
    %v6589 = vunpack.c.h.b16 %v6407
    %v6590 = vunpack.c.l.b16 %v6408
    %v6591 = vunpack.c.h.b16 %v6408
    %v6592 = vunpack.c.l.b16 %v6409
    %v6593 = vunpack.c.h.b16 %v6409
    %v6594 = vunpack.c.l.b16 %v6410
    %v6595 = vunpack.c.h.b16 %v6410
    %v6596 = vunpack.c.l.b16 %v6411
    %v6597 = vunpack.c.h.b16 %v6411
    %v6598 = vunpack.c.l.b16 %v6412
    %v6599 = vunpack.c.h.b16 %v6412
    %v6600 = vunpack.c.l.b16 %v6413
    %v6601 = vunpack.c.h.b16 %v6413
    %v6602 = vunpack.c.l.b16 %v6414
    %v6603 = vunpack.c.h.b16 %v6414
    %v6604 = vunpack.c.l.b16 %v6415
    %v6605 = vunpack.c.h.b16 %v6415
    %v6606 = vunpack.c.l.b16 %v6416
    %v6607 = vunpack.c.h.b16 %v6416
    %v6608 = vunpack.c.l.b16 %v6417
    %v6609 = vunpack.c.h.b16 %v6417
    %v6610 = vunpack.c.l.b16 %v6418
    %v6611 = vunpack.c.h.b16 %v6418
    %v6612 = vunpack.c.l.b16 %v6419
    %v6613 = vunpack.c.h.b16 %v6419
    %v6614 = vunpack.c.l.b16 %v6420
    %v6615 = vunpack.c.h.b16 %v6420
    %v6616 = vunpack.c.l.b16 %v6421
    %v6617 = vunpack.c.h.b16 %v6421
    %v6618 = vunpack.c.l.b16 %v6422
    %v6619 = vunpack.c.h.b16 %v6422
    %v6620 = vunpack.c.l.b16 %v6423
    %v6621 = vunpack.c.h.b16 %v6423
    %v6622 = vpack.c.b16 %v6496, %v6494
    %v6623 = vpack.c.b16 %v6497, %v6495
    %v6624 = vpack.c.b16 %v6500, %v6498
    %v6625 = vpack.c.b16 %v6501, %v6499
    %v6626 = vpack.c.b16 %v6504, %v6502
    %v6627 = vpack.c.b16 %v6505, %v6503
    %v6628 = vpack.c.b16 %v6508, %v6506
    %v6629 = vpack.c.b16 %v6509, %v6507
    %v6630 = vpack.c.b16 %v6512, %v6510
    %v6631 = vpack.c.b16 %v6513, %v6511
    %v6632 = vpack.c.b16 %v6516, %v6514
    %v6633 = vpack.c.b16 %v6517, %v6515
    %v6634 = vpack.c.b16 %v6520, %v6518
    %v6635 = vpack.c.b16 %v6521, %v6519
    %v6636 = vpack.c.b16 %v6524, %v6522
    %v6637 = vpack.c.b16 %v6525, %v6523
    %v6638 = vpack.c.b16 %v6528, %v6526
    %v6639 = vpack.c.b16 %v6529, %v6527
    %v6640 = vpack.c.b16 %v6532, %v6530
    %v6641 = vpack.c.b16 %v6533, %v6531
    %v6642 = vpack.c.b16 %v6536, %v6534
    %v6643 = vpack.c.b16 %v6537, %v6535
    %v6644 = vpack.c.b16 %v6540, %v6538
    %v6645 = vpack.c.b16 %v6541, %v6539
    %v6646 = vpack.c.b16 %v6544, %v6542
    %v6647 = vpack.c.b16 %v6545, %v6543
    %v6648 = vpack.c.b16 %v6548, %v6546
    %v6649 = vpack.c.b16 %v6549, %v6547
    %v6650 = vpack.c.b16 %v6552, %v6550
    %v6651 = vpack.c.b16 %v6553, %v6551
    %v6652 = vpack.c.b16 %v6556, %v6554
    %v6653 = vpack.c.b16 %v6557, %v6555
    %v6654 = vpack.c.b16 %v6560, %v6558
    %v6655 = vpack.c.b16 %v6561, %v6559
    %v6656 = vpack.c.b16 %v6564, %v6562
    %v6657 = vpack.c.b16 %v6565, %v6563
    %v6658 = vpack.c.b16 %v6568, %v6566
    %v6659 = vpack.c.b16 %v6569, %v6567
    %v6660 = vpack.c.b16 %v6572, %v6570
    %v6661 = vpack.c.b16 %v6573, %v6571
    %v6662 = vpack.c.b16 %v6576, %v6574
    %v6663 = vpack.c.b16 %v6577, %v6575
    %v6664 = vpack.c.b16 %v6580, %v6578
    %v6665 = vpack.c.b16 %v6581, %v6579
    %v6666 = vpack.c.b16 %v6584, %v6582
    %v6667 = vpack.c.b16 %v6585, %v6583
    %v6668 = vpack.c.b16 %v6588, %v6586
    %v6669 = vpack.c.b16 %v6589, %v6587
    %v6670 = vpack.c.b16 %v6592, %v6590
    %v6671 = vpack.c.b16 %v6593, %v6591
    %v6672 = vpack.c.b16 %v6596, %v6594
    %v6673 = vpack.c.b16 %v6597, %v6595
    %v6674 = vpack.c.b16 %v6600, %v6598
    %v6675 = vpack.c.b16 %v6601, %v6599
    %v6676 = vpack.c.b16 %v6604, %v6602
    %v6677 = vpack.c.b16 %v6605, %v6603
    %v6678 = vpack.c.b16 %v6608, %v6606
    %v6679 = vpack.c.b16 %v6609, %v6607
    %v6680 = vpack.c.b16 %v6612, %v6610
    %v6681 = vpack.c.b16 %v6613, %v6611
    %v6682 = vpack.c.b16 %v6616, %v6614
    %v6683 = vpack.c.b16 %v6617, %v6615
    %v6684 = vpack.c.b16 %v6620, %v6618
    %v6685 = vpack.c.b16 %v6621, %v6619
    %6750 = vmatpush.bf16.msra.mxu0 %v6636
    %6751 = vmatpush.bf16.msra.mxu0 %v6634
    %6752 = vmatpush.bf16.msra.mxu0 %v6632
    %6753 = vmatpush.bf16.msra.mxu0 %v6630
    %6754 = vmatpush.bf16.msra.mxu0 %v6628
    %6755 = vmatpush.bf16.msra.mxu0 %v6626
    %6756 = vmatpush.bf16.msra.mxu0 %v6624
    %6757 = vmatpush.bf16.msra.mxu0 %v6622
    %6758 = vmatmul.bf16.gmra.mxu0 %v6356
    %v6759 = vpop.f32.mrf.mxu0
    %v6760 = vadd.f32 %v6426, %v6759
    %v6761 = vpop.f32.mrf.mxu0
    %v6762 = vadd.f32 %v6426, %v6761
    %6763 = vdwg.mxu0
    %6764 = vmatpush.bf16.msra.mxu0 %v6652
    %6765 = vmatpush.bf16.msra.mxu0 %v6650
    %6766 = vmatpush.bf16.msra.mxu0 %v6648
    %6767 = vmatpush.bf16.msra.mxu0 %v6646
    %6768 = vmatpush.bf16.msra.mxu0 %v6644
    %6769 = vmatpush.bf16.msra.mxu0 %v6642
    %6770 = vmatpush.bf16.msra.mxu0 %v6640
    %6771 = vmatpush.bf16.msra.mxu0 %v6638
    %6772 = vmatmul.bf16.gmra.mxu0 %v6357
    %v6773 = vpop.f32.mrf.mxu0
    %v6774 = vadd.f32 %v6760, %v6773
    %v6775 = vpop.f32.mrf.mxu0
    %v6776 = vadd.f32 %v6762, %v6775
    %6777 = vdwg.mxu0
    %6778 = vmatpush.bf16.msra.mxu0 %v6668
    %6779 = vmatpush.bf16.msra.mxu0 %v6666
    %6780 = vmatpush.bf16.msra.mxu0 %v6664
    %6781 = vmatpush.bf16.msra.mxu0 %v6662
    %6782 = vmatpush.bf16.msra.mxu0 %v6660
    %6783 = vmatpush.bf16.msra.mxu0 %v6658
    %6784 = vmatpush.bf16.msra.mxu0 %v6656
    %6785 = vmatpush.bf16.msra.mxu0 %v6654
    %6786 = vmatmul.bf16.gmra.mxu0 %v6358
    %v6787 = vpop.f32.mrf.mxu0
    %v6788 = vadd.f32 %v6774, %v6787
    %v6789 = vpop.f32.mrf.mxu0
    %v6790 = vadd.f32 %v6776, %v6789
    %6791 = vdwg.mxu0
    %6792 = vmatpush.bf16.msra.mxu0 %v6684
    %6793 = vmatpush.bf16.msra.mxu0 %v6682
    %6794 = vmatpush.bf16.msra.mxu0 %v6680
    %6795 = vmatpush.bf16.msra.mxu0 %v6678
    %6796 = vmatpush.bf16.msra.mxu0 %v6676
    %6797 = vmatpush.bf16.msra.mxu0 %v6674
    %6798 = vmatpush.bf16.msra.mxu0 %v6672
    %6799 = vmatpush.bf16.msra.mxu0 %v6670
    %6800 = vmatmul.bf16.gmra.mxu0 %v6359
    %v6801 = vpop.f32.mrf.mxu0
    %v6802 = vadd.f32 %v6788, %v6801
    %v6803 = vpop.f32.mrf.mxu0
    %v6804 = vadd.f32 %v6790, %v6803
    %6805 = vdwg.mxu0
    %6806 = vmatpush.bf16.msra.mxu0 %v6637
    %6807 = vmatpush.bf16.msra.mxu0 %v6635
    %6808 = vmatpush.bf16.msra.mxu0 %v6633
    %6809 = vmatpush.bf16.msra.mxu0 %v6631
    %6810 = vmatpush.bf16.msra.mxu0 %v6629
    %6811 = vmatpush.bf16.msra.mxu0 %v6627
    %6812 = vmatpush.bf16.msra.mxu0 %v6625
    %6813 = vmatpush.bf16.msra.mxu0 %v6623
    %6814 = vmatmul.bf16.gmra.mxu0 %v6356
    %v6815 = vpop.f32.mrf.mxu0
    %v6816 = vadd.f32 %v6427, %v6815
    %v6817 = vpop.f32.mrf.mxu0
    %v6818 = vadd.f32 %v6427, %v6817
    %6819 = vdwg.mxu0
    %6820 = vmatpush.bf16.msra.mxu0 %v6653
    %6821 = vmatpush.bf16.msra.mxu0 %v6651
    %6822 = vmatpush.bf16.msra.mxu0 %v6649
    %6823 = vmatpush.bf16.msra.mxu0 %v6647
    %6824 = vmatpush.bf16.msra.mxu0 %v6645
    %6825 = vmatpush.bf16.msra.mxu0 %v6643
    %6826 = vmatpush.bf16.msra.mxu0 %v6641
    %6827 = vmatpush.bf16.msra.mxu0 %v6639
    %6828 = vmatmul.bf16.gmra.mxu0 %v6357
    %v6829 = vpop.f32.mrf.mxu0
    %v6830 = vadd.f32 %v6816, %v6829
    %v6831 = vpop.f32.mrf.mxu0
    %v6832 = vadd.f32 %v6818, %v6831
    %6833 = vdwg.mxu0
    %6834 = vmatpush.bf16.msra.mxu0 %v6669
    %6835 = vmatpush.bf16.msra.mxu0 %v6667
    %6836 = vmatpush.bf16.msra.mxu0 %v6665
    %6837 = vmatpush.bf16.msra.mxu0 %v6663
    %6838 = vmatpush.bf16.msra.mxu0 %v6661
    %6839 = vmatpush.bf16.msra.mxu0 %v6659
    %6840 = vmatpush.bf16.msra.mxu0 %v6657
    %6841 = vmatpush.bf16.msra.mxu0 %v6655
    %6842 = vmatmul.bf16.gmra.mxu0 %v6358
    %v6843 = vpop.f32.mrf.mxu0
    %v6844 = vadd.f32 %v6830, %v6843
    %v6845 = vpop.f32.mrf.mxu0
    %v6846 = vadd.f32 %v6832, %v6845
    %6847 = vdwg.mxu0
    %6848 = vmatpush.bf16.msra.mxu0 %v6685
    %6849 = vmatpush.bf16.msra.mxu0 %v6683
    %6850 = vmatpush.bf16.msra.mxu0 %v6681
    %6851 = vmatpush.bf16.msra.mxu0 %v6679
    %6852 = vmatpush.bf16.msra.mxu0 %v6677
    %6853 = vmatpush.bf16.msra.mxu0 %v6675
    %6854 = vmatpush.bf16.msra.mxu0 %v6673
    %6855 = vmatpush.bf16.msra.mxu0 %v6671
    %6856 = vmatmul.bf16.gmra.mxu0 %v6359
    %v6857 = vpop.f32.mrf.mxu0
    %v6858 = vadd.f32 %v6844, %v6857
    %v6859 = vpop.f32.mrf.mxu0
    %v6860 = vadd.f32 %v6846, %v6859
    %6861 = vdwg.mxu0
    %v6862 = vmax.f32 %v6802, 0.0
    %v6863 = vmax.f32 %v6858, 0.0
    %v6864 = vmax.f32 %v6804, 0.0
    %v6865 = vmax.f32 %v6860, 0.0
    %v6866 = vpack.c.bf16 %v6864, %v6862
    %v6867 = vpack.c.bf16 %v6865, %v6863
    %v6868 = vld [vmem:[#allocation10] sm:$0xf]
    %v6869 = vld [vmem:[#allocation10 + $0x4] sm:$0xf]
    %v6870 = vld [vmem:[#allocation10 + $0x8] sm:$0xf]
    %v6871 = vld [vmem:[#allocation10 + $0xc] sm:$0xf]
    %v6872 = vld [vmem:[#allocation10 + $0x10] sm:$0xf]
    %v6873 = vld [vmem:[#allocation10 + $0x14] sm:$0xf]
    %v6874 = vld [vmem:[#allocation10 + $0x18] sm:$0xf]
    %v6875 = vld [vmem:[#allocation10 + $0x1c] sm:$0xf]
    %v6876 = vld [vmem:[#allocation10 + $0x20] sm:$0xf]
    %v6877 = vld [vmem:[#allocation10 + $0x24] sm:$0xf]
    %v6878 = vld [vmem:[#allocation10 + $0x28] sm:$0xf]
    %v6879 = vld [vmem:[#allocation10 + $0x2c] sm:$0xf]
    %v6880 = vld [vmem:[#allocation10 + $0x30] sm:$0xf]
    %v6881 = vld [vmem:[#allocation10 + $0x34] sm:$0xf]
    %v6882 = vld [vmem:[#allocation10 + $0x38] sm:$0xf]
    %v6883 = vld [vmem:[#allocation10 + $0x3c] sm:$0xf]
    %v6884 = vld [vmem:[#allocation10 + $0x40] sm:$0xf]
    %v6885 = vld [vmem:[#allocation10 + $0x44] sm:$0xf]
    %v6886 = vld [vmem:[#allocation10 + $0x48] sm:$0xf]
    %v6887 = vld [vmem:[#allocation10 + $0x4c] sm:$0xf]
    %v6888 = vld [vmem:[#allocation10 + $0x50] sm:$0xf]
    %v6889 = vld [vmem:[#allocation10 + $0x54] sm:$0xf]
    %v6890 = vld [vmem:[#allocation10 + $0x58] sm:$0xf]
    %v6891 = vld [vmem:[#allocation10 + $0x5c] sm:$0xf]
    %v6892 = vld [vmem:[#allocation10 + $0x60] sm:$0xf]
    %v6893 = vld [vmem:[#allocation10 + $0x64] sm:$0xf]
    %v6894 = vld [vmem:[#allocation10 + $0x68] sm:$0xf]
    %v6895 = vld [vmem:[#allocation10 + $0x6c] sm:$0xf]
    %v6896 = vld [vmem:[#allocation10 + $0x70] sm:$0xf]
    %v6897 = vld [vmem:[#allocation10 + $0x74] sm:$0xf]
    %v6898 = vld [vmem:[#allocation10 + $0x78] sm:$0xf]
    %v6899 = vld [vmem:[#allocation10 + $0x7c] sm:$0xf]
    %v6900 = vld [vmem:[#allocation11] sm:$0x1]
    %v6902 = vperm.slane %v6900, 0
    %v6936 = vunpack.c.l.b16 %v6868
    %v6937 = vunpack.c.l.b16 %v6869
    %v6938 = vunpack.c.l.b16 %v6870
    %v6939 = vunpack.c.l.b16 %v6871
    %v6940 = vunpack.c.l.b16 %v6872
    %v6941 = vunpack.c.l.b16 %v6873
    %v6942 = vunpack.c.l.b16 %v6874
    %v6943 = vunpack.c.l.b16 %v6875
    %v6944 = vunpack.c.l.b16 %v6876
    %v6945 = vunpack.c.l.b16 %v6877
    %v6946 = vunpack.c.l.b16 %v6878
    %v6947 = vunpack.c.l.b16 %v6879
    %v6948 = vunpack.c.l.b16 %v6880
    %v6949 = vunpack.c.l.b16 %v6881
    %v6950 = vunpack.c.l.b16 %v6882
    %v6951 = vunpack.c.l.b16 %v6883
    %v6952 = vunpack.c.l.b16 %v6884
    %v6953 = vunpack.c.l.b16 %v6885
    %v6954 = vunpack.c.l.b16 %v6886
    %v6955 = vunpack.c.l.b16 %v6887
    %v6956 = vunpack.c.l.b16 %v6888
    %v6957 = vunpack.c.l.b16 %v6889
    %v6958 = vunpack.c.l.b16 %v6890
    %v6959 = vunpack.c.l.b16 %v6891
    %v6960 = vunpack.c.l.b16 %v6892
    %v6961 = vunpack.c.l.b16 %v6893
    %v6962 = vunpack.c.l.b16 %v6894
    %v6963 = vunpack.c.l.b16 %v6895
    %v6964 = vunpack.c.l.b16 %v6896
    %v6965 = vunpack.c.l.b16 %v6897
    %v6966 = vunpack.c.l.b16 %v6898
    %v6967 = vunpack.c.l.b16 %v6899
    %v6968 = vpack.c.b16 %v6937, %v6936
    %v6969 = vpack.c.b16 %v6939, %v6938
    %v6970 = vpack.c.b16 %v6941, %v6940
    %v6971 = vpack.c.b16 %v6943, %v6942
    %v6972 = vpack.c.b16 %v6945, %v6944
    %v6973 = vpack.c.b16 %v6947, %v6946
    %v6974 = vpack.c.b16 %v6949, %v6948
    %v6975 = vpack.c.b16 %v6951, %v6950
    %v6976 = vpack.c.b16 %v6953, %v6952
    %v6977 = vpack.c.b16 %v6955, %v6954
    %v6978 = vpack.c.b16 %v6957, %v6956
    %v6979 = vpack.c.b16 %v6959, %v6958
    %v6980 = vpack.c.b16 %v6961, %v6960
    %v6981 = vpack.c.b16 %v6963, %v6962
    %v6982 = vpack.c.b16 %v6965, %v6964
    %v6983 = vpack.c.b16 %v6967, %v6966
    %7000 = vmatpush.bf16.msra.mxu0 %v6975
    %7001 = vmatpush.bf16.msra.mxu0 %v6974
    %7002 = vmatpush.bf16.msra.mxu0 %v6973
    %7003 = vmatpush.bf16.msra.mxu0 %v6972
    %7004 = vmatpush.bf16.msra.mxu0 %v6971
    %7005 = vmatpush.bf16.msra.mxu0 %v6970
    %7006 = vmatpush.bf16.msra.mxu0 %v6969
    %7007 = vmatpush.bf16.msra.mxu0 %v6968
    %7008 = vmatmul.bf16.gmra.mxu0 %v6866
    %v7009 = vpop.f32.mrf.mxu0
    %v7010 = vadd.f32 %v6902, %v7009
    %v7011 = vpop.f32.mrf.mxu0
    %v7012 = vadd.f32 %v6902, %v7011
    %7013 = vdwg.mxu0
    %7014 = vmatpush.bf16.msra.mxu0 %v6983
    %7015 = vmatpush.bf16.msra.mxu0 %v6982
    %7016 = vmatpush.bf16.msra.mxu0 %v6981
    %7017 = vmatpush.bf16.msra.mxu0 %v6980
    %7018 = vmatpush.bf16.msra.mxu0 %v6979
    %7019 = vmatpush.bf16.msra.mxu0 %v6978
    %7020 = vmatpush.bf16.msra.mxu0 %v6977
    %7021 = vmatpush.bf16.msra.mxu0 %v6976
    %7022 = vmatmul.bf16.gmra.mxu0 %v6867
    %v7023 = vpop.f32.mrf.mxu0
    %v7024 = vadd.f32 %v7010, %v7023
    %v7025 = vpop.f32.mrf.mxu0
    %v7026 = vadd.f32 %v7012, %v7025
    %7027 = vdwg.mxu0
    %7028 = vst [vmem:[#allocation13] sm:$0xff] %v7024
    %7029 = vst [vmem:[#allocation13 + $0x8] sm:$0xff] %v7026
    // Predicated region
    $region54: #{_lambda_.1} parent=1 // pred_check
      _
    $region55: #{_lambda_.1} parent=1 // pred_check_branch
      %7031 = sbr.rel (0) target = $region57
    $region56: #{_lambda_.1} parent=1 // pred_region
      %7033 = vsyncadd [#allocation4], 224
      %s7034 = sshll.u32 [#allocation13], 4
      %s7035 = int_to_ptr.vmem [resolvable:$true] %s7034
      %s7036 = sshll.u32 %s7, 4
      %s7037 = int_to_ptr.hbm [resolvable:$true] %s7036
      %7042 = dma.vmem_to_hbm [thread:$0]  %s7035, 32, %s7037, [#allocation4], 32, 32, 2
    $region57: #{_lambda_.1} parent=1 // pred_fallthru
      _
    // Predicated region
    $region58: #{_lambda_.1} parent=1 // pred_check
      _
    $region59: #{_lambda_.1} parent=1 // pred_check_branch
      %7044 = sbr.rel (0) target = $region61
    $region60: #{_lambda_.1} parent=1 // pred_region
      %7046 = dma.done [#allocation4], 256
    $region61: #{_lambda_.1} parent=1 // pred_fallthru
      _
    %7047 = vsyncpa [#allocation3], 1
    %7048 = vsyncpa [#allocation6], 1
    %7049 = vsyncpa [#allocation9], 1
    %7050 = vsyncpa [#allocation12], 1
    %7051 = vsyncpa [#allocation4], 1

</llo_original>
